<compile_context>
chip_gen: v5e
topology: v5e:2x2
jax: 0.10.0
libtpu: 0.0.40
codegen_flags: <defaults>
</compile_context>

<pallas_src>
import math

import jax
import jax.numpy as jnp
from jax.experimental import pallas as pl
from jax.experimental.pallas import tpu as pltpu

# ---- scaled-down synthetic BERT config ----
B, S, H = 2, 16, 128
N_HEADS, HEAD_DIM = 2, 64
FFN = 256
N_LAYERS = 2
VOCAB, TYPE_VOCAB, MAX_POS = 128, 2, 64
NUM_CLASSES = 2
LN_EPS = 1e-12                      # BERT default layer-norm eps
_INV_SQRT2 = 1.0 / math.sqrt(2.0)
_ATTN_SCALE = 1.0 / math.sqrt(HEAD_DIM)

# ---- packed-slab layouts (static offsets used inside the kernel) ----
# vec slab rows (all [*, H] f32):
ROW_EMB_G, ROW_EMB_B = 0, 1
ROW_LN_BASE = 2                               # + 4*l : ln1_g, ln1_b, ln2_g, ln2_b
ROW_POOL_B = ROW_LN_BASE + 4 * N_LAYERS       # pooler bias
ROW_CLS_B = ROW_POOL_B + 1                    # classifier bias (lane-padded to H)
ROW_MASK = ROW_CLS_B + 1                      # B rows of attention-mask bias
N_VEC_ROWS = ROW_MASK + B
# w_in slab lane offsets (per layer, [H, 4H+FFN] bf16): [wqkv | wo | w1]
OFF_QKV, OFF_WO, OFF_W1 = 0, 3 * H, 4 * H
W_IN_COLS = 4 * H + FFN
# bias slab lane offsets (per layer, [1, 5H+FFN] f32): [bqkv | bo | b1 | b2]
OFF_BQKV, OFF_BO, OFF_B1, OFF_B2 = 0, 3 * H, 4 * H, 4 * H + FFN
BIAS_COLS = 5 * H + FFN


# ---------------------------------------------------------------------------
# In-kernel math helpers (all f32 elementwise)
# ---------------------------------------------------------------------------
def _ln(v, g, b):
    """LayerNorm over the last (lane) axis; g, b are [1, H] and broadcast."""
    mu = jnp.mean(v, axis=-1, keepdims=True)
    var = jnp.mean(jnp.square(v - mu), axis=-1, keepdims=True)
    return (v - mu) * jax.lax.rsqrt(var + LN_EPS) * g + b


def _erf(x):
    # Abramowitz & Stegun 7.1.26 (|err| < 1.5e-7): built from mul/add/exp/abs/where
    # only. The divide 1/(1+p*|x|) is done with pl.reciprocal -> EUP slot, not VALU.
    a1, a2, a3, a4, a5 = (0.254829592, -0.284496736, 1.421413741,
                          -1.453152027, 1.061405429)
    p = 0.3275911
    sgn = jnp.where(x >= 0.0, 1.0, -1.0)
    ax = jnp.abs(x)
    t = pl.reciprocal(1.0 + p * ax, approx=True)
    poly = ((((a5 * t + a4) * t + a3) * t + a2) * t + a1) * t
    return sgn * (1.0 - poly * jnp.exp(-ax * ax))


def _gelu_exact(x):
    """Exact (erf-based) GELU, matching HF bert-base-chinese's hidden_act='gelu'."""
    return 0.5 * x * (1.0 + _erf(x * _INV_SQRT2))


# ---------------------------------------------------------------------------
# The single fused Pallas kernel
# ---------------------------------------------------------------------------
def bert_forward_kernel(emb_ref, vec_ref, w_in_ref, w2_ref, bias_ref, head_w_ref,
                        out_ref):
    """Whole BERT forward (emb LN -> N encoder layers -> pooler -> classifier).

    Activations are [B*S, H] (hidden dim on the 128-wide lane axis). Per-layer dense
    weights live in the packed bf16 slab w_in_ref ([wqkv|wo|w1]) + w2_ref, per-layer
    biases in bias_ref, and every [1, H] vector (LN params, pooler/classifier bias,
    mask bias) in the single f32 vec_ref slab. Everything stays in VMEM / vregs.
    """
    # Per-batch [S, S] attention-mask bias, hoisted out of the layer/head loops.
    mask_bias = [
        jnp.broadcast_to(vec_ref[ROW_MASK + b:ROW_MASK + b + 1, :S], (S, S))
        for b in range(B)
    ]

    x = _ln(emb_ref[...],
            vec_ref[ROW_EMB_G:ROW_EMB_G + 1, :],
            vec_ref[ROW_EMB_B:ROW_EMB_B + 1, :])                       # [B*S, H] f32

    for l in range(N_LAYERS):
        ln_base = ROW_LN_BASE + 4 * l

        # --- self attention -------------------------------------------------
        # Fused QKV projection: one [B*S, H] x [H, 3H] bf16 matmul, f32 accumulation.
        qkv = (jnp.dot(x.astype(jnp.bfloat16), w_in_ref[l, :, OFF_QKV:OFF_QKV + 3 * H],
                       preferred_element_type=jnp.float32)
               + bias_ref[l, :, OFF_BQKV:OFF_BQKV + 3 * H])            # [B*S, 3H]
        wo = w_in_ref[l, :, OFF_WO:OFF_WO + H]                         # [H, H] bf16

        # Per (batch, head) attention; each head's context is projected immediately
        # through the matching sublane slice of W_O and accumulated (no ctx scratch,
        # no lane-masked 64-wide stores, no explicit K transpose — scores contract on
        # the last dim via dot_general).
        attn_rows = []
        for b in range(B):
            rows = slice(b * S, (b + 1) * S)
            acc_b = jnp.zeros((S, H), jnp.float32)
            for h in range(N_HEADS):
                cq = slice(h * HEAD_DIM, (h + 1) * HEAD_DIM)
                ck = slice(H + h * HEAD_DIM, H + (h + 1) * HEAD_DIM)
                cv = slice(2 * H + h * HEAD_DIM, 2 * H + (h + 1) * HEAD_DIM)
                qh = qkv[rows, cq].astype(jnp.bfloat16)                # [S, HEAD_DIM]
                kh = qkv[rows, ck].astype(jnp.bfloat16)
                vh = qkv[rows, cv].astype(jnp.bfloat16)
                scores = jax.lax.dot_general(
                    qh, kh, dimension_numbers=(((1,), (1,)), ((), ())),
                    preferred_element_type=jnp.float32) * _ATTN_SCALE + mask_bias[b]
                scores = scores - jnp.max(scores, axis=-1, keepdims=True)
                p = jnp.exp(scores)
                p = p * pl.reciprocal(jnp.sum(p, axis=-1, keepdims=True), approx=True)
                ctx_h = jnp.dot(p.astype(jnp.bfloat16), vh,
                                preferred_element_type=jnp.float32)    # [S, HEAD_DIM]
                acc_b = acc_b + jnp.dot(
                    ctx_h.astype(jnp.bfloat16),
                    wo[h * HEAD_DIM:(h + 1) * HEAD_DIM, :],            # sublane slice
                    preferred_element_type=jnp.float32)                # [S, H]
            attn_rows.append(acc_b)
        attn = (jnp.concatenate(attn_rows, axis=0)
                + bias_ref[l, :, OFF_BO:OFF_BO + H])                   # [B*S, H]

        h1 = _ln(x + attn,
                 vec_ref[ln_base + 0:ln_base + 1, :],
                 vec_ref[ln_base + 1:ln_base + 2, :])                  # [B*S, H]

        # --- feed-forward ----------------------------------------------------
        ff = (jnp.dot(h1.astype(jnp.bfloat16), w_in_ref[l, :, OFF_W1:OFF_W1 + FFN],
                      preferred_element_type=jnp.float32)
              + bias_ref[l, :, OFF_B1:OFF_B1 + FFN])                   # [B*S, FFN]
        ff = _gelu_exact(ff)
        ff = (jnp.dot(ff.astype(jnp.bfloat16), w2_ref[l],
                      preferred_element_type=jnp.float32)
              + bias_ref[l, :, OFF_B2:OFF_B2 + H])                     # [B*S, H]
        x = _ln(h1 + ff,
                vec_ref[ln_base + 2:ln_base + 3, :],
                vec_ref[ln_base + 3:ln_base + 4, :])

    # --- pooler (tanh Linear) + classifier -----------------------------------
    # Applied to ALL rows (extra rows are throwaway) with classifier output lanes
    # padded to H=128 so the final store is one full, unmasked [B*S, 128] tile; the
    # wrapper slices the CLS rows / first NUM_CLASSES columns in XLA.
    pooled = jnp.tanh(
        jnp.dot(x.astype(jnp.bfloat16), head_w_ref[:, 0:H],
                preferred_element_type=jnp.float32)
        + vec_ref[ROW_POOL_B:ROW_POOL_B + 1, :])                       # [B*S, H]
    out_ref[...] = (
        jnp.dot(pooled.astype(jnp.bfloat16), head_w_ref[:, H:2 * H],
                preferred_element_type=jnp.float32)
        + vec_ref[ROW_CLS_B:ROW_CLS_B + 1, :])                         # [B*S, H]


# ---------------------------------------------------------------------------
# Wrapper (glue): embedding gathers + mask arithmetic in XLA, one pallas_call
# ---------------------------------------------------------------------------
def _whole_spec(a):
    nd = a.ndim
    return pl.BlockSpec(a.shape, lambda *_ignored, _nd=nd: (0,) * _nd)


@jax.jit
def bert_cnn_forward(params, input_ids, token_type_ids, attention_mask):
    pos_ids = jnp.arange(S)
    emb = (jnp.take(params['word_emb'], input_ids, axis=0)
           + jnp.take(params['pos_emb'], pos_ids, axis=0)[None, :, :]
           + jnp.take(params['type_emb'], token_type_ids, axis=0))
    emb = emb.astype(jnp.float32).reshape(B * S, H)

    # HF-BERT extended attention mask: (1 - mask) * -10000 added to attention scores.
    mask_bias = (1.0 - attention_mask.astype(jnp.float32)) * -10000.0      # [B, S]
    mask_rows = jnp.pad(mask_bias, ((0, 0), (0, H - S)))                   # [B, H]
    vec_slab = jnp.concatenate([params['vec_base'], mask_rows], axis=0)    # [N_VEC_ROWS, H]

    args = (emb, vec_slab, params['w_in'], params['w2'],
            params['bias'], params['head_w'])

    out = pl.pallas_call(
        bert_forward_kernel,
        out_shape=jax.ShapeDtypeStruct((B * S, H), jnp.float32),
        in_specs=[_whole_spec(a) for a in args],
        out_specs=pl.BlockSpec((B * S, H), lambda *_: (0, 0)),
    )(*args)

    # CLS rows (token 0 of each sequence) and the first NUM_CLASSES logit columns.
    return out[::S, :NUM_CLASSES]


# ---------------------------------------------------------------------------
# Deterministic parameter init (BERT-style: N(0, 0.02) weights, zero biases),
# pre-packed into the kernel's consolidated slabs.
# ---------------------------------------------------------------------------
def init_params(key):
    # TODO(synk): the real module loads pretrained bert-base-chinese weights from disk;
    # we substitute deterministic random init with the identical forward structure.
    keys = iter(jax.random.split(key, 16))

    def w(shape):
        return jax.random.normal(next(keys), shape, jnp.float32) * 0.02

    # Per-layer dense weights packed on the lane axis: [wqkv | wo | w1], bf16.
    w_in = jnp.concatenate(
        [w((N_LAYERS, H, 3 * H)), w((N_LAYERS, H, H)), w((N_LAYERS, H, FFN))],
        axis=-1).astype(jnp.bfloat16)                            # [L, H, 4H+FFN]
    w2 = w((N_LAYERS, FFN, H)).astype(jnp.bfloat16)              # [L, FFN, H]
    # Per-layer biases packed on the lane axis: [bqkv | bo | b1 | b2] (BERT init: zeros).
    bias = jnp.zeros((N_LAYERS, 1, BIAS_COLS), jnp.float32)

    # Pooler + classifier weights packed on lanes; classifier lane-padded to H.
    cls_w = jnp.zeros((H, H), jnp.float32).at[:, :NUM_CLASSES].set(w((H, NUM_CLASSES)))
    head_w = jnp.concatenate([w((H, H)), cls_w], axis=-1).astype(jnp.bfloat16)  # [H, 2H]

    # Vector slab: emb LN, per-layer LN params, pooler bias, classifier bias.
    ones_row = jnp.ones((1, H), jnp.float32)
    zeros_row = jnp.zeros((1, H), jnp.float32)
    vec_rows = [ones_row, zeros_row]                             # emb_ln_g, emb_ln_b
    for _ in range(N_LAYERS):
        vec_rows += [ones_row, zeros_row, ones_row, zeros_row]   # ln1_g/b, ln2_g/b
    vec_rows += [zeros_row, zeros_row]                           # pool_b, cls_b (padded)
    vec_base = jnp.concatenate(vec_rows, axis=0)                 # [ROW_MASK, H]

    return dict(
        # Embedding tables stay f32 (gathers run in XLA glue; LN math is f32).
        word_emb=w((VOCAB, H)),
        pos_emb=w((MAX_POS, H)),
        type_emb=w((TYPE_VOCAB, H)),
        w_in=w_in, w2=w2, bias=bias, head_w=head_w, vec_base=vec_base,
    )


if __name__ == "__main__":
    key = jax.random.PRNGKey(0)
    pkey, ikey = jax.random.split(key)
    params = init_params(pkey)

    # Deterministic example inputs (same signature as the PyTorch forward).
    input_ids = jax.random.randint(ikey, (B, S), 0, VOCAB, dtype=jnp.int32)
    token_type_ids = jnp.zeros((B, S), jnp.int32)
    attention_mask = jnp.ones((B, S), jnp.int32).at[1, S - 4:].set(0)  # pad tail of seq 1

    logits = bert_cnn_forward(params, input_ids, token_type_ids, attention_mask)
    logits = jax.block_until_ready(logits)
    assert logits.shape == (B, NUM_CLASSES) and logits.dtype == jnp.float32
    assert bool(jnp.all(jnp.isfinite(logits)))
    print("KERNEL_OK")
</pallas_src>

<mosaic_0001>
module attributes {stable_mosaic.version = 11 : i64} {
  func.func @bert_forward_kernel(%arg0: memref<32x128xf32, #tpu.memory_space<vmem>>, %arg1: memref<14x128xf32, #tpu.memory_space<vmem>>, %arg2: memref<2x128x768xbf16, #tpu.memory_space<vmem>>, %arg3: memref<2x256x128xbf16, #tpu.memory_space<vmem>>, %arg4: memref<2x1x896xf32, #tpu.memory_space<vmem>>, %arg5: memref<128x256xbf16, #tpu.memory_space<vmem>>, %arg6: memref<32x128xf32, #tpu.memory_space<vmem>>) attributes {dimension_semantics = [], scalar_prefetch = 0 : i64, scratch_operands = 0 : i64, tpu.core_type = #tpu.core_type<tc>} {
    %c12 = arith.constant 12 : index
    %c0 = arith.constant 0 : index
    %0 = vector.load %arg1[%c12, %c0] : memref<14x128xf32, #tpu.memory_space<vmem>>, vector<1x16xf32>
    %1 = vector.shape_cast %0 : vector<1x16xf32> to vector<1x16xf32>
    %2 = vector.broadcast %1 : vector<1x16xf32> to vector<16x16xf32>
    %c13 = arith.constant 13 : index
    %c0_0 = arith.constant 0 : index
    %3 = vector.load %arg1[%c13, %c0_0] : memref<14x128xf32, #tpu.memory_space<vmem>>, vector<1x16xf32>
    %4 = vector.shape_cast %3 : vector<1x16xf32> to vector<1x16xf32>
    %5 = vector.broadcast %4 : vector<1x16xf32> to vector<16x16xf32>
    %c0_1 = arith.constant 0 : index
    %c0_2 = arith.constant 0 : index
    %6 = vector.load %arg0[%c0_1, %c0_2] : memref<32x128xf32, #tpu.memory_space<vmem>>, vector<32x128xf32>
    %c0_3 = arith.constant 0 : index
    %c0_4 = arith.constant 0 : index
    %7 = vector.load %arg1[%c0_3, %c0_4] : memref<14x128xf32, #tpu.memory_space<vmem>>, vector<1x128xf32>
    %c1 = arith.constant 1 : index
    %c0_5 = arith.constant 0 : index
    %8 = vector.load %arg1[%c1, %c0_5] : memref<14x128xf32, #tpu.memory_space<vmem>>, vector<1x128xf32>
    %cst = arith.constant dense<0.000000e+00> : vector<32xf32>
    %9 = vector.multi_reduction <add>, %6, %cst [1] : vector<32x128xf32> to vector<32xf32>
    %10 = vector.shape_cast %9 : vector<32xf32> to vector<32x1xf32>
    %cst_6 = arith.constant 1.280000e+02 : f32
    %11 = vector.broadcast %cst_6 : f32 to vector<32x1xf32>
    %12 = arith.divf %10, %11 : vector<32x1xf32>
    %13 = vector.broadcast %12 : vector<32x1xf32> to vector<32x128xf32>
    %14 = arith.subf %6, %13 : vector<32x128xf32>
    %15 = arith.mulf %14, %14 : vector<32x128xf32>
    %cst_7 = arith.constant dense<0.000000e+00> : vector<32xf32>
    %16 = vector.multi_reduction <add>, %15, %cst_7 [1] : vector<32x128xf32> to vector<32xf32>
    %17 = vector.shape_cast %16 : vector<32xf32> to vector<32x1xf32>
    %cst_8 = arith.constant 1.280000e+02 : f32
    %18 = vector.broadcast %cst_8 : f32 to vector<32x1xf32>
    %19 = arith.divf %17, %18 : vector<32x1xf32>
    %20 = vector.broadcast %12 : vector<32x1xf32> to vector<32x128xf32>
    %21 = arith.subf %6, %20 : vector<32x128xf32>
    %cst_9 = arith.constant 9.99999996E-13 : f32
    %22 = vector.broadcast %cst_9 : f32 to vector<32x1xf32>
    %23 = arith.addf %19, %22 : vector<32x1xf32>
    %24 = math.rsqrt %23 : vector<32x1xf32>
    %25 = vector.broadcast %24 : vector<32x1xf32> to vector<32x128xf32>
    %26 = arith.mulf %21, %25 : vector<32x128xf32>
    %27 = vector.broadcast %7 : vector<1x128xf32> to vector<32x128xf32>
    %28 = arith.mulf %26, %27 : vector<32x128xf32>
    %29 = vector.broadcast %8 : vector<1x128xf32> to vector<32x128xf32>
    %30 = arith.addf %28, %29 : vector<32x128xf32>
    %31 = arith.truncf %30 : vector<32x128xf32> to vector<32x128xbf16>
    %c0_10 = arith.constant 0 : index
    %c0_11 = arith.constant 0 : index
    %c0_12 = arith.constant 0 : index
    %32 = vector.load %arg2[%c0_10, %c0_11, %c0_12] : memref<2x128x768xbf16, #tpu.memory_space<vmem>>, vector<1x128x384xbf16>
    %33 = vector.shape_cast %32 : vector<1x128x384xbf16> to vector<128x384xbf16>
    %cst_13 = arith.constant dense<0.000000e+00> : vector<32x384xf32>
    %34 = tpu.matmul %31, %33, %cst_13 {dimension_numbers = #tpu.dot_dimension_numbers<[1], [0], [0], [1], [0, 0, 1, 1], [], []>} : vector<32x128xbf16>, vector<128x384xbf16>, vector<32x384xf32> -> vector<32x384xf32>
    %c0_14 = arith.constant 0 : index
    %c0_15 = arith.constant 0 : index
    %c0_16 = arith.constant 0 : index
    %35 = vector.load %arg4[%c0_14, %c0_15, %c0_16] : memref<2x1x896xf32, #tpu.memory_space<vmem>>, vector<1x1x384xf32>
    %36 = vector.shape_cast %35 : vector<1x1x384xf32> to vector<1x384xf32>
    %37 = vector.broadcast %36 : vector<1x384xf32> to vector<32x384xf32>
    %38 = arith.addf %34, %37 : vector<32x384xf32>
    %c0_17 = arith.constant 0 : index
    %c0_18 = arith.constant 0 : index
    %c384 = arith.constant 384 : index
    %39 = vector.load %arg2[%c0_17, %c0_18, %c384] : memref<2x128x768xbf16, #tpu.memory_space<vmem>>, vector<1x128x128xbf16>
    %40 = vector.shape_cast %39 : vector<1x128x128xbf16> to vector<128x128xbf16>
    %cst_19 = arith.constant 0.000000e+00 : f32
    %41 = vector.broadcast %cst_19 : f32 to vector<16x128xf32>
    %42 = vector.extract_strided_slice %38 {offsets = [0, 0], sizes = [16, 64], strides = [1, 1]} : vector<32x384xf32> to vector<16x64xf32>
    %43 = arith.truncf %42 : vector<16x64xf32> to vector<16x64xbf16>
    %44 = vector.extract_strided_slice %38 {offsets = [0, 128], sizes = [16, 64], strides = [1, 1]} : vector<32x384xf32> to vector<16x64xf32>
    %45 = arith.truncf %44 : vector<16x64xf32> to vector<16x64xbf16>
    %46 = vector.extract_strided_slice %38 {offsets = [0, 256], sizes = [16, 64], strides = [1, 1]} : vector<32x384xf32> to vector<16x64xf32>
    %47 = arith.truncf %46 : vector<16x64xf32> to vector<16x64xbf16>
    %cst_20 = arith.constant dense<0.000000e+00> : vector<16x16xf32>
    %48 = tpu.matmul %43, %45, %cst_20 {dimension_numbers = #tpu.dot_dimension_numbers<[1], [1], [0], [0], [0, 0, 1, 0], [], []>} : vector<16x64xbf16>, vector<16x64xbf16>, vector<16x16xf32> -> vector<16x16xf32>
    %cst_21 = arith.constant 1.250000e-01 : f32
    %49 = vector.broadcast %cst_21 : f32 to vector<16x16xf32>
    %50 = arith.mulf %48, %49 : vector<16x16xf32>
    %51 = arith.addf %50, %2 : vector<16x16xf32>
    %cst_22 = arith.constant dense<0xFF800000> : vector<16xf32>
    %52 = vector.multi_reduction <maximumf>, %51, %cst_22 [1] : vector<16x16xf32> to vector<16xf32>
    %53 = vector.shape_cast %52 : vector<16xf32> to vector<16x1xf32>
    %54 = vector.broadcast %53 : vector<16x1xf32> to vector<16x16xf32>
    %55 = arith.subf %51, %54 : vector<16x16xf32>
    %56 = math.exp %55 : vector<16x16xf32>
    %cst_23 = arith.constant dense<0.000000e+00> : vector<16xf32>
    %57 = vector.multi_reduction <add>, %56, %cst_23 [1] : vector<16x16xf32> to vector<16xf32>
    %58 = vector.shape_cast %57 : vector<16xf32> to vector<16x1xf32>
    %59 = tpu.reciprocal %58 {approx = true} : vector<16x1xf32> -> vector<16x1xf32>
    %60 = vector.broadcast %59 : vector<16x1xf32> to vector<16x16xf32>
    %61 = arith.mulf %56, %60 : vector<16x16xf32>
    %62 = arith.truncf %61 : vector<16x16xf32> to vector<16x16xbf16>
    %cst_24 = arith.constant dense<0.000000e+00> : vector<16x64xf32>
    %63 = tpu.matmul %62, %47, %cst_24 {dimension_numbers = #tpu.dot_dimension_numbers<[1], [0], [0], [1], [0, 0, 1, 1], [], []>} : vector<16x16xbf16>, vector<16x64xbf16>, vector<16x64xf32> -> vector<16x64xf32>
    %64 = arith.truncf %63 : vector<16x64xf32> to vector<16x64xbf16>
    %65 = vector.extract_strided_slice %40 {offsets = [0, 0], sizes = [64, 128], strides = [1, 1]} : vector<128x128xbf16> to vector<64x128xbf16>
    %cst_25 = arith.constant dense<0.000000e+00> : vector<16x128xf32>
    %66 = tpu.matmul %64, %65, %cst_25 {dimension_numbers = #tpu.dot_dimension_numbers<[1], [0], [0], [1], [0, 0, 1, 1], [], []>} : vector<16x64xbf16>, vector<64x128xbf16>, vector<16x128xf32> -> vector<16x128xf32>
    %67 = arith.addf %41, %66 : vector<16x128xf32>
    %68 = vector.extract_strided_slice %38 {offsets = [0, 64], sizes = [16, 64], strides = [1, 1]} : vector<32x384xf32> to vector<16x64xf32>
    %69 = arith.truncf %68 : vector<16x64xf32> to vector<16x64xbf16>
    %70 = vector.extract_strided_slice %38 {offsets = [0, 192], sizes = [16, 64], strides = [1, 1]} : vector<32x384xf32> to vector<16x64xf32>
    %71 = arith.truncf %70 : vector<16x64xf32> to vector<16x64xbf16>
    %72 = vector.extract_strided_slice %38 {offsets = [0, 320], sizes = [16, 64], strides = [1, 1]} : vector<32x384xf32> to vector<16x64xf32>
    %73 = arith.truncf %72 : vector<16x64xf32> to vector<16x64xbf16>
    %cst_26 = arith.constant dense<0.000000e+00> : vector<16x16xf32>
    %74 = tpu.matmul %69, %71, %cst_26 {dimension_numbers = #tpu.dot_dimension_numbers<[1], [1], [0], [0], [0, 0, 1, 0], [], []>} : vector<16x64xbf16>, vector<16x64xbf16>, vector<16x16xf32> -> vector<16x16xf32>
    %cst_27 = arith.constant 1.250000e-01 : f32
    %75 = vector.broadcast %cst_27 : f32 to vector<16x16xf32>
    %76 = arith.mulf %74, %75 : vector<16x16xf32>
    %77 = arith.addf %76, %2 : vector<16x16xf32>
    %cst_28 = arith.constant dense<0xFF800000> : vector<16xf32>
    %78 = vector.multi_reduction <maximumf>, %77, %cst_28 [1] : vector<16x16xf32> to vector<16xf32>
    %79 = vector.shape_cast %78 : vector<16xf32> to vector<16x1xf32>
    %80 = vector.broadcast %79 : vector<16x1xf32> to vector<16x16xf32>
    %81 = arith.subf %77, %80 : vector<16x16xf32>
    %82 = math.exp %81 : vector<16x16xf32>
    %cst_29 = arith.constant dense<0.000000e+00> : vector<16xf32>
    %83 = vector.multi_reduction <add>, %82, %cst_29 [1] : vector<16x16xf32> to vector<16xf32>
    %84 = vector.shape_cast %83 : vector<16xf32> to vector<16x1xf32>
    %85 = tpu.reciprocal %84 {approx = true} : vector<16x1xf32> -> vector<16x1xf32>
    %86 = vector.broadcast %85 : vector<16x1xf32> to vector<16x16xf32>
    %87 = arith.mulf %82, %86 : vector<16x16xf32>
    %88 = arith.truncf %87 : vector<16x16xf32> to vector<16x16xbf16>
    %cst_30 = arith.constant dense<0.000000e+00> : vector<16x64xf32>
    %89 = tpu.matmul %88, %73, %cst_30 {dimension_numbers = #tpu.dot_dimension_numbers<[1], [0], [0], [1], [0, 0, 1, 1], [], []>} : vector<16x16xbf16>, vector<16x64xbf16>, vector<16x64xf32> -> vector<16x64xf32>
    %90 = arith.truncf %89 : vector<16x64xf32> to vector<16x64xbf16>
    %91 = vector.extract_strided_slice %40 {offsets = [64, 0], sizes = [64, 128], strides = [1, 1]} : vector<128x128xbf16> to vector<64x128xbf16>
    %cst_31 = arith.constant dense<0.000000e+00> : vector<16x128xf32>
    %92 = tpu.matmul %90, %91, %cst_31 {dimension_numbers = #tpu.dot_dimension_numbers<[1], [0], [0], [1], [0, 0, 1, 1], [], []>} : vector<16x64xbf16>, vector<64x128xbf16>, vector<16x128xf32> -> vector<16x128xf32>
    %93 = arith.addf %67, %92 : vector<16x128xf32>
    %cst_32 = arith.constant 0.000000e+00 : f32
    %94 = vector.broadcast %cst_32 : f32 to vector<16x128xf32>
    %95 = vector.extract_strided_slice %38 {offsets = [16, 0], sizes = [16, 64], strides = [1, 1]} : vector<32x384xf32> to vector<16x64xf32>
    %96 = arith.truncf %95 : vector<16x64xf32> to vector<16x64xbf16>
    %97 = vector.extract_strided_slice %38 {offsets = [16, 128], sizes = [16, 64], strides = [1, 1]} : vector<32x384xf32> to vector<16x64xf32>
    %98 = arith.truncf %97 : vector<16x64xf32> to vector<16x64xbf16>
    %99 = vector.extract_strided_slice %38 {offsets = [16, 256], sizes = [16, 64], strides = [1, 1]} : vector<32x384xf32> to vector<16x64xf32>
    %100 = arith.truncf %99 : vector<16x64xf32> to vector<16x64xbf16>
    %cst_33 = arith.constant dense<0.000000e+00> : vector<16x16xf32>
    %101 = tpu.matmul %96, %98, %cst_33 {dimension_numbers = #tpu.dot_dimension_numbers<[1], [1], [0], [0], [0, 0, 1, 0], [], []>} : vector<16x64xbf16>, vector<16x64xbf16>, vector<16x16xf32> -> vector<16x16xf32>
    %cst_34 = arith.constant 1.250000e-01 : f32
    %102 = vector.broadcast %cst_34 : f32 to vector<16x16xf32>
    %103 = arith.mulf %101, %102 : vector<16x16xf32>
    %104 = arith.addf %103, %5 : vector<16x16xf32>
    %cst_35 = arith.constant dense<0xFF800000> : vector<16xf32>
    %105 = vector.multi_reduction <maximumf>, %104, %cst_35 [1] : vector<16x16xf32> to vector<16xf32>
    %106 = vector.shape_cast %105 : vector<16xf32> to vector<16x1xf32>
    %107 = vector.broadcast %106 : vector<16x1xf32> to vector<16x16xf32>
    %108 = arith.subf %104, %107 : vector<16x16xf32>
    %109 = math.exp %108 : vector<16x16xf32>
    %cst_36 = arith.constant dense<0.000000e+00> : vector<16xf32>
    %110 = vector.multi_reduction <add>, %109, %cst_36 [1] : vector<16x16xf32> to vector<16xf32>
    %111 = vector.shape_cast %110 : vector<16xf32> to vector<16x1xf32>
    %112 = tpu.reciprocal %111 {approx = true} : vector<16x1xf32> -> vector<16x1xf32>
    %113 = vector.broadcast %112 : vector<16x1xf32> to vector<16x16xf32>
    %114 = arith.mulf %109, %113 : vector<16x16xf32>
    %115 = arith.truncf %114 : vector<16x16xf32> to vector<16x16xbf16>
    %cst_37 = arith.constant dense<0.000000e+00> : vector<16x64xf32>
    %116 = tpu.matmul %115, %100, %cst_37 {dimension_numbers = #tpu.dot_dimension_numbers<[1], [0], [0], [1], [0, 0, 1, 1], [], []>} : vector<16x16xbf16>, vector<16x64xbf16>, vector<16x64xf32> -> vector<16x64xf32>
    %117 = arith.truncf %116 : vector<16x64xf32> to vector<16x64xbf16>
    %118 = vector.extract_strided_slice %40 {offsets = [0, 0], sizes = [64, 128], strides = [1, 1]} : vector<128x128xbf16> to vector<64x128xbf16>
    %cst_38 = arith.constant dense<0.000000e+00> : vector<16x128xf32>
    %119 = tpu.matmul %117, %118, %cst_38 {dimension_numbers = #tpu.dot_dimension_numbers<[1], [0], [0], [1], [0, 0, 1, 1], [], []>} : vector<16x64xbf16>, vector<64x128xbf16>, vector<16x128xf32> -> vector<16x128xf32>
    %120 = arith.addf %94, %119 : vector<16x128xf32>
    %121 = vector.extract_strided_slice %38 {offsets = [16, 64], sizes = [16, 64], strides = [1, 1]} : vector<32x384xf32> to vector<16x64xf32>
    %122 = arith.truncf %121 : vector<16x64xf32> to vector<16x64xbf16>
    %123 = vector.extract_strided_slice %38 {offsets = [16, 192], sizes = [16, 64], strides = [1, 1]} : vector<32x384xf32> to vector<16x64xf32>
    %124 = arith.truncf %123 : vector<16x64xf32> to vector<16x64xbf16>
    %125 = vector.extract_strided_slice %38 {offsets = [16, 320], sizes = [16, 64], strides = [1, 1]} : vector<32x384xf32> to vector<16x64xf32>
    %126 = arith.truncf %125 : vector<16x64xf32> to vector<16x64xbf16>
    %cst_39 = arith.constant dense<0.000000e+00> : vector<16x16xf32>
    %127 = tpu.matmul %122, %124, %cst_39 {dimension_numbers = #tpu.dot_dimension_numbers<[1], [1], [0], [0], [0, 0, 1, 0], [], []>} : vector<16x64xbf16>, vector<16x64xbf16>, vector<16x16xf32> -> vector<16x16xf32>
    %cst_40 = arith.constant 1.250000e-01 : f32
    %128 = vector.broadcast %cst_40 : f32 to vector<16x16xf32>
    %129 = arith.mulf %127, %128 : vector<16x16xf32>
    %130 = arith.addf %129, %5 : vector<16x16xf32>
    %cst_41 = arith.constant dense<0xFF800000> : vector<16xf32>
    %131 = vector.multi_reduction <maximumf>, %130, %cst_41 [1] : vector<16x16xf32> to vector<16xf32>
    %132 = vector.shape_cast %131 : vector<16xf32> to vector<16x1xf32>
    %133 = vector.broadcast %132 : vector<16x1xf32> to vector<16x16xf32>
    %134 = arith.subf %130, %133 : vector<16x16xf32>
    %135 = math.exp %134 : vector<16x16xf32>
    %cst_42 = arith.constant dense<0.000000e+00> : vector<16xf32>
    %136 = vector.multi_reduction <add>, %135, %cst_42 [1] : vector<16x16xf32> to vector<16xf32>
    %137 = vector.shape_cast %136 : vector<16xf32> to vector<16x1xf32>
    %138 = tpu.reciprocal %137 {approx = true} : vector<16x1xf32> -> vector<16x1xf32>
    %139 = vector.broadcast %138 : vector<16x1xf32> to vector<16x16xf32>
    %140 = arith.mulf %135, %139 : vector<16x16xf32>
    %141 = arith.truncf %140 : vector<16x16xf32> to vector<16x16xbf16>
    %cst_43 = arith.constant dense<0.000000e+00> : vector<16x64xf32>
    %142 = tpu.matmul %141, %126, %cst_43 {dimension_numbers = #tpu.dot_dimension_numbers<[1], [0], [0], [1], [0, 0, 1, 1], [], []>} : vector<16x16xbf16>, vector<16x64xbf16>, vector<16x64xf32> -> vector<16x64xf32>
    %143 = arith.truncf %142 : vector<16x64xf32> to vector<16x64xbf16>
    %144 = vector.extract_strided_slice %40 {offsets = [64, 0], sizes = [64, 128], strides = [1, 1]} : vector<128x128xbf16> to vector<64x128xbf16>
    %cst_44 = arith.constant dense<0.000000e+00> : vector<16x128xf32>
    %145 = tpu.matmul %143, %144, %cst_44 {dimension_numbers = #tpu.dot_dimension_numbers<[1], [0], [0], [1], [0, 0, 1, 1], [], []>} : vector<16x64xbf16>, vector<64x128xbf16>, vector<16x128xf32> -> vector<16x128xf32>
    %146 = arith.addf %120, %145 : vector<16x128xf32>
    %147 = tpu.concatenate %93, %146 in 0 : vector<16x128xf32>, vector<16x128xf32> -> vector<32x128xf32>
    %c0_45 = arith.constant 0 : index
    %c0_46 = arith.constant 0 : index
    %c384_47 = arith.constant 384 : index
    %148 = vector.load %arg4[%c0_45, %c0_46, %c384_47] : memref<2x1x896xf32, #tpu.memory_space<vmem>>, vector<1x1x128xf32>
    %149 = vector.shape_cast %148 : vector<1x1x128xf32> to vector<1x128xf32>
    %150 = vector.broadcast %149 : vector<1x128xf32> to vector<32x128xf32>
    %151 = arith.addf %147, %150 : vector<32x128xf32>
    %152 = arith.addf %30, %151 : vector<32x128xf32>
    %c2 = arith.constant 2 : index
    %c0_48 = arith.constant 0 : index
    %153 = vector.load %arg1[%c2, %c0_48] : memref<14x128xf32, #tpu.memory_space<vmem>>, vector<1x128xf32>
    %c3 = arith.constant 3 : index
    %c0_49 = arith.constant 0 : index
    %154 = vector.load %arg1[%c3, %c0_49] : memref<14x128xf32, #tpu.memory_space<vmem>>, vector<1x128xf32>
    %cst_50 = arith.constant dense<0.000000e+00> : vector<32xf32>
    %155 = vector.multi_reduction <add>, %152, %cst_50 [1] : vector<32x128xf32> to vector<32xf32>
    %156 = vector.shape_cast %155 : vector<32xf32> to vector<32x1xf32>
    %cst_51 = arith.constant 1.280000e+02 : f32
    %157 = vector.broadcast %cst_51 : f32 to vector<32x1xf32>
    %158 = arith.divf %156, %157 : vector<32x1xf32>
    %159 = vector.broadcast %158 : vector<32x1xf32> to vector<32x128xf32>
    %160 = arith.subf %152, %159 : vector<32x128xf32>
    %161 = arith.mulf %160, %160 : vector<32x128xf32>
    %cst_52 = arith.constant dense<0.000000e+00> : vector<32xf32>
    %162 = vector.multi_reduction <add>, %161, %cst_52 [1] : vector<32x128xf32> to vector<32xf32>
    %163 = vector.shape_cast %162 : vector<32xf32> to vector<32x1xf32>
    %cst_53 = arith.constant 1.280000e+02 : f32
    %164 = vector.broadcast %cst_53 : f32 to vector<32x1xf32>
    %165 = arith.divf %163, %164 : vector<32x1xf32>
    %166 = vector.broadcast %158 : vector<32x1xf32> to vector<32x128xf32>
    %167 = arith.subf %152, %166 : vector<32x128xf32>
    %cst_54 = arith.constant 9.99999996E-13 : f32
    %168 = vector.broadcast %cst_54 : f32 to vector<32x1xf32>
    %169 = arith.addf %165, %168 : vector<32x1xf32>
    %170 = math.rsqrt %169 : vector<32x1xf32>
    %171 = vector.broadcast %170 : vector<32x1xf32> to vector<32x128xf32>
    %172 = arith.mulf %167, %171 : vector<32x128xf32>
    %173 = vector.broadcast %153 : vector<1x128xf32> to vector<32x128xf32>
    %174 = arith.mulf %172, %173 : vector<32x128xf32>
    %175 = vector.broadcast %154 : vector<1x128xf32> to vector<32x128xf32>
    %176 = arith.addf %174, %175 : vector<32x128xf32>
    %177 = arith.truncf %176 : vector<32x128xf32> to vector<32x128xbf16>
    %c0_55 = arith.constant 0 : index
    %c0_56 = arith.constant 0 : index
    %c512 = arith.constant 512 : index
    %178 = vector.load %arg2[%c0_55, %c0_56, %c512] : memref<2x128x768xbf16, #tpu.memory_space<vmem>>, vector<1x128x256xbf16>
    %179 = vector.shape_cast %178 : vector<1x128x256xbf16> to vector<128x256xbf16>
    %cst_57 = arith.constant dense<0.000000e+00> : vector<32x256xf32>
    %180 = tpu.matmul %177, %179, %cst_57 {dimension_numbers = #tpu.dot_dimension_numbers<[1], [0], [0], [1], [0, 0, 1, 1], [], []>} : vector<32x128xbf16>, vector<128x256xbf16>, vector<32x256xf32> -> vector<32x256xf32>
    %c0_58 = arith.constant 0 : index
    %c0_59 = arith.constant 0 : index
    %c512_60 = arith.constant 512 : index
    %181 = vector.load %arg4[%c0_58, %c0_59, %c512_60] : memref<2x1x896xf32, #tpu.memory_space<vmem>>, vector<1x1x256xf32>
    %182 = vector.shape_cast %181 : vector<1x1x256xf32> to vector<1x256xf32>
    %183 = vector.broadcast %182 : vector<1x256xf32> to vector<32x256xf32>
    %184 = arith.addf %180, %183 : vector<32x256xf32>
    %cst_61 = arith.constant 5.000000e-01 : f32
    %185 = vector.broadcast %cst_61 : f32 to vector<32x256xf32>
    %186 = arith.mulf %185, %184 : vector<32x256xf32>
    %cst_62 = arith.constant 0.707106769 : f32
    %187 = vector.broadcast %cst_62 : f32 to vector<32x256xf32>
    %188 = arith.mulf %184, %187 : vector<32x256xf32>
    %cst_63 = arith.constant 0.000000e+00 : f32
    %189 = vector.broadcast %cst_63 : f32 to vector<32x256xf32>
    %190 = arith.cmpf oge, %188, %189 : vector<32x256xf32>
    %cst_64 = arith.constant 1.000000e+00 : f32
    %cst_65 = arith.constant -1.000000e+00 : f32
    %191 = vector.broadcast %cst_64 : f32 to vector<32x256xf32>
    %192 = vector.broadcast %cst_65 : f32 to vector<32x256xf32>
    %193 = arith.select %190, %191, %192 : vector<32x256xi1>, vector<32x256xf32>
    %194 = math.absf %188 : vector<32x256xf32>
    %cst_66 = arith.constant 0.327591091 : f32
    %195 = vector.broadcast %cst_66 : f32 to vector<32x256xf32>
    %196 = arith.mulf %195, %194 : vector<32x256xf32>
    %cst_67 = arith.constant 1.000000e+00 : f32
    %197 = vector.broadcast %cst_67 : f32 to vector<32x256xf32>
    %198 = arith.addf %197, %196 : vector<32x256xf32>
    %199 = tpu.reciprocal %198 {approx = true} : vector<32x256xf32> -> vector<32x256xf32>
    %cst_68 = arith.constant 1.06140542 : f32
    %200 = vector.broadcast %cst_68 : f32 to vector<32x256xf32>
    %201 = arith.mulf %200, %199 : vector<32x256xf32>
    %cst_69 = arith.constant -1.45315206 : f32
    %202 = vector.broadcast %cst_69 : f32 to vector<32x256xf32>
    %203 = arith.addf %201, %202 : vector<32x256xf32>
    %204 = arith.mulf %203, %199 : vector<32x256xf32>
    %cst_70 = arith.constant 1.42141378 : f32
    %205 = vector.broadcast %cst_70 : f32 to vector<32x256xf32>
    %206 = arith.addf %204, %205 : vector<32x256xf32>
    %207 = arith.mulf %206, %199 : vector<32x256xf32>
    %cst_71 = arith.constant -0.284496725 : f32
    %208 = vector.broadcast %cst_71 : f32 to vector<32x256xf32>
    %209 = arith.addf %207, %208 : vector<32x256xf32>
    %210 = arith.mulf %209, %199 : vector<32x256xf32>
    %cst_72 = arith.constant 0.254829586 : f32
    %211 = vector.broadcast %cst_72 : f32 to vector<32x256xf32>
    %212 = arith.addf %210, %211 : vector<32x256xf32>
    %213 = arith.mulf %212, %199 : vector<32x256xf32>
    %cst_73 = arith.constant 0.000000e+00 : f32
    %214 = vector.broadcast %cst_73 : f32 to vector<32x256xf32>
    %215 = arith.subf %214, %194 : vector<32x256xf32>
    %216 = arith.mulf %215, %194 : vector<32x256xf32>
    %217 = math.exp %216 : vector<32x256xf32>
    %218 = arith.mulf %213, %217 : vector<32x256xf32>
    %cst_74 = arith.constant 1.000000e+00 : f32
    %219 = vector.broadcast %cst_74 : f32 to vector<32x256xf32>
    %220 = arith.subf %219, %218 : vector<32x256xf32>
    %221 = arith.mulf %193, %220 : vector<32x256xf32>
    %cst_75 = arith.constant 1.000000e+00 : f32
    %222 = vector.broadcast %cst_75 : f32 to vector<32x256xf32>
    %223 = arith.addf %222, %221 : vector<32x256xf32>
    %224 = arith.mulf %186, %223 : vector<32x256xf32>
    %225 = arith.truncf %224 : vector<32x256xf32> to vector<32x256xbf16>
    %c0_76 = arith.constant 0 : index
    %c0_77 = arith.constant 0 : index
    %c0_78 = arith.constant 0 : index
    %226 = vector.load %arg3[%c0_76, %c0_77, %c0_78] : memref<2x256x128xbf16, #tpu.memory_space<vmem>>, vector<1x256x128xbf16>
    %227 = vector.shape_cast %226 : vector<1x256x128xbf16> to vector<256x128xbf16>
    %cst_79 = arith.constant dense<0.000000e+00> : vector<32x128xf32>
    %228 = tpu.matmul %225, %227, %cst_79 {dimension_numbers = #tpu.dot_dimension_numbers<[1], [0], [0], [1], [0, 0, 1, 1], [], []>} : vector<32x256xbf16>, vector<256x128xbf16>, vector<32x128xf32> -> vector<32x128xf32>
    %c0_80 = arith.constant 0 : index
    %c0_81 = arith.constant 0 : index
    %c768 = arith.constant 768 : index
    %229 = vector.load %arg4[%c0_80, %c0_81, %c768] : memref<2x1x896xf32, #tpu.memory_space<vmem>>, vector<1x1x128xf32>
    %230 = vector.shape_cast %229 : vector<1x1x128xf32> to vector<1x128xf32>
    %231 = vector.broadcast %230 : vector<1x128xf32> to vector<32x128xf32>
    %232 = arith.addf %228, %231 : vector<32x128xf32>
    %233 = arith.addf %176, %232 : vector<32x128xf32>
    %c4 = arith.constant 4 : index
    %c0_82 = arith.constant 0 : index
    %234 = vector.load %arg1[%c4, %c0_82] : memref<14x128xf32, #tpu.memory_space<vmem>>, vector<1x128xf32>
    %c5 = arith.constant 5 : index
    %c0_83 = arith.constant 0 : index
    %235 = vector.load %arg1[%c5, %c0_83] : memref<14x128xf32, #tpu.memory_space<vmem>>, vector<1x128xf32>
    %cst_84 = arith.constant dense<0.000000e+00> : vector<32xf32>
    %236 = vector.multi_reduction <add>, %233, %cst_84 [1] : vector<32x128xf32> to vector<32xf32>
    %237 = vector.shape_cast %236 : vector<32xf32> to vector<32x1xf32>
    %cst_85 = arith.constant 1.280000e+02 : f32
    %238 = vector.broadcast %cst_85 : f32 to vector<32x1xf32>
    %239 = arith.divf %237, %238 : vector<32x1xf32>
    %240 = vector.broadcast %239 : vector<32x1xf32> to vector<32x128xf32>
    %241 = arith.subf %233, %240 : vector<32x128xf32>
    %242 = arith.mulf %241, %241 : vector<32x128xf32>
    %cst_86 = arith.constant dense<0.000000e+00> : vector<32xf32>
    %243 = vector.multi_reduction <add>, %242, %cst_86 [1] : vector<32x128xf32> to vector<32xf32>
    %244 = vector.shape_cast %243 : vector<32xf32> to vector<32x1xf32>
    %cst_87 = arith.constant 1.280000e+02 : f32
    %245 = vector.broadcast %cst_87 : f32 to vector<32x1xf32>
    %246 = arith.divf %244, %245 : vector<32x1xf32>
    %247 = vector.broadcast %239 : vector<32x1xf32> to vector<32x128xf32>
    %248 = arith.subf %233, %247 : vector<32x128xf32>
    %cst_88 = arith.constant 9.99999996E-13 : f32
    %249 = vector.broadcast %cst_88 : f32 to vector<32x1xf32>
    %250 = arith.addf %246, %249 : vector<32x1xf32>
    %251 = math.rsqrt %250 : vector<32x1xf32>
    %252 = vector.broadcast %251 : vector<32x1xf32> to vector<32x128xf32>
    %253 = arith.mulf %248, %252 : vector<32x128xf32>
    %254 = vector.broadcast %234 : vector<1x128xf32> to vector<32x128xf32>
    %255 = arith.mulf %253, %254 : vector<32x128xf32>
    %256 = vector.broadcast %235 : vector<1x128xf32> to vector<32x128xf32>
    %257 = arith.addf %255, %256 : vector<32x128xf32>
    %258 = arith.truncf %257 : vector<32x128xf32> to vector<32x128xbf16>
    %c1_89 = arith.constant 1 : index
    %c0_90 = arith.constant 0 : index
    %c0_91 = arith.constant 0 : index
    %259 = vector.load %arg2[%c1_89, %c0_90, %c0_91] : memref<2x128x768xbf16, #tpu.memory_space<vmem>>, vector<1x128x384xbf16>
    %260 = vector.shape_cast %259 : vector<1x128x384xbf16> to vector<128x384xbf16>
    %cst_92 = arith.constant dense<0.000000e+00> : vector<32x384xf32>
    %261 = tpu.matmul %258, %260, %cst_92 {dimension_numbers = #tpu.dot_dimension_numbers<[1], [0], [0], [1], [0, 0, 1, 1], [], []>} : vector<32x128xbf16>, vector<128x384xbf16>, vector<32x384xf32> -> vector<32x384xf32>
    %c1_93 = arith.constant 1 : index
    %c0_94 = arith.constant 0 : index
    %c0_95 = arith.constant 0 : index
    %262 = vector.load %arg4[%c1_93, %c0_94, %c0_95] : memref<2x1x896xf32, #tpu.memory_space<vmem>>, vector<1x1x384xf32>
    %263 = vector.shape_cast %262 : vector<1x1x384xf32> to vector<1x384xf32>
    %264 = vector.broadcast %263 : vector<1x384xf32> to vector<32x384xf32>
    %265 = arith.addf %261, %264 : vector<32x384xf32>
    %c1_96 = arith.constant 1 : index
    %c0_97 = arith.constant 0 : index
    %c384_98 = arith.constant 384 : index
    %266 = vector.load %arg2[%c1_96, %c0_97, %c384_98] : memref<2x128x768xbf16, #tpu.memory_space<vmem>>, vector<1x128x128xbf16>
    %267 = vector.shape_cast %266 : vector<1x128x128xbf16> to vector<128x128xbf16>
    %cst_99 = arith.constant 0.000000e+00 : f32
    %268 = vector.broadcast %cst_99 : f32 to vector<16x128xf32>
    %269 = vector.extract_strided_slice %265 {offsets = [0, 0], sizes = [16, 64], strides = [1, 1]} : vector<32x384xf32> to vector<16x64xf32>
    %270 = arith.truncf %269 : vector<16x64xf32> to vector<16x64xbf16>
    %271 = vector.extract_strided_slice %265 {offsets = [0, 128], sizes = [16, 64], strides = [1, 1]} : vector<32x384xf32> to vector<16x64xf32>
    %272 = arith.truncf %271 : vector<16x64xf32> to vector<16x64xbf16>
    %273 = vector.extract_strided_slice %265 {offsets = [0, 256], sizes = [16, 64], strides = [1, 1]} : vector<32x384xf32> to vector<16x64xf32>
    %274 = arith.truncf %273 : vector<16x64xf32> to vector<16x64xbf16>
    %cst_100 = arith.constant dense<0.000000e+00> : vector<16x16xf32>
    %275 = tpu.matmul %270, %272, %cst_100 {dimension_numbers = #tpu.dot_dimension_numbers<[1], [1], [0], [0], [0, 0, 1, 0], [], []>} : vector<16x64xbf16>, vector<16x64xbf16>, vector<16x16xf32> -> vector<16x16xf32>
    %cst_101 = arith.constant 1.250000e-01 : f32
    %276 = vector.broadcast %cst_101 : f32 to vector<16x16xf32>
    %277 = arith.mulf %275, %276 : vector<16x16xf32>
    %278 = arith.addf %277, %2 : vector<16x16xf32>
    %cst_102 = arith.constant dense<0xFF800000> : vector<16xf32>
    %279 = vector.multi_reduction <maximumf>, %278, %cst_102 [1] : vector<16x16xf32> to vector<16xf32>
    %280 = vector.shape_cast %279 : vector<16xf32> to vector<16x1xf32>
    %281 = vector.broadcast %280 : vector<16x1xf32> to vector<16x16xf32>
    %282 = arith.subf %278, %281 : vector<16x16xf32>
    %283 = math.exp %282 : vector<16x16xf32>
    %cst_103 = arith.constant dense<0.000000e+00> : vector<16xf32>
    %284 = vector.multi_reduction <add>, %283, %cst_103 [1] : vector<16x16xf32> to vector<16xf32>
    %285 = vector.shape_cast %284 : vector<16xf32> to vector<16x1xf32>
    %286 = tpu.reciprocal %285 {approx = true} : vector<16x1xf32> -> vector<16x1xf32>
    %287 = vector.broadcast %286 : vector<16x1xf32> to vector<16x16xf32>
    %288 = arith.mulf %283, %287 : vector<16x16xf32>
    %289 = arith.truncf %288 : vector<16x16xf32> to vector<16x16xbf16>
    %cst_104 = arith.constant dense<0.000000e+00> : vector<16x64xf32>
    %290 = tpu.matmul %289, %274, %cst_104 {dimension_numbers = #tpu.dot_dimension_numbers<[1], [0], [0], [1], [0, 0, 1, 1], [], []>} : vector<16x16xbf16>, vector<16x64xbf16>, vector<16x64xf32> -> vector<16x64xf32>
    %291 = arith.truncf %290 : vector<16x64xf32> to vector<16x64xbf16>
    %292 = vector.extract_strided_slice %267 {offsets = [0, 0], sizes = [64, 128], strides = [1, 1]} : vector<128x128xbf16> to vector<64x128xbf16>
    %cst_105 = arith.constant dense<0.000000e+00> : vector<16x128xf32>
    %293 = tpu.matmul %291, %292, %cst_105 {dimension_numbers = #tpu.dot_dimension_numbers<[1], [0], [0], [1], [0, 0, 1, 1], [], []>} : vector<16x64xbf16>, vector<64x128xbf16>, vector<16x128xf32> -> vector<16x128xf32>
    %294 = arith.addf %268, %293 : vector<16x128xf32>
    %295 = vector.extract_strided_slice %265 {offsets = [0, 64], sizes = [16, 64], strides = [1, 1]} : vector<32x384xf32> to vector<16x64xf32>
    %296 = arith.truncf %295 : vector<16x64xf32> to vector<16x64xbf16>
    %297 = vector.extract_strided_slice %265 {offsets = [0, 192], sizes = [16, 64], strides = [1, 1]} : vector<32x384xf32> to vector<16x64xf32>
    %298 = arith.truncf %297 : vector<16x64xf32> to vector<16x64xbf16>
    %299 = vector.extract_strided_slice %265 {offsets = [0, 320], sizes = [16, 64], strides = [1, 1]} : vector<32x384xf32> to vector<16x64xf32>
    %300 = arith.truncf %299 : vector<16x64xf32> to vector<16x64xbf16>
    %cst_106 = arith.constant dense<0.000000e+00> : vector<16x16xf32>
    %301 = tpu.matmul %296, %298, %cst_106 {dimension_numbers = #tpu.dot_dimension_numbers<[1], [1], [0], [0], [0, 0, 1, 0], [], []>} : vector<16x64xbf16>, vector<16x64xbf16>, vector<16x16xf32> -> vector<16x16xf32>
    %cst_107 = arith.constant 1.250000e-01 : f32
    %302 = vector.broadcast %cst_107 : f32 to vector<16x16xf32>
    %303 = arith.mulf %301, %302 : vector<16x16xf32>
    %304 = arith.addf %303, %2 : vector<16x16xf32>
    %cst_108 = arith.constant dense<0xFF800000> : vector<16xf32>
    %305 = vector.multi_reduction <maximumf>, %304, %cst_108 [1] : vector<16x16xf32> to vector<16xf32>
    %306 = vector.shape_cast %305 : vector<16xf32> to vector<16x1xf32>
    %307 = vector.broadcast %306 : vector<16x1xf32> to vector<16x16xf32>
    %308 = arith.subf %304, %307 : vector<16x16xf32>
    %309 = math.exp %308 : vector<16x16xf32>
    %cst_109 = arith.constant dense<0.000000e+00> : vector<16xf32>
    %310 = vector.multi_reduction <add>, %309, %cst_109 [1] : vector<16x16xf32> to vector<16xf32>
    %311 = vector.shape_cast %310 : vector<16xf32> to vector<16x1xf32>
    %312 = tpu.reciprocal %311 {approx = true} : vector<16x1xf32> -> vector<16x1xf32>
    %313 = vector.broadcast %312 : vector<16x1xf32> to vector<16x16xf32>
    %314 = arith.mulf %309, %313 : vector<16x16xf32>
    %315 = arith.truncf %314 : vector<16x16xf32> to vector<16x16xbf16>
    %cst_110 = arith.constant dense<0.000000e+00> : vector<16x64xf32>
    %316 = tpu.matmul %315, %300, %cst_110 {dimension_numbers = #tpu.dot_dimension_numbers<[1], [0], [0], [1], [0, 0, 1, 1], [], []>} : vector<16x16xbf16>, vector<16x64xbf16>, vector<16x64xf32> -> vector<16x64xf32>
    %317 = arith.truncf %316 : vector<16x64xf32> to vector<16x64xbf16>
    %318 = vector.extract_strided_slice %267 {offsets = [64, 0], sizes = [64, 128], strides = [1, 1]} : vector<128x128xbf16> to vector<64x128xbf16>
    %cst_111 = arith.constant dense<0.000000e+00> : vector<16x128xf32>
    %319 = tpu.matmul %317, %318, %cst_111 {dimension_numbers = #tpu.dot_dimension_numbers<[1], [0], [0], [1], [0, 0, 1, 1], [], []>} : vector<16x64xbf16>, vector<64x128xbf16>, vector<16x128xf32> -> vector<16x128xf32>
    %320 = arith.addf %294, %319 : vector<16x128xf32>
    %cst_112 = arith.constant 0.000000e+00 : f32
    %321 = vector.broadcast %cst_112 : f32 to vector<16x128xf32>
    %322 = vector.extract_strided_slice %265 {offsets = [16, 0], sizes = [16, 64], strides = [1, 1]} : vector<32x384xf32> to vector<16x64xf32>
    %323 = arith.truncf %322 : vector<16x64xf32> to vector<16x64xbf16>
    %324 = vector.extract_strided_slice %265 {offsets = [16, 128], sizes = [16, 64], strides = [1, 1]} : vector<32x384xf32> to vector<16x64xf32>
    %325 = arith.truncf %324 : vector<16x64xf32> to vector<16x64xbf16>
    %326 = vector.extract_strided_slice %265 {offsets = [16, 256], sizes = [16, 64], strides = [1, 1]} : vector<32x384xf32> to vector<16x64xf32>
    %327 = arith.truncf %326 : vector<16x64xf32> to vector<16x64xbf16>
    %cst_113 = arith.constant dense<0.000000e+00> : vector<16x16xf32>
    %328 = tpu.matmul %323, %325, %cst_113 {dimension_numbers = #tpu.dot_dimension_numbers<[1], [1], [0], [0], [0, 0, 1, 0], [], []>} : vector<16x64xbf16>, vector<16x64xbf16>, vector<16x16xf32> -> vector<16x16xf32>
    %cst_114 = arith.constant 1.250000e-01 : f32
    %329 = vector.broadcast %cst_114 : f32 to vector<16x16xf32>
    %330 = arith.mulf %328, %329 : vector<16x16xf32>
    %331 = arith.addf %330, %5 : vector<16x16xf32>
    %cst_115 = arith.constant dense<0xFF800000> : vector<16xf32>
    %332 = vector.multi_reduction <maximumf>, %331, %cst_115 [1] : vector<16x16xf32> to vector<16xf32>
    %333 = vector.shape_cast %332 : vector<16xf32> to vector<16x1xf32>
    %334 = vector.broadcast %333 : vector<16x1xf32> to vector<16x16xf32>
    %335 = arith.subf %331, %334 : vector<16x16xf32>
    %336 = math.exp %335 : vector<16x16xf32>
    %cst_116 = arith.constant dense<0.000000e+00> : vector<16xf32>
    %337 = vector.multi_reduction <add>, %336, %cst_116 [1] : vector<16x16xf32> to vector<16xf32>
    %338 = vector.shape_cast %337 : vector<16xf32> to vector<16x1xf32>
    %339 = tpu.reciprocal %338 {approx = true} : vector<16x1xf32> -> vector<16x1xf32>
    %340 = vector.broadcast %339 : vector<16x1xf32> to vector<16x16xf32>
    %341 = arith.mulf %336, %340 : vector<16x16xf32>
    %342 = arith.truncf %341 : vector<16x16xf32> to vector<16x16xbf16>
    %cst_117 = arith.constant dense<0.000000e+00> : vector<16x64xf32>
    %343 = tpu.matmul %342, %327, %cst_117 {dimension_numbers = #tpu.dot_dimension_numbers<[1], [0], [0], [1], [0, 0, 1, 1], [], []>} : vector<16x16xbf16>, vector<16x64xbf16>, vector<16x64xf32> -> vector<16x64xf32>
    %344 = arith.truncf %343 : vector<16x64xf32> to vector<16x64xbf16>
    %345 = vector.extract_strided_slice %267 {offsets = [0, 0], sizes = [64, 128], strides = [1, 1]} : vector<128x128xbf16> to vector<64x128xbf16>
    %cst_118 = arith.constant dense<0.000000e+00> : vector<16x128xf32>
    %346 = tpu.matmul %344, %345, %cst_118 {dimension_numbers = #tpu.dot_dimension_numbers<[1], [0], [0], [1], [0, 0, 1, 1], [], []>} : vector<16x64xbf16>, vector<64x128xbf16>, vector<16x128xf32> -> vector<16x128xf32>
    %347 = arith.addf %321, %346 : vector<16x128xf32>
    %348 = vector.extract_strided_slice %265 {offsets = [16, 64], sizes = [16, 64], strides = [1, 1]} : vector<32x384xf32> to vector<16x64xf32>
    %349 = arith.truncf %348 : vector<16x64xf32> to vector<16x64xbf16>
    %350 = vector.extract_strided_slice %265 {offsets = [16, 192], sizes = [16, 64], strides = [1, 1]} : vector<32x384xf32> to vector<16x64xf32>
    %351 = arith.truncf %350 : vector<16x64xf32> to vector<16x64xbf16>
    %352 = vector.extract_strided_slice %265 {offsets = [16, 320], sizes = [16, 64], strides = [1, 1]} : vector<32x384xf32> to vector<16x64xf32>
    %353 = arith.truncf %352 : vector<16x64xf32> to vector<16x64xbf16>
    %cst_119 = arith.constant dense<0.000000e+00> : vector<16x16xf32>
    %354 = tpu.matmul %349, %351, %cst_119 {dimension_numbers = #tpu.dot_dimension_numbers<[1], [1], [0], [0], [0, 0, 1, 0], [], []>} : vector<16x64xbf16>, vector<16x64xbf16>, vector<16x16xf32> -> vector<16x16xf32>
    %cst_120 = arith.constant 1.250000e-01 : f32
    %355 = vector.broadcast %cst_120 : f32 to vector<16x16xf32>
    %356 = arith.mulf %354, %355 : vector<16x16xf32>
    %357 = arith.addf %356, %5 : vector<16x16xf32>
    %cst_121 = arith.constant dense<0xFF800000> : vector<16xf32>
    %358 = vector.multi_reduction <maximumf>, %357, %cst_121 [1] : vector<16x16xf32> to vector<16xf32>
    %359 = vector.shape_cast %358 : vector<16xf32> to vector<16x1xf32>
    %360 = vector.broadcast %359 : vector<16x1xf32> to vector<16x16xf32>
    %361 = arith.subf %357, %360 : vector<16x16xf32>
    %362 = math.exp %361 : vector<16x16xf32>
    %cst_122 = arith.constant dense<0.000000e+00> : vector<16xf32>
    %363 = vector.multi_reduction <add>, %362, %cst_122 [1] : vector<16x16xf32> to vector<16xf32>
    %364 = vector.shape_cast %363 : vector<16xf32> to vector<16x1xf32>
    %365 = tpu.reciprocal %364 {approx = true} : vector<16x1xf32> -> vector<16x1xf32>
    %366 = vector.broadcast %365 : vector<16x1xf32> to vector<16x16xf32>
    %367 = arith.mulf %362, %366 : vector<16x16xf32>
    %368 = arith.truncf %367 : vector<16x16xf32> to vector<16x16xbf16>
    %cst_123 = arith.constant dense<0.000000e+00> : vector<16x64xf32>
    %369 = tpu.matmul %368, %353, %cst_123 {dimension_numbers = #tpu.dot_dimension_numbers<[1], [0], [0], [1], [0, 0, 1, 1], [], []>} : vector<16x16xbf16>, vector<16x64xbf16>, vector<16x64xf32> -> vector<16x64xf32>
    %370 = arith.truncf %369 : vector<16x64xf32> to vector<16x64xbf16>
    %371 = vector.extract_strided_slice %267 {offsets = [64, 0], sizes = [64, 128], strides = [1, 1]} : vector<128x128xbf16> to vector<64x128xbf16>
    %cst_124 = arith.constant dense<0.000000e+00> : vector<16x128xf32>
    %372 = tpu.matmul %370, %371, %cst_124 {dimension_numbers = #tpu.dot_dimension_numbers<[1], [0], [0], [1], [0, 0, 1, 1], [], []>} : vector<16x64xbf16>, vector<64x128xbf16>, vector<16x128xf32> -> vector<16x128xf32>
    %373 = arith.addf %347, %372 : vector<16x128xf32>
    %374 = tpu.concatenate %320, %373 in 0 : vector<16x128xf32>, vector<16x128xf32> -> vector<32x128xf32>
    %c1_125 = arith.constant 1 : index
    %c0_126 = arith.constant 0 : index
    %c384_127 = arith.constant 384 : index
    %375 = vector.load %arg4[%c1_125, %c0_126, %c384_127] : memref<2x1x896xf32, #tpu.memory_space<vmem>>, vector<1x1x128xf32>
    %376 = vector.shape_cast %375 : vector<1x1x128xf32> to vector<1x128xf32>
    %377 = vector.broadcast %376 : vector<1x128xf32> to vector<32x128xf32>
    %378 = arith.addf %374, %377 : vector<32x128xf32>
    %379 = arith.addf %257, %378 : vector<32x128xf32>
    %c6 = arith.constant 6 : index
    %c0_128 = arith.constant 0 : index
    %380 = vector.load %arg1[%c6, %c0_128] : memref<14x128xf32, #tpu.memory_space<vmem>>, vector<1x128xf32>
    %c7 = arith.constant 7 : index
    %c0_129 = arith.constant 0 : index
    %381 = vector.load %arg1[%c7, %c0_129] : memref<14x128xf32, #tpu.memory_space<vmem>>, vector<1x128xf32>
    %cst_130 = arith.constant dense<0.000000e+00> : vector<32xf32>
    %382 = vector.multi_reduction <add>, %379, %cst_130 [1] : vector<32x128xf32> to vector<32xf32>
    %383 = vector.shape_cast %382 : vector<32xf32> to vector<32x1xf32>
    %cst_131 = arith.constant 1.280000e+02 : f32
    %384 = vector.broadcast %cst_131 : f32 to vector<32x1xf32>
    %385 = arith.divf %383, %384 : vector<32x1xf32>
    %386 = vector.broadcast %385 : vector<32x1xf32> to vector<32x128xf32>
    %387 = arith.subf %379, %386 : vector<32x128xf32>
    %388 = arith.mulf %387, %387 : vector<32x128xf32>
    %cst_132 = arith.constant dense<0.000000e+00> : vector<32xf32>
    %389 = vector.multi_reduction <add>, %388, %cst_132 [1] : vector<32x128xf32> to vector<32xf32>
    %390 = vector.shape_cast %389 : vector<32xf32> to vector<32x1xf32>
    %cst_133 = arith.constant 1.280000e+02 : f32
    %391 = vector.broadcast %cst_133 : f32 to vector<32x1xf32>
    %392 = arith.divf %390, %391 : vector<32x1xf32>
    %393 = vector.broadcast %385 : vector<32x1xf32> to vector<32x128xf32>
    %394 = arith.subf %379, %393 : vector<32x128xf32>
    %cst_134 = arith.constant 9.99999996E-13 : f32
    %395 = vector.broadcast %cst_134 : f32 to vector<32x1xf32>
    %396 = arith.addf %392, %395 : vector<32x1xf32>
    %397 = math.rsqrt %396 : vector<32x1xf32>
    %398 = vector.broadcast %397 : vector<32x1xf32> to vector<32x128xf32>
    %399 = arith.mulf %394, %398 : vector<32x128xf32>
    %400 = vector.broadcast %380 : vector<1x128xf32> to vector<32x128xf32>
    %401 = arith.mulf %399, %400 : vector<32x128xf32>
    %402 = vector.broadcast %381 : vector<1x128xf32> to vector<32x128xf32>
    %403 = arith.addf %401, %402 : vector<32x128xf32>
    %404 = arith.truncf %403 : vector<32x128xf32> to vector<32x128xbf16>
    %c1_135 = arith.constant 1 : index
    %c0_136 = arith.constant 0 : index
    %c512_137 = arith.constant 512 : index
    %405 = vector.load %arg2[%c1_135, %c0_136, %c512_137] : memref<2x128x768xbf16, #tpu.memory_space<vmem>>, vector<1x128x256xbf16>
    %406 = vector.shape_cast %405 : vector<1x128x256xbf16> to vector<128x256xbf16>
    %cst_138 = arith.constant dense<0.000000e+00> : vector<32x256xf32>
    %407 = tpu.matmul %404, %406, %cst_138 {dimension_numbers = #tpu.dot_dimension_numbers<[1], [0], [0], [1], [0, 0, 1, 1], [], []>} : vector<32x128xbf16>, vector<128x256xbf16>, vector<32x256xf32> -> vector<32x256xf32>
    %c1_139 = arith.constant 1 : index
    %c0_140 = arith.constant 0 : index
    %c512_141 = arith.constant 512 : index
    %408 = vector.load %arg4[%c1_139, %c0_140, %c512_141] : memref<2x1x896xf32, #tpu.memory_space<vmem>>, vector<1x1x256xf32>
    %409 = vector.shape_cast %408 : vector<1x1x256xf32> to vector<1x256xf32>
    %410 = vector.broadcast %409 : vector<1x256xf32> to vector<32x256xf32>
    %411 = arith.addf %407, %410 : vector<32x256xf32>
    %cst_142 = arith.constant 5.000000e-01 : f32
    %412 = vector.broadcast %cst_142 : f32 to vector<32x256xf32>
    %413 = arith.mulf %412, %411 : vector<32x256xf32>
    %cst_143 = arith.constant 0.707106769 : f32
    %414 = vector.broadcast %cst_143 : f32 to vector<32x256xf32>
    %415 = arith.mulf %411, %414 : vector<32x256xf32>
    %cst_144 = arith.constant 0.000000e+00 : f32
    %416 = vector.broadcast %cst_144 : f32 to vector<32x256xf32>
    %417 = arith.cmpf oge, %415, %416 : vector<32x256xf32>
    %cst_145 = arith.constant 1.000000e+00 : f32
    %cst_146 = arith.constant -1.000000e+00 : f32
    %418 = vector.broadcast %cst_145 : f32 to vector<32x256xf32>
    %419 = vector.broadcast %cst_146 : f32 to vector<32x256xf32>
    %420 = arith.select %417, %418, %419 : vector<32x256xi1>, vector<32x256xf32>
    %421 = math.absf %415 : vector<32x256xf32>
    %cst_147 = arith.constant 0.327591091 : f32
    %422 = vector.broadcast %cst_147 : f32 to vector<32x256xf32>
    %423 = arith.mulf %422, %421 : vector<32x256xf32>
    %cst_148 = arith.constant 1.000000e+00 : f32
    %424 = vector.broadcast %cst_148 : f32 to vector<32x256xf32>
    %425 = arith.addf %424, %423 : vector<32x256xf32>
    %426 = tpu.reciprocal %425 {approx = true} : vector<32x256xf32> -> vector<32x256xf32>
    %cst_149 = arith.constant 1.06140542 : f32
    %427 = vector.broadcast %cst_149 : f32 to vector<32x256xf32>
    %428 = arith.mulf %427, %426 : vector<32x256xf32>
    %cst_150 = arith.constant -1.45315206 : f32
    %429 = vector.broadcast %cst_150 : f32 to vector<32x256xf32>
    %430 = arith.addf %428, %429 : vector<32x256xf32>
    %431 = arith.mulf %430, %426 : vector<32x256xf32>
    %cst_151 = arith.constant 1.42141378 : f32
    %432 = vector.broadcast %cst_151 : f32 to vector<32x256xf32>
    %433 = arith.addf %431, %432 : vector<32x256xf32>
    %434 = arith.mulf %433, %426 : vector<32x256xf32>
    %cst_152 = arith.constant -0.284496725 : f32
    %435 = vector.broadcast %cst_152 : f32 to vector<32x256xf32>
    %436 = arith.addf %434, %435 : vector<32x256xf32>
    %437 = arith.mulf %436, %426 : vector<32x256xf32>
    %cst_153 = arith.constant 0.254829586 : f32
    %438 = vector.broadcast %cst_153 : f32 to vector<32x256xf32>
    %439 = arith.addf %437, %438 : vector<32x256xf32>
    %440 = arith.mulf %439, %426 : vector<32x256xf32>
    %cst_154 = arith.constant 0.000000e+00 : f32
    %441 = vector.broadcast %cst_154 : f32 to vector<32x256xf32>
    %442 = arith.subf %441, %421 : vector<32x256xf32>
    %443 = arith.mulf %442, %421 : vector<32x256xf32>
    %444 = math.exp %443 : vector<32x256xf32>
    %445 = arith.mulf %440, %444 : vector<32x256xf32>
    %cst_155 = arith.constant 1.000000e+00 : f32
    %446 = vector.broadcast %cst_155 : f32 to vector<32x256xf32>
    %447 = arith.subf %446, %445 : vector<32x256xf32>
    %448 = arith.mulf %420, %447 : vector<32x256xf32>
    %cst_156 = arith.constant 1.000000e+00 : f32
    %449 = vector.broadcast %cst_156 : f32 to vector<32x256xf32>
    %450 = arith.addf %449, %448 : vector<32x256xf32>
    %451 = arith.mulf %413, %450 : vector<32x256xf32>
    %452 = arith.truncf %451 : vector<32x256xf32> to vector<32x256xbf16>
    %c1_157 = arith.constant 1 : index
    %c0_158 = arith.constant 0 : index
    %c0_159 = arith.constant 0 : index
    %453 = vector.load %arg3[%c1_157, %c0_158, %c0_159] : memref<2x256x128xbf16, #tpu.memory_space<vmem>>, vector<1x256x128xbf16>
    %454 = vector.shape_cast %453 : vector<1x256x128xbf16> to vector<256x128xbf16>
    %cst_160 = arith.constant dense<0.000000e+00> : vector<32x128xf32>
    %455 = tpu.matmul %452, %454, %cst_160 {dimension_numbers = #tpu.dot_dimension_numbers<[1], [0], [0], [1], [0, 0, 1, 1], [], []>} : vector<32x256xbf16>, vector<256x128xbf16>, vector<32x128xf32> -> vector<32x128xf32>
    %c1_161 = arith.constant 1 : index
    %c0_162 = arith.constant 0 : index
    %c768_163 = arith.constant 768 : index
    %456 = vector.load %arg4[%c1_161, %c0_162, %c768_163] : memref<2x1x896xf32, #tpu.memory_space<vmem>>, vector<1x1x128xf32>
    %457 = vector.shape_cast %456 : vector<1x1x128xf32> to vector<1x128xf32>
    %458 = vector.broadcast %457 : vector<1x128xf32> to vector<32x128xf32>
    %459 = arith.addf %455, %458 : vector<32x128xf32>
    %460 = arith.addf %403, %459 : vector<32x128xf32>
    %c8 = arith.constant 8 : index
    %c0_164 = arith.constant 0 : index
    %461 = vector.load %arg1[%c8, %c0_164] : memref<14x128xf32, #tpu.memory_space<vmem>>, vector<1x128xf32>
    %c9 = arith.constant 9 : index
    %c0_165 = arith.constant 0 : index
    %462 = vector.load %arg1[%c9, %c0_165] : memref<14x128xf32, #tpu.memory_space<vmem>>, vector<1x128xf32>
    %cst_166 = arith.constant dense<0.000000e+00> : vector<32xf32>
    %463 = vector.multi_reduction <add>, %460, %cst_166 [1] : vector<32x128xf32> to vector<32xf32>
    %464 = vector.shape_cast %463 : vector<32xf32> to vector<32x1xf32>
    %cst_167 = arith.constant 1.280000e+02 : f32
    %465 = vector.broadcast %cst_167 : f32 to vector<32x1xf32>
    %466 = arith.divf %464, %465 : vector<32x1xf32>
    %467 = vector.broadcast %466 : vector<32x1xf32> to vector<32x128xf32>
    %468 = arith.subf %460, %467 : vector<32x128xf32>
    %469 = arith.mulf %468, %468 : vector<32x128xf32>
    %cst_168 = arith.constant dense<0.000000e+00> : vector<32xf32>
    %470 = vector.multi_reduction <add>, %469, %cst_168 [1] : vector<32x128xf32> to vector<32xf32>
    %471 = vector.shape_cast %470 : vector<32xf32> to vector<32x1xf32>
    %cst_169 = arith.constant 1.280000e+02 : f32
    %472 = vector.broadcast %cst_169 : f32 to vector<32x1xf32>
    %473 = arith.divf %471, %472 : vector<32x1xf32>
    %474 = vector.broadcast %466 : vector<32x1xf32> to vector<32x128xf32>
    %475 = arith.subf %460, %474 : vector<32x128xf32>
    %cst_170 = arith.constant 9.99999996E-13 : f32
    %476 = vector.broadcast %cst_170 : f32 to vector<32x1xf32>
    %477 = arith.addf %473, %476 : vector<32x1xf32>
    %478 = math.rsqrt %477 : vector<32x1xf32>
    %479 = vector.broadcast %478 : vector<32x1xf32> to vector<32x128xf32>
    %480 = arith.mulf %475, %479 : vector<32x128xf32>
    %481 = vector.broadcast %461 : vector<1x128xf32> to vector<32x128xf32>
    %482 = arith.mulf %480, %481 : vector<32x128xf32>
    %483 = vector.broadcast %462 : vector<1x128xf32> to vector<32x128xf32>
    %484 = arith.addf %482, %483 : vector<32x128xf32>
    %485 = arith.truncf %484 : vector<32x128xf32> to vector<32x128xbf16>
    %c0_171 = arith.constant 0 : index
    %c0_172 = arith.constant 0 : index
    %486 = vector.load %arg5[%c0_171, %c0_172] : memref<128x256xbf16, #tpu.memory_space<vmem>>, vector<128x128xbf16>
    %cst_173 = arith.constant dense<0.000000e+00> : vector<32x128xf32>
    %487 = tpu.matmul %485, %486, %cst_173 {dimension_numbers = #tpu.dot_dimension_numbers<[1], [0], [0], [1], [0, 0, 1, 1], [], []>} : vector<32x128xbf16>, vector<128x128xbf16>, vector<32x128xf32> -> vector<32x128xf32>
    %c10 = arith.constant 10 : index
    %c0_174 = arith.constant 0 : index
    %488 = vector.load %arg1[%c10, %c0_174] : memref<14x128xf32, #tpu.memory_space<vmem>>, vector<1x128xf32>
    %489 = vector.broadcast %488 : vector<1x128xf32> to vector<32x128xf32>
    %490 = arith.addf %487, %489 : vector<32x128xf32>
    %491 = math.tanh %490 : vector<32x128xf32>
    %492 = arith.truncf %491 : vector<32x128xf32> to vector<32x128xbf16>
    %c0_175 = arith.constant 0 : index
    %c128 = arith.constant 128 : index
    %493 = vector.load %arg5[%c0_175, %c128] : memref<128x256xbf16, #tpu.memory_space<vmem>>, vector<128x128xbf16>
    %cst_176 = arith.constant dense<0.000000e+00> : vector<32x128xf32>
    %494 = tpu.matmul %492, %493, %cst_176 {dimension_numbers = #tpu.dot_dimension_numbers<[1], [0], [0], [1], [0, 0, 1, 1], [], []>} : vector<32x128xbf16>, vector<128x128xbf16>, vector<32x128xf32> -> vector<32x128xf32>
    %c11 = arith.constant 11 : index
    %c0_177 = arith.constant 0 : index
    %495 = vector.load %arg1[%c11, %c0_177] : memref<14x128xf32, #tpu.memory_space<vmem>>, vector<1x128xf32>
    %496 = vector.broadcast %495 : vector<1x128xf32> to vector<32x128xf32>
    %497 = arith.addf %494, %496 : vector<32x128xf32>
    %c0_178 = arith.constant 0 : index
    %c0_179 = arith.constant 0 : index
    %498 = vector.load %arg6[%c0_178, %c0_179] : memref<32x128xf32, #tpu.memory_space<vmem>>, vector<32x128xf32>
    tpu.vector_store %arg6[%c0_178, %c0_179], %497 {strides = array<i32>} : memref<32x128xf32, #tpu.memory_space<vmem>>, vector<32x128xf32>,
    return
  }
}

</mosaic_0001>

<llo_original>
// kernel: bert_cnn_forward.1
$region0: #{bert_cnn_forward.1}
  #allocation0 [shape = 'u32[]', space=smem, size = 0x4, offset = 0x4, fixed_abs, tag = 'smem constant byte address 0x4 - core index']
  #allocation1 [shape = 'u32[72,128]{1,0:T(1,128)}', space=vmem, size = 0x9000, scoped, tag = 'internal scratch']
  %s0 = inlined_call_operand.vmem [shape: f32[32,128], index: 0, kind: input, shape index: {}]
  %s1 = inlined_call_operand.vmem [shape: f32[14,128], index: 1, kind: input, shape index: {}]
  %s2 = inlined_call_operand.hbm [shape: bf16[2,128,768], index: 2, kind: input, shape index: {}]
  %s3 = inlined_call_operand.vmem [shape: bf16[2,256,128], index: 3, kind: input, shape index: {}]
  %s4 = inlined_call_operand.vmem [shape: f32[2,1,896], index: 4, kind: input, shape index: {}]
  %s5 = inlined_call_operand.vmem [shape: bf16[128,256], index: 5, kind: input, shape index: {}]
  %s6 = inlined_call_operand.vmem [shape: f32[32,128], index: 6, kind: output, shape index: {}]
  %s7 = sld [smem:[#allocation0]]
  $region38: #{bert_cnn_forward.1} parent=0
    _
  %s9 = ssub.s32 1, %s7
  %s10 = scalar_select 0, %s9, %s7
  $region1: #{bert_cnn_forward.1} parent=0
    #allocation2 [shape = 'u8[393216]{0}', space=vmem, size = 0x60000, scoped, tag = 'input window, operand 2, single buffered']
    #allocation3 [shape = 's32[1]{0}', space=sflag, size = 0x4, scoped, tag = 'scoped memory for bert_cnn_forward.1']
    %11 = vsyncpa [#allocation3], 0
    // Predicated region
    $region2: #{bert_cnn_forward.1} parent=1 // pred_check
      _
    $region3: #{bert_cnn_forward.1} parent=1 // pred_check_branch
      %13 = sbr.rel (0) target = $region5
    $region4: #{bert_cnn_forward.1} parent=1 // pred_region
      _
    $region5: #{bert_cnn_forward.1} parent=1 // pred_fallthru
      _
    // Predicated region
    $region6: #{bert_cnn_forward.1} parent=1 // pred_check
      _
    $region7: #{bert_cnn_forward.1} parent=1 // pred_check_branch
      %15 = sbr.rel (0) target = $region9
    $region8: #{bert_cnn_forward.1} parent=1 // pred_region
      _
    $region9: #{bert_cnn_forward.1} parent=1 // pred_fallthru
      _
    // Predicated region
    $region10: #{bert_cnn_forward.1} parent=1 // pred_check
      _
    $region11: #{bert_cnn_forward.1} parent=1 // pred_check_branch
      %17 = sbr.rel (0) target = $region13
    $region12: #{bert_cnn_forward.1} parent=1 // pred_region
      %19 = vsyncadd [#allocation3], 0
      %s20 = sshll.u32 %s2, 4
      %s21 = int_to_ptr.hbm [resolvable:$true] %s20
      %s22 = sshll.u32 [#allocation2], 4
      %s23 = int_to_ptr.vmem [resolvable:$true] %s22
      %28 = dma.hbm_to_vmem [thread:$0]  %s21, 12288, %s23, [#allocation3], 384, 384, 24
    $region13: #{bert_cnn_forward.1} parent=1 // pred_fallthru
      _
    // Predicated region
    $region14: #{bert_cnn_forward.1} parent=1 // pred_check
      _
    $region15: #{bert_cnn_forward.1} parent=1 // pred_check_branch
      %30 = sbr.rel (0) target = $region17
    $region16: #{bert_cnn_forward.1} parent=1 // pred_region
      _
    $region17: #{bert_cnn_forward.1} parent=1 // pred_fallthru
      _
    // Predicated region
    $region18: #{bert_cnn_forward.1} parent=1 // pred_check
      _
    $region19: #{bert_cnn_forward.1} parent=1 // pred_check_branch
      %32 = sbr.rel (0) target = $region21
    $region20: #{bert_cnn_forward.1} parent=1 // pred_region
      _
    $region21: #{bert_cnn_forward.1} parent=1 // pred_fallthru
      _
    // Predicated region
    $region22: #{bert_cnn_forward.1} parent=1 // pred_check
      _
    $region23: #{bert_cnn_forward.1} parent=1 // pred_check_branch
      %34 = sbr.rel (0) target = $region25
    $region24: #{bert_cnn_forward.1} parent=1 // pred_region
      _
    $region25: #{bert_cnn_forward.1} parent=1 // pred_fallthru
      _
    // Predicated region
    $region26: #{bert_cnn_forward.1} parent=1 // pred_check
      _
    $region27: #{bert_cnn_forward.1} parent=1 // pred_check_branch
      %36 = sbr.rel (0) target = $region29
    $region28: #{bert_cnn_forward.1} parent=1 // pred_region
      %38 = dma.done [#allocation3], 12288
    $region29: #{bert_cnn_forward.1} parent=1 // pred_fallthru
      _
    %v40 = vld [vmem:[%s1 + $0xc] sm:$0x1]
    %v41 = vperm.slane %v40, 0
    %v42 = vld [vmem:[%s1 + $0xd] sm:$0x1]
    %v43 = vperm.slane %v42, 0
    %v44 = vld [vmem:[%s0] sm:$0xff]
    %v45 = vld [vmem:[%s0 + $0x8] sm:$0xff]
    %v46 = vld [vmem:[%s0 + $0x10] sm:$0xff]
    %v47 = vld [vmem:[%s0 + $0x18] sm:$0xff]
    %v48 = vld [vmem:[%s1] sm:$0x1]
    %v49 = vld [vmem:[%s1 + $0x1] sm:$0x1]
    %50 = vadd.xlane.f32.xlu0 %v44
    %v51 = vpop.xlane.xlu0 %50
    %52 = vadd.xlane.f32.xlu0 %v45
    %v53 = vpop.xlane.xlu0 %52
    %54 = vadd.xlane.f32.xlu0 %v46
    %v55 = vpop.xlane.xlu0 %54
    %56 = vadd.xlane.f32.xlu0 %v47
    %v57 = vpop.xlane.xlu0 %56
    %v58 = vrcp.pop 128.0
    %v59 = vmul.f32 128.0, %v58
    %v60 = vsub.f32 1.0, %v59
    %v61 = vmul.f32 %v58, %v60
    %v62 = vadd.f32 %v58, %v61
    %vm63 = vweird.f32 %v58
    %v64 = vsel %vm63, %v58, %v62
    %v65 = vmul.f32 %v51, %v64
    %v66 = vmul.f32 %v53, %v64
    %v67 = vmul.f32 %v55, %v64
    %v68 = vmul.f32 %v57, %v64
    %v69 = vsub.f32 %v44, %v65
    %v70 = vsub.f32 %v45, %v66
    %v71 = vsub.f32 %v46, %v67
    %v72 = vsub.f32 %v47, %v68
    %v73 = vmul.f32 %v69, %v69
    %v74 = vmul.f32 %v70, %v70
    %v75 = vmul.f32 %v71, %v71
    %v76 = vmul.f32 %v72, %v72
    %77 = vadd.xlane.f32.xlu0 %v73
    %v78 = vpop.xlane.xlu0 %77
    %79 = vadd.xlane.f32.xlu0 %v74
    %v80 = vpop.xlane.xlu0 %79
    %81 = vadd.xlane.f32.xlu0 %v75
    %v82 = vpop.xlane.xlu0 %81
    %83 = vadd.xlane.f32.xlu0 %v76
    %v84 = vpop.xlane.xlu0 %83
    %v85 = vmul.f32 %v78, %v64
    %v86 = vmul.f32 %v80, %v64
    %v87 = vmul.f32 %v82, %v64
    %v88 = vmul.f32 %v84, %v64
    %v89 = vadd.f32 %v85, 1e-12
    %v90 = vadd.f32 %v86, 1e-12
    %v91 = vadd.f32 %v87, 1e-12
    %v92 = vadd.f32 %v88, 1e-12
    %v93 = vrsqrt.pop %v89
    %v94 = vmul.f32 %v93, %v89
    %v95 = vmul.f32 %v94, %v93
    %v96 = vmul.f32 0.5, %v95
    %v97 = vsub.f32 1.5, %v96
    %v98 = vmul.f32 %v93, %v97
    %vm99 = vweird.f32 %v89
    %vm100 = vweird.f32 %v93
    %vm101 = vmor %vm99, %vm100
    %v102 = vsel %vm101, %v93, %v98
    %v103 = vrsqrt.pop %v90
    %v104 = vmul.f32 %v103, %v90
    %v105 = vmul.f32 %v104, %v103
    %v106 = vmul.f32 0.5, %v105
    %v107 = vsub.f32 1.5, %v106
    %v108 = vmul.f32 %v103, %v107
    %vm109 = vweird.f32 %v90
    %vm110 = vweird.f32 %v103
    %vm111 = vmor %vm109, %vm110
    %v112 = vsel %vm111, %v103, %v108
    %v113 = vrsqrt.pop %v91
    %v114 = vmul.f32 %v113, %v91
    %v115 = vmul.f32 %v114, %v113
    %v116 = vmul.f32 0.5, %v115
    %v117 = vsub.f32 1.5, %v116
    %v118 = vmul.f32 %v113, %v117
    %vm119 = vweird.f32 %v91
    %vm120 = vweird.f32 %v113
    %vm121 = vmor %vm119, %vm120
    %v122 = vsel %vm121, %v113, %v118
    %v123 = vrsqrt.pop %v92
    %v124 = vmul.f32 %v123, %v92
    %v125 = vmul.f32 %v124, %v123
    %v126 = vmul.f32 0.5, %v125
    %v127 = vsub.f32 1.5, %v126
    %v128 = vmul.f32 %v123, %v127
    %vm129 = vweird.f32 %v92
    %vm130 = vweird.f32 %v123
    %vm131 = vmor %vm129, %vm130
    %v132 = vsel %vm131, %v123, %v128
    %v133 = vmul.f32 %v69, %v102
    %v134 = vmul.f32 %v70, %v112
    %v135 = vmul.f32 %v71, %v122
    %v136 = vmul.f32 %v72, %v132
    %v137 = vperm.slane %v48, 0
    %v138 = vmul.f32 %v133, %v137
    %v139 = vmul.f32 %v134, %v137
    %v140 = vmul.f32 %v135, %v137
    %v141 = vmul.f32 %v136, %v137
    %v142 = vperm.slane %v49, 0
    %v143 = vadd.f32 %v138, %v142
    %v144 = vadd.f32 %v139, %v142
    %v145 = vadd.f32 %v140, %v142
    %v146 = vadd.f32 %v141, %v142
    %v147 = vpack.c.bf16 %v144, %v143
    %v148 = vpack.c.bf16 %v146, %v145
    %v149 = vld [vmem:[#allocation2] sm:$0xff]
    %v150 = vld [vmem:[#allocation2 + $0x8] sm:$0xf]
    %v151 = vld [vmem:[#allocation2 + $0x18] sm:$0xff]
    %v152 = vld [vmem:[#allocation2 + $0x20] sm:$0xf]
    %v153 = vld [vmem:[#allocation2 + $0x30] sm:$0xff]
    %v154 = vld [vmem:[#allocation2 + $0x38] sm:$0xf]
    %v155 = vld [vmem:[#allocation2 + $0x48] sm:$0xff]
    %v156 = vld [vmem:[#allocation2 + $0x50] sm:$0xf]
    %v157 = vld [vmem:[#allocation2 + $0x60] sm:$0xff]
    %v158 = vld [vmem:[#allocation2 + $0x68] sm:$0xf]
    %v159 = vld [vmem:[#allocation2 + $0x78] sm:$0xff]
    %v160 = vld [vmem:[#allocation2 + $0x80] sm:$0xf]
    %v161 = vld [vmem:[#allocation2 + $0x90] sm:$0xff]
    %v162 = vld [vmem:[#allocation2 + $0x98] sm:$0xf]
    %v163 = vld [vmem:[#allocation2 + $0xa8] sm:$0xff]
    %v164 = vld [vmem:[#allocation2 + $0xb0] sm:$0xf]
    %v165 = vld [vmem:[#allocation2 + $0xc0] sm:$0xff]
    %v166 = vld [vmem:[#allocation2 + $0xc8] sm:$0xf]
    %v167 = vld [vmem:[#allocation2 + $0xd8] sm:$0xff]
    %v168 = vld [vmem:[#allocation2 + $0xe0] sm:$0xf]
    %v169 = vld [vmem:[#allocation2 + $0xf0] sm:$0xff]
    %v170 = vld [vmem:[#allocation2 + $0xf8] sm:$0xf]
    %v171 = vld [vmem:[#allocation2 + $0x108] sm:$0xff]
    %v172 = vld [vmem:[#allocation2 + $0x110] sm:$0xf]
    %v173 = vld [vmem:[#allocation2 + $0x120] sm:$0xff]
    %v174 = vld [vmem:[#allocation2 + $0x128] sm:$0xf]
    %v175 = vld [vmem:[#allocation2 + $0x138] sm:$0xff]
    %v176 = vld [vmem:[#allocation2 + $0x140] sm:$0xf]
    %v177 = vld [vmem:[#allocation2 + $0x150] sm:$0xff]
    %v178 = vld [vmem:[#allocation2 + $0x158] sm:$0xf]
    %v179 = vld [vmem:[#allocation2 + $0x168] sm:$0xff]
    %v180 = vld [vmem:[#allocation2 + $0x170] sm:$0xf]
    %v181 = vld [vmem:[%s4] sm:$0x7]
    %v183 = vperm.slane %v181, 0
    %v184 = vperm.slane %v181, 1
    %v185 = vperm.slane %v181, 2
    %v221 = vunpack.c.l.b16 %v149
    %v222 = vunpack.c.h.b16 %v149
    %v223 = vunpack.c.l.b16 %v150
    %v224 = vunpack.c.l.b16 %v151
    %v225 = vunpack.c.h.b16 %v151
    %v226 = vunpack.c.l.b16 %v152
    %v227 = vunpack.c.l.b16 %v153
    %v228 = vunpack.c.h.b16 %v153
    %v229 = vunpack.c.l.b16 %v154
    %v230 = vunpack.c.l.b16 %v155
    %v231 = vunpack.c.h.b16 %v155
    %v232 = vunpack.c.l.b16 %v156
    %v233 = vunpack.c.l.b16 %v157
    %v234 = vunpack.c.h.b16 %v157
    %v235 = vunpack.c.l.b16 %v158
    %v236 = vunpack.c.l.b16 %v159
    %v237 = vunpack.c.h.b16 %v159
    %v238 = vunpack.c.l.b16 %v160
    %v239 = vunpack.c.l.b16 %v161
    %v240 = vunpack.c.h.b16 %v161
    %v241 = vunpack.c.l.b16 %v162
    %v242 = vunpack.c.l.b16 %v163
    %v243 = vunpack.c.h.b16 %v163
    %v244 = vunpack.c.l.b16 %v164
    %v245 = vunpack.c.l.b16 %v165
    %v246 = vunpack.c.h.b16 %v165
    %v247 = vunpack.c.l.b16 %v166
    %v248 = vunpack.c.l.b16 %v167
    %v249 = vunpack.c.h.b16 %v167
    %v250 = vunpack.c.l.b16 %v168
    %v251 = vunpack.c.l.b16 %v169
    %v252 = vunpack.c.h.b16 %v169
    %v253 = vunpack.c.l.b16 %v170
    %v254 = vunpack.c.l.b16 %v171
    %v255 = vunpack.c.h.b16 %v171
    %v256 = vunpack.c.l.b16 %v172
    %v257 = vunpack.c.l.b16 %v173
    %v258 = vunpack.c.h.b16 %v173
    %v259 = vunpack.c.l.b16 %v174
    %v260 = vunpack.c.l.b16 %v175
    %v261 = vunpack.c.h.b16 %v175
    %v262 = vunpack.c.l.b16 %v176
    %v263 = vunpack.c.l.b16 %v177
    %v264 = vunpack.c.h.b16 %v177
    %v265 = vunpack.c.l.b16 %v178
    %v266 = vunpack.c.l.b16 %v179
    %v267 = vunpack.c.h.b16 %v179
    %v268 = vunpack.c.l.b16 %v180
    %v269 = vpack.c.b16 %v224, %v221
    %v270 = vpack.c.b16 %v225, %v222
    %v271 = vpack.c.b16 %v226, %v223
    %v272 = vpack.c.b16 %v230, %v227
    %v273 = vpack.c.b16 %v231, %v228
    %v274 = vpack.c.b16 %v232, %v229
    %v275 = vpack.c.b16 %v236, %v233
    %v276 = vpack.c.b16 %v237, %v234
    %v277 = vpack.c.b16 %v238, %v235
    %v278 = vpack.c.b16 %v242, %v239
    %v279 = vpack.c.b16 %v243, %v240
    %v280 = vpack.c.b16 %v244, %v241
    %v281 = vpack.c.b16 %v248, %v245
    %v282 = vpack.c.b16 %v249, %v246
    %v283 = vpack.c.b16 %v250, %v247
    %v284 = vpack.c.b16 %v254, %v251
    %v285 = vpack.c.b16 %v255, %v252
    %v286 = vpack.c.b16 %v256, %v253
    %v287 = vpack.c.b16 %v260, %v257
    %v288 = vpack.c.b16 %v261, %v258
    %v289 = vpack.c.b16 %v262, %v259
    %v290 = vpack.c.b16 %v266, %v263
    %v291 = vpack.c.b16 %v267, %v264
    %v292 = vpack.c.b16 %v268, %v265
    %317 = vmatpush.bf16.msra.mxu0 %v290
    %318 = vmatpush.bf16.msra.mxu0 %v287
    %319 = vmatpush.bf16.msra.mxu0 %v284
    %320 = vmatpush.bf16.msra.mxu0 %v281
    %321 = vmatpush.bf16.msra.mxu0 %v278
    %322 = vmatpush.bf16.msra.mxu0 %v275
    %323 = vmatpush.bf16.msra.mxu0 %v272
    %324 = vmatpush.bf16.msra.mxu0 %v269
    %325 = vmatmul.bf16.gmra.mxu0 %v147
    %v326 = vpop.f32.mrf.mxu0
    %v327 = vadd.f32 %v183, %v326
    %v328 = vpop.f32.mrf.mxu0
    %v329 = vadd.f32 %v183, %v328
    %330 = vmatmul.bf16.gmra.mxu0 %v148
    %v331 = vpop.f32.mrf.mxu0
    %v332 = vadd.f32 %v183, %v331
    %v333 = vpop.f32.mrf.mxu0
    %v334 = vadd.f32 %v183, %v333
    %335 = vdwg.mxu0
    %336 = vmatpush.bf16.msra.mxu0 %v291
    %337 = vmatpush.bf16.msra.mxu0 %v288
    %338 = vmatpush.bf16.msra.mxu0 %v285
    %339 = vmatpush.bf16.msra.mxu0 %v282
    %340 = vmatpush.bf16.msra.mxu0 %v279
    %341 = vmatpush.bf16.msra.mxu0 %v276
    %342 = vmatpush.bf16.msra.mxu0 %v273
    %343 = vmatpush.bf16.msra.mxu0 %v270
    %344 = vmatmul.bf16.gmra.mxu0 %v147
    %v345 = vpop.f32.mrf.mxu0
    %v346 = vadd.f32 %v184, %v345
    %v347 = vpop.f32.mrf.mxu0
    %v348 = vadd.f32 %v184, %v347
    %349 = vmatmul.bf16.gmra.mxu0 %v148
    %v350 = vpop.f32.mrf.mxu0
    %v351 = vadd.f32 %v184, %v350
    %v352 = vpop.f32.mrf.mxu0
    %v353 = vadd.f32 %v184, %v352
    %354 = vdwg.mxu0
    %355 = vmatpush.bf16.msra.mxu0 %v292
    %356 = vmatpush.bf16.msra.mxu0 %v289
    %357 = vmatpush.bf16.msra.mxu0 %v286
    %358 = vmatpush.bf16.msra.mxu0 %v283
    %359 = vmatpush.bf16.msra.mxu0 %v280
    %360 = vmatpush.bf16.msra.mxu0 %v277
    %361 = vmatpush.bf16.msra.mxu0 %v274
    %362 = vmatpush.bf16.msra.mxu0 %v271
    %363 = vmatmul.bf16.gmra.mxu0 %v147
    %v364 = vpop.f32.mrf.mxu0
    %v365 = vadd.f32 %v185, %v364
    %v366 = vpop.f32.mrf.mxu0
    %v367 = vadd.f32 %v185, %v366
    %368 = vmatmul.bf16.gmra.mxu0 %v148
    %v369 = vpop.f32.mrf.mxu0
    %v370 = vadd.f32 %v185, %v369
    %v371 = vpop.f32.mrf.mxu0
    %v372 = vadd.f32 %v185, %v371
    %373 = vdwg.mxu0
    %v374 = vld [vmem:[#allocation2 + $0xc] sm:$0xf]
    %v375 = vld [vmem:[#allocation2 + $0x24] sm:$0xf]
    %v376 = vld [vmem:[#allocation2 + $0x3c] sm:$0xf]
    %v377 = vld [vmem:[#allocation2 + $0x54] sm:$0xf]
    %v378 = vld [vmem:[#allocation2 + $0x6c] sm:$0xf]
    %v379 = vld [vmem:[#allocation2 + $0x84] sm:$0xf]
    %v380 = vld [vmem:[#allocation2 + $0x9c] sm:$0xf]
    %v381 = vld [vmem:[#allocation2 + $0xb4] sm:$0xf]
    %v382 = vld [vmem:[#allocation2 + $0xcc] sm:$0xf]
    %v383 = vld [vmem:[#allocation2 + $0xe4] sm:$0xf]
    %v384 = vld [vmem:[#allocation2 + $0xfc] sm:$0xf]
    %v385 = vld [vmem:[#allocation2 + $0x114] sm:$0xf]
    %v386 = vld [vmem:[#allocation2 + $0x12c] sm:$0xf]
    %v387 = vld [vmem:[#allocation2 + $0x144] sm:$0xf]
    %v388 = vld [vmem:[#allocation2 + $0x15c] sm:$0xf]
    %v389 = vld [vmem:[#allocation2 + $0x174] sm:$0xf]
    %v390 = vpack.c.bf16 %v329, %v327
    %v391 = vpack.c.bf16 %v348, %v346
    %v392 = vpack.c.bf16 %v367, %v365
    %vm393 = vcmask 523264
    %v395 = vsel %vm393, %v390, 0
    %v398 = vsel %vm393, %v391, 0
    %400 = vmatpush.bf16.xpose.msra.mxu0 0
    %401 = vmatpush.bf16.xpose.msra.mxu0 0
    %402 = vmatpush.bf16.xpose.msra.mxu0 0
    %403 = vmatpush.bf16.xpose.msra.mxu0 0
    %404 = vmatpush.bf16.xpose.msra.mxu0 0
    %405 = vmatpush.bf16.xpose.msra.mxu0 0
    %406 = vmatpush.bf16.xpose.msra.mxu0 0
    %407 = vmatpush.bf16.xpose.msra.mxu0 %v398
    %408 = vmatmul.bf16.gmra.mxu0 %v395
    %v409 = vpop.f32.mrf.mxu0
    %v410 = vadd.f32 0.0, %v409
    %v411 = vpop.f32.mrf.mxu0
    %v412 = vadd.f32 0.0, %v411
    %413 = vdwg.mxu0
    %v414 = vmul.f32 %v410, 0.125
    %v415 = vmul.f32 %v412, 0.125
    %v416 = vadd.f32 %v414, %v41
    %v417 = vadd.f32 %v415, %v41
    %vm418 = vcmask 130048
    %v419 = vsel %vm418, %v416, -inf
    %420 = vmax.xlane.f32.xlu0 %v419
    %v421 = vpop.xlane.xlu0 %420
    %v422 = vsel %vm418, %v417, -inf
    %423 = vmax.xlane.f32.xlu0 %v422
    %v424 = vpop.xlane.xlu0 %423
    %v425 = vsub.f32 %v416, %v421
    %v426 = vsub.f32 %v417, %v424
    %v427 = vmul.f32 %v425, 1.442695
    %v428 = vpow.pop %v427
    %v429 = vmul.f32 %v426, 1.442695
    %v430 = vpow.pop %v429
    %v431 = vsel %vm418, %v428, 0.0
    %432 = vadd.xlane.f32.xlu0 %v431
    %v433 = vpop.xlane.xlu0 %432
    %v434 = vsel %vm418, %v430, 0.0
    %435 = vadd.xlane.f32.xlu0 %v434
    %v436 = vpop.xlane.xlu0 %435
    %v437 = vrcp.pop %v433
    %v438 = vrcp.pop %v436
    %v439 = vmul.f32 %v428, %v437
    %v440 = vmul.f32 %v430, %v438
    %v441 = vpack.c.bf16 %v440, %v439
    %v443 = vsel %vm418, %v441, 0
    %445 = vmatpush.bf16.msra.mxu0 0
    %446 = vmatpush.bf16.msra.mxu0 0
    %447 = vmatpush.bf16.msra.mxu0 0
    %448 = vmatpush.bf16.msra.mxu0 0
    %449 = vmatpush.bf16.msra.mxu0 0
    %450 = vmatpush.bf16.msra.mxu0 0
    %451 = vmatpush.bf16.msra.mxu0 0
    %452 = vmatpush.bf16.msra.mxu0 %v392
    %453 = vmatmul.bf16.gmra.mxu0 %v443
    %v454 = vpop.f32.mrf.mxu0
    %v455 = vadd.f32 0.0, %v454
    %v456 = vpop.f32.mrf.mxu0
    %v457 = vadd.f32 0.0, %v456
    %458 = vdwg.mxu0
    %v459 = vpack.c.bf16 %v457, %v455
    %461 = vrot.lane.b32.xlu0 %v390, 64
    %v462 = vpop.permute.xlu0 %461
    %464 = vrot.lane.b32.xlu0 %v391, 64
    %v465 = vpop.permute.xlu0 %464
    %v467 = vsel %vm393, %v462, 0
    %v470 = vsel %vm393, %v465, 0
    %472 = vmatpush.bf16.xpose.msra.mxu0 0
    %473 = vmatpush.bf16.xpose.msra.mxu0 0
    %474 = vmatpush.bf16.xpose.msra.mxu0 0
    %475 = vmatpush.bf16.xpose.msra.mxu0 0
    %476 = vmatpush.bf16.xpose.msra.mxu0 0
    %477 = vmatpush.bf16.xpose.msra.mxu0 0
    %478 = vmatpush.bf16.xpose.msra.mxu0 0
    %479 = vmatpush.bf16.xpose.msra.mxu0 %v470
    %480 = vmatmul.bf16.gmra.mxu0 %v467
    %v481 = vpop.f32.mrf.mxu0
    %v482 = vadd.f32 0.0, %v481
    %v483 = vpop.f32.mrf.mxu0
    %v484 = vadd.f32 0.0, %v483
    %485 = vdwg.mxu0
    %v486 = vmul.f32 %v482, 0.125
    %v487 = vmul.f32 %v484, 0.125
    %v488 = vadd.f32 %v486, %v41
    %v489 = vadd.f32 %v487, %v41
    %v490 = vsel %vm418, %v488, -inf
    %491 = vmax.xlane.f32.xlu0 %v490
    %v492 = vpop.xlane.xlu0 %491
    %v493 = vsel %vm418, %v489, -inf
    %494 = vmax.xlane.f32.xlu0 %v493
    %v495 = vpop.xlane.xlu0 %494
    %v496 = vsub.f32 %v488, %v492
    %v497 = vsub.f32 %v489, %v495
    %v498 = vmul.f32 %v496, 1.442695
    %v499 = vpow.pop %v498
    %v500 = vmul.f32 %v497, 1.442695
    %v501 = vpow.pop %v500
    %v502 = vsel %vm418, %v499, 0.0
    %503 = vadd.xlane.f32.xlu0 %v502
    %v504 = vpop.xlane.xlu0 %503
    %v505 = vsel %vm418, %v501, 0.0
    %506 = vadd.xlane.f32.xlu0 %v505
    %v507 = vpop.xlane.xlu0 %506
    %v508 = vrcp.pop %v504
    %v509 = vrcp.pop %v507
    %v510 = vmul.f32 %v499, %v508
    %v511 = vmul.f32 %v501, %v509
    %v512 = vpack.c.bf16 %v511, %v510
    %514 = vrot.lane.b32.xlu0 %v392, 64
    %v515 = vpop.permute.xlu0 %514
    %v518 = vsel %vm418, %v512, 0
    %520 = vmatpush.bf16.msra.mxu0 0
    %521 = vmatpush.bf16.msra.mxu0 0
    %522 = vmatpush.bf16.msra.mxu0 0
    %523 = vmatpush.bf16.msra.mxu0 0
    %524 = vmatpush.bf16.msra.mxu0 0
    %525 = vmatpush.bf16.msra.mxu0 0
    %526 = vmatpush.bf16.msra.mxu0 0
    %527 = vmatpush.bf16.msra.mxu0 %v515
    %528 = vmatmul.bf16.gmra.mxu0 %v518
    %v529 = vpop.f32.mrf.mxu0
    %v530 = vadd.f32 0.0, %v529
    %v531 = vpop.f32.mrf.mxu0
    %v532 = vadd.f32 0.0, %v531
    %533 = vdwg.mxu0
    %v534 = vpack.c.bf16 %v532, %v530
    %v543 = vunpack.c.l.b16 %v382
    %v544 = vunpack.c.l.b16 %v383
    %v545 = vunpack.c.l.b16 %v384
    %v546 = vunpack.c.l.b16 %v385
    %v547 = vunpack.c.l.b16 %v386
    %v548 = vunpack.c.l.b16 %v387
    %v549 = vunpack.c.l.b16 %v388
    %v550 = vunpack.c.l.b16 %v389
    %v551 = vpack.c.b16 %v544, %v543
    %v552 = vpack.c.b16 %v546, %v545
    %v553 = vpack.c.b16 %v548, %v547
    %v554 = vpack.c.b16 %v550, %v549
    %v560 = vsel %vm393, %v534, 0
    %562 = vmatpush.bf16.msra.mxu0 0
    %563 = vmatpush.bf16.msra.mxu0 0
    %564 = vmatpush.bf16.msra.mxu0 0
    %565 = vmatpush.bf16.msra.mxu0 0
    %566 = vmatpush.bf16.msra.mxu0 %v554
    %567 = vmatpush.bf16.msra.mxu0 %v553
    %568 = vmatpush.bf16.msra.mxu0 %v552
    %569 = vmatpush.bf16.msra.mxu0 %v551
    %570 = vmatmul.bf16.gmra.mxu0 %v560
    %v571 = vpop.f32.mrf.mxu0
    %v572 = vadd.f32 0.0, %v571
    %v573 = vpop.f32.mrf.mxu0
    %v574 = vadd.f32 0.0, %v573
    %575 = vdwg.mxu0
    %v584 = vunpack.c.l.b16 %v374
    %v585 = vunpack.c.l.b16 %v375
    %v586 = vunpack.c.l.b16 %v376
    %v587 = vunpack.c.l.b16 %v377
    %v588 = vunpack.c.l.b16 %v378
    %v589 = vunpack.c.l.b16 %v379
    %v590 = vunpack.c.l.b16 %v380
    %v591 = vunpack.c.l.b16 %v381
    %v592 = vpack.c.b16 %v585, %v584
    %v593 = vpack.c.b16 %v587, %v586
    %v594 = vpack.c.b16 %v589, %v588
    %v595 = vpack.c.b16 %v591, %v590
    %v601 = vsel %vm393, %v459, 0
    %603 = vmatpush.bf16.msra.mxu0 0
    %604 = vmatpush.bf16.msra.mxu0 0
    %605 = vmatpush.bf16.msra.mxu0 0
    %606 = vmatpush.bf16.msra.mxu0 0
    %607 = vmatpush.bf16.msra.mxu0 %v595
    %608 = vmatpush.bf16.msra.mxu0 %v594
    %609 = vmatpush.bf16.msra.mxu0 %v593
    %610 = vmatpush.bf16.msra.mxu0 %v592
    %611 = vmatmul.bf16.gmra.mxu0 %v601
    %v612 = vpop.f32.mrf.mxu0
    %v613 = vadd.f32 %v572, %v612
    %v614 = vpop.f32.mrf.mxu0
    %v615 = vadd.f32 %v574, %v614
    %616 = vdwg.mxu0
    %v617 = vpack.c.bf16 %v334, %v332
    %v618 = vpack.c.bf16 %v353, %v351
    %v619 = vpack.c.bf16 %v372, %v370
    %v621 = vsel %vm393, %v617, 0
    %v624 = vsel %vm393, %v618, 0
    %626 = vmatpush.bf16.xpose.msra.mxu0 0
    %627 = vmatpush.bf16.xpose.msra.mxu0 0
    %628 = vmatpush.bf16.xpose.msra.mxu0 0
    %629 = vmatpush.bf16.xpose.msra.mxu0 0
    %630 = vmatpush.bf16.xpose.msra.mxu0 0
    %631 = vmatpush.bf16.xpose.msra.mxu0 0
    %632 = vmatpush.bf16.xpose.msra.mxu0 0
    %633 = vmatpush.bf16.xpose.msra.mxu0 %v624
    %634 = vmatmul.bf16.gmra.mxu0 %v621
    %v635 = vpop.f32.mrf.mxu0
    %v636 = vadd.f32 0.0, %v635
    %v637 = vpop.f32.mrf.mxu0
    %v638 = vadd.f32 0.0, %v637
    %639 = vdwg.mxu0
    %v640 = vmul.f32 %v636, 0.125
    %v641 = vmul.f32 %v638, 0.125
    %v642 = vadd.f32 %v640, %v43
    %v643 = vadd.f32 %v641, %v43
    %v644 = vsel %vm418, %v642, -inf
    %645 = vmax.xlane.f32.xlu0 %v644
    %v646 = vpop.xlane.xlu0 %645
    %v647 = vsel %vm418, %v643, -inf
    %648 = vmax.xlane.f32.xlu0 %v647
    %v649 = vpop.xlane.xlu0 %648
    %v650 = vsub.f32 %v642, %v646
    %v651 = vsub.f32 %v643, %v649
    %v652 = vmul.f32 %v650, 1.442695
    %v653 = vpow.pop %v652
    %v654 = vmul.f32 %v651, 1.442695
    %v655 = vpow.pop %v654
    %v656 = vsel %vm418, %v653, 0.0
    %657 = vadd.xlane.f32.xlu0 %v656
    %v658 = vpop.xlane.xlu0 %657
    %v659 = vsel %vm418, %v655, 0.0
    %660 = vadd.xlane.f32.xlu0 %v659
    %v661 = vpop.xlane.xlu0 %660
    %v662 = vrcp.pop %v658
    %v663 = vrcp.pop %v661
    %v664 = vmul.f32 %v653, %v662
    %v665 = vmul.f32 %v655, %v663
    %v666 = vpack.c.bf16 %v665, %v664
    %v668 = vsel %vm418, %v666, 0
    %670 = vmatpush.bf16.msra.mxu0 0
    %671 = vmatpush.bf16.msra.mxu0 0
    %672 = vmatpush.bf16.msra.mxu0 0
    %673 = vmatpush.bf16.msra.mxu0 0
    %674 = vmatpush.bf16.msra.mxu0 0
    %675 = vmatpush.bf16.msra.mxu0 0
    %676 = vmatpush.bf16.msra.mxu0 0
    %677 = vmatpush.bf16.msra.mxu0 %v619
    %678 = vmatmul.bf16.gmra.mxu0 %v668
    %v679 = vpop.f32.mrf.mxu0
    %v680 = vadd.f32 0.0, %v679
    %v681 = vpop.f32.mrf.mxu0
    %v682 = vadd.f32 0.0, %v681
    %683 = vdwg.mxu0
    %v684 = vpack.c.bf16 %v682, %v680
    %686 = vrot.lane.b32.xlu0 %v617, 64
    %v687 = vpop.permute.xlu0 %686
    %689 = vrot.lane.b32.xlu0 %v618, 64
    %v690 = vpop.permute.xlu0 %689
    %v692 = vsel %vm393, %v687, 0
    %v695 = vsel %vm393, %v690, 0
    %697 = vmatpush.bf16.xpose.msra.mxu0 0
    %698 = vmatpush.bf16.xpose.msra.mxu0 0
    %699 = vmatpush.bf16.xpose.msra.mxu0 0
    %700 = vmatpush.bf16.xpose.msra.mxu0 0
    %701 = vmatpush.bf16.xpose.msra.mxu0 0
    %702 = vmatpush.bf16.xpose.msra.mxu0 0
    %703 = vmatpush.bf16.xpose.msra.mxu0 0
    %704 = vmatpush.bf16.xpose.msra.mxu0 %v695
    %705 = vmatmul.bf16.gmra.mxu0 %v692
    %v706 = vpop.f32.mrf.mxu0
    %v707 = vadd.f32 0.0, %v706
    %v708 = vpop.f32.mrf.mxu0
    %v709 = vadd.f32 0.0, %v708
    %710 = vdwg.mxu0
    %v711 = vmul.f32 %v707, 0.125
    %v712 = vmul.f32 %v709, 0.125
    %v713 = vadd.f32 %v711, %v43
    %v714 = vadd.f32 %v712, %v43
    %v715 = vsel %vm418, %v713, -inf
    %716 = vmax.xlane.f32.xlu0 %v715
    %v717 = vpop.xlane.xlu0 %716
    %v718 = vsel %vm418, %v714, -inf
    %719 = vmax.xlane.f32.xlu0 %v718
    %v720 = vpop.xlane.xlu0 %719
    %v721 = vsub.f32 %v713, %v717
    %v722 = vsub.f32 %v714, %v720
    %v723 = vmul.f32 %v721, 1.442695
    %v724 = vpow.pop %v723
    %v725 = vmul.f32 %v722, 1.442695
    %v726 = vpow.pop %v725
    %v727 = vsel %vm418, %v724, 0.0
    %728 = vadd.xlane.f32.xlu0 %v727
    %v729 = vpop.xlane.xlu0 %728
    %v730 = vsel %vm418, %v726, 0.0
    %731 = vadd.xlane.f32.xlu0 %v730
    %v732 = vpop.xlane.xlu0 %731
    %v733 = vrcp.pop %v729
    %v734 = vrcp.pop %v732
    %v735 = vmul.f32 %v724, %v733
    %v736 = vmul.f32 %v726, %v734
    %v737 = vpack.c.bf16 %v736, %v735
    %739 = vrot.lane.b32.xlu0 %v619, 64
    %v740 = vpop.permute.xlu0 %739
    %v743 = vsel %vm418, %v737, 0
    %745 = vmatpush.bf16.msra.mxu0 0
    %746 = vmatpush.bf16.msra.mxu0 0
    %747 = vmatpush.bf16.msra.mxu0 0
    %748 = vmatpush.bf16.msra.mxu0 0
    %749 = vmatpush.bf16.msra.mxu0 0
    %750 = vmatpush.bf16.msra.mxu0 0
    %751 = vmatpush.bf16.msra.mxu0 0
    %752 = vmatpush.bf16.msra.mxu0 %v740
    %753 = vmatmul.bf16.gmra.mxu0 %v743
    %v754 = vpop.f32.mrf.mxu0
    %v755 = vadd.f32 0.0, %v754
    %v756 = vpop.f32.mrf.mxu0
    %v757 = vadd.f32 0.0, %v756
    %758 = vdwg.mxu0
    %v759 = vpack.c.bf16 %v757, %v755
    %v761 = vsel %vm393, %v759, 0
    %763 = vmatpush.bf16.msra.mxu0 0
    %764 = vmatpush.bf16.msra.mxu0 0
    %765 = vmatpush.bf16.msra.mxu0 0
    %766 = vmatpush.bf16.msra.mxu0 0
    %767 = vmatpush.bf16.msra.mxu0 %v554
    %768 = vmatpush.bf16.msra.mxu0 %v553
    %769 = vmatpush.bf16.msra.mxu0 %v552
    %770 = vmatpush.bf16.msra.mxu0 %v551
    %771 = vmatmul.bf16.gmra.mxu0 %v761
    %v772 = vpop.f32.mrf.mxu0
    %v773 = vadd.f32 0.0, %v772
    %v774 = vpop.f32.mrf.mxu0
    %v775 = vadd.f32 0.0, %v774
    %776 = vdwg.mxu0
    %v778 = vsel %vm393, %v684, 0
    %780 = vmatpush.bf16.msra.mxu0 0
    %781 = vmatpush.bf16.msra.mxu0 0
    %782 = vmatpush.bf16.msra.mxu0 0
    %783 = vmatpush.bf16.msra.mxu0 0
    %784 = vmatpush.bf16.msra.mxu0 %v595
    %785 = vmatpush.bf16.msra.mxu0 %v594
    %786 = vmatpush.bf16.msra.mxu0 %v593
    %787 = vmatpush.bf16.msra.mxu0 %v592
    %788 = vmatmul.bf16.gmra.mxu0 %v778
    %v789 = vpop.f32.mrf.mxu0
    %v790 = vadd.f32 %v773, %v789
    %v791 = vpop.f32.mrf.mxu0
    %v792 = vadd.f32 %v775, %v791
    %793 = vdwg.mxu0
    %v794 = vld [vmem:[%s4 + $0x3] sm:$0x1]
    %v796 = vperm.slane %v794, 0
    %v798 = vadd.f32 %v613, %v796
    %v799 = vadd.f32 %v615, %v796
    %v800 = vadd.f32 %v790, %v796
    %v801 = vadd.f32 %v792, %v796
    %v802 = vadd.f32 %v143, %v798
    %v803 = vadd.f32 %v144, %v799
    %v804 = vadd.f32 %v145, %v800
    %v805 = vadd.f32 %v146, %v801
    %v806 = vld [vmem:[%s1 + $0x2] sm:$0x1]
    %v807 = vld [vmem:[%s1 + $0x3] sm:$0x1]
    %808 = vadd.xlane.f32.xlu0 %v802
    %v809 = vpop.xlane.xlu0 %808
    %810 = vadd.xlane.f32.xlu0 %v803
    %v811 = vpop.xlane.xlu0 %810
    %812 = vadd.xlane.f32.xlu0 %v804
    %v813 = vpop.xlane.xlu0 %812
    %814 = vadd.xlane.f32.xlu0 %v805
    %v815 = vpop.xlane.xlu0 %814
    %v816 = vmul.f32 %v809, %v64
    %v817 = vmul.f32 %v811, %v64
    %v818 = vmul.f32 %v813, %v64
    %v819 = vmul.f32 %v815, %v64
    %v820 = vsub.f32 %v802, %v816
    %v821 = vsub.f32 %v803, %v817
    %v822 = vsub.f32 %v804, %v818
    %v823 = vsub.f32 %v805, %v819
    %v824 = vmul.f32 %v820, %v820
    %v825 = vmul.f32 %v821, %v821
    %v826 = vmul.f32 %v822, %v822
    %v827 = vmul.f32 %v823, %v823
    %828 = vadd.xlane.f32.xlu0 %v824
    %v829 = vpop.xlane.xlu0 %828
    %830 = vadd.xlane.f32.xlu0 %v825
    %v831 = vpop.xlane.xlu0 %830
    %832 = vadd.xlane.f32.xlu0 %v826
    %v833 = vpop.xlane.xlu0 %832
    %834 = vadd.xlane.f32.xlu0 %v827
    %v835 = vpop.xlane.xlu0 %834
    %v836 = vmul.f32 %v829, %v64
    %v837 = vmul.f32 %v831, %v64
    %v838 = vmul.f32 %v833, %v64
    %v839 = vmul.f32 %v835, %v64
    %v840 = vadd.f32 %v836, 1e-12
    %v841 = vadd.f32 %v837, 1e-12
    %v842 = vadd.f32 %v838, 1e-12
    %v843 = vadd.f32 %v839, 1e-12
    %v844 = vrsqrt.pop %v840
    %v845 = vmul.f32 %v844, %v840
    %v846 = vmul.f32 %v845, %v844
    %v847 = vmul.f32 0.5, %v846
    %v848 = vsub.f32 1.5, %v847
    %v849 = vmul.f32 %v844, %v848
    %vm850 = vweird.f32 %v840
    %vm851 = vweird.f32 %v844
    %vm852 = vmor %vm850, %vm851
    %v853 = vsel %vm852, %v844, %v849
    %v854 = vrsqrt.pop %v841
    %v855 = vmul.f32 %v854, %v841
    %v856 = vmul.f32 %v855, %v854
    %v857 = vmul.f32 0.5, %v856
    %v858 = vsub.f32 1.5, %v857
    %v859 = vmul.f32 %v854, %v858
    %vm860 = vweird.f32 %v841
    %vm861 = vweird.f32 %v854
    %vm862 = vmor %vm860, %vm861
    %v863 = vsel %vm862, %v854, %v859
    %v864 = vrsqrt.pop %v842
    %v865 = vmul.f32 %v864, %v842
    %v866 = vmul.f32 %v865, %v864
    %v867 = vmul.f32 0.5, %v866
    %v868 = vsub.f32 1.5, %v867
    %v869 = vmul.f32 %v864, %v868
    %vm870 = vweird.f32 %v842
    %vm871 = vweird.f32 %v864
    %vm872 = vmor %vm870, %vm871
    %v873 = vsel %vm872, %v864, %v869
    %v874 = vrsqrt.pop %v843
    %v875 = vmul.f32 %v874, %v843
    %v876 = vmul.f32 %v875, %v874
    %v877 = vmul.f32 0.5, %v876
    %v878 = vsub.f32 1.5, %v877
    %v879 = vmul.f32 %v874, %v878
    %vm880 = vweird.f32 %v843
    %vm881 = vweird.f32 %v874
    %vm882 = vmor %vm880, %vm881
    %v883 = vsel %vm882, %v874, %v879
    %v884 = vmul.f32 %v820, %v853
    %v885 = vmul.f32 %v821, %v863
    %v886 = vmul.f32 %v822, %v873
    %v887 = vmul.f32 %v823, %v883
    %v888 = vperm.slane %v806, 0
    %v889 = vmul.f32 %v884, %v888
    %v890 = vmul.f32 %v885, %v888
    %v891 = vmul.f32 %v886, %v888
    %v892 = vmul.f32 %v887, %v888
    %v893 = vperm.slane %v807, 0
    %v894 = vadd.f32 %v889, %v893
    %v895 = vadd.f32 %v890, %v893
    %v896 = vadd.f32 %v891, %v893
    %v897 = vadd.f32 %v892, %v893
    %v898 = vpack.c.bf16 %v895, %v894
    %v899 = vpack.c.bf16 %v897, %v896
    %v900 = vld [vmem:[#allocation2 + $0x10] sm:$0xff]
    %v901 = vld [vmem:[#allocation2 + $0x28] sm:$0xff]
    %v902 = vld [vmem:[#allocation2 + $0x40] sm:$0xff]
    %v903 = vld [vmem:[#allocation2 + $0x58] sm:$0xff]
    %v904 = vld [vmem:[#allocation2 + $0x70] sm:$0xff]
    %v905 = vld [vmem:[#allocation2 + $0x88] sm:$0xff]
    %v906 = vld [vmem:[#allocation2 + $0xa0] sm:$0xff]
    %v907 = vld [vmem:[#allocation2 + $0xb8] sm:$0xff]
    %v908 = vld [vmem:[#allocation2 + $0xd0] sm:$0xff]
    %v909 = vld [vmem:[#allocation2 + $0xe8] sm:$0xff]
    %v910 = vld [vmem:[#allocation2 + $0x100] sm:$0xff]
    %v911 = vld [vmem:[#allocation2 + $0x118] sm:$0xff]
    %v912 = vld [vmem:[#allocation2 + $0x130] sm:$0xff]
    %v913 = vld [vmem:[#allocation2 + $0x148] sm:$0xff]
    %v914 = vld [vmem:[#allocation2 + $0x160] sm:$0xff]
    %v915 = vld [vmem:[#allocation2 + $0x178] sm:$0xff]
    %v916 = vld [vmem:[%s4 + $0x4] sm:$0x3]
    %v918 = vperm.slane %v916, 0
    %v919 = vperm.slane %v916, 1
    %v938 = vunpack.c.l.b16 %v900
    %v939 = vunpack.c.h.b16 %v900
    %v940 = vunpack.c.l.b16 %v901
    %v941 = vunpack.c.h.b16 %v901
    %v942 = vunpack.c.l.b16 %v902
    %v943 = vunpack.c.h.b16 %v902
    %v944 = vunpack.c.l.b16 %v903
    %v945 = vunpack.c.h.b16 %v903
    %v946 = vunpack.c.l.b16 %v904
    %v947 = vunpack.c.h.b16 %v904
    %v948 = vunpack.c.l.b16 %v905
    %v949 = vunpack.c.h.b16 %v905
    %v950 = vunpack.c.l.b16 %v906
    %v951 = vunpack.c.h.b16 %v906
    %v952 = vunpack.c.l.b16 %v907
    %v953 = vunpack.c.h.b16 %v907
    %v954 = vunpack.c.l.b16 %v908
    %v955 = vunpack.c.h.b16 %v908
    %v956 = vunpack.c.l.b16 %v909
    %v957 = vunpack.c.h.b16 %v909
    %v958 = vunpack.c.l.b16 %v910
    %v959 = vunpack.c.h.b16 %v910
    %v960 = vunpack.c.l.b16 %v911
    %v961 = vunpack.c.h.b16 %v911
    %v962 = vunpack.c.l.b16 %v912
    %v963 = vunpack.c.h.b16 %v912
    %v964 = vunpack.c.l.b16 %v913
    %v965 = vunpack.c.h.b16 %v913
    %v966 = vunpack.c.l.b16 %v914
    %v967 = vunpack.c.h.b16 %v914
    %v968 = vunpack.c.l.b16 %v915
    %v969 = vunpack.c.h.b16 %v915
    %v970 = vpack.c.b16 %v940, %v938
    %v971 = vpack.c.b16 %v941, %v939
    %v972 = vpack.c.b16 %v944, %v942
    %v973 = vpack.c.b16 %v945, %v943
    %v974 = vpack.c.b16 %v948, %v946
    %v975 = vpack.c.b16 %v949, %v947
    %v976 = vpack.c.b16 %v952, %v950
    %v977 = vpack.c.b16 %v953, %v951
    %v978 = vpack.c.b16 %v956, %v954
    %v979 = vpack.c.b16 %v957, %v955
    %v980 = vpack.c.b16 %v960, %v958
    %v981 = vpack.c.b16 %v961, %v959
    %v982 = vpack.c.b16 %v964, %v962
    %v983 = vpack.c.b16 %v965, %v963
    %v984 = vpack.c.b16 %v968, %v966
    %v985 = vpack.c.b16 %v969, %v967
    %1002 = vmatpush.bf16.msra.mxu0 %v984
    %1003 = vmatpush.bf16.msra.mxu0 %v982
    %1004 = vmatpush.bf16.msra.mxu0 %v980
    %1005 = vmatpush.bf16.msra.mxu0 %v978
    %1006 = vmatpush.bf16.msra.mxu0 %v976
    %1007 = vmatpush.bf16.msra.mxu0 %v974
    %1008 = vmatpush.bf16.msra.mxu0 %v972
    %1009 = vmatpush.bf16.msra.mxu0 %v970
    %1010 = vmatmul.bf16.gmra.mxu0 %v898
    %v1011 = vpop.f32.mrf.mxu0
    %v1012 = vadd.f32 %v918, %v1011
    %v1013 = vpop.f32.mrf.mxu0
    %v1014 = vadd.f32 %v918, %v1013
    %1015 = vmatmul.bf16.gmra.mxu0 %v899
    %v1016 = vpop.f32.mrf.mxu0
    %v1017 = vadd.f32 %v918, %v1016
    %v1018 = vpop.f32.mrf.mxu0
    %v1019 = vadd.f32 %v918, %v1018
    %1020 = vdwg.mxu0
    %1021 = vmatpush.bf16.msra.mxu0 %v985
    %1022 = vmatpush.bf16.msra.mxu0 %v983
    %1023 = vmatpush.bf16.msra.mxu0 %v981
    %1024 = vmatpush.bf16.msra.mxu0 %v979
    %1025 = vmatpush.bf16.msra.mxu0 %v977
    %1026 = vmatpush.bf16.msra.mxu0 %v975
    %1027 = vmatpush.bf16.msra.mxu0 %v973
    %1028 = vmatpush.bf16.msra.mxu0 %v971
    %1029 = vmatmul.bf16.gmra.mxu0 %v898
    %v1030 = vpop.f32.mrf.mxu0
    %v1031 = vadd.f32 %v919, %v1030
    %v1032 = vpop.f32.mrf.mxu0
    %v1033 = vadd.f32 %v919, %v1032
    %1034 = vmatmul.bf16.gmra.mxu0 %v899
    %v1035 = vpop.f32.mrf.mxu0
    %v1036 = vadd.f32 %v919, %v1035
    %v1037 = vpop.f32.mrf.mxu0
    %v1038 = vadd.f32 %v919, %v1037
    %1039 = vdwg.mxu0
    %v1040 = vmul.f32 %v1012, 0.5
    %v1041 = vmul.f32 %v1031, 0.5
    %v1042 = vmul.f32 %v1014, 0.5
    %v1043 = vmul.f32 %v1033, 0.5
    %v1044 = vmul.f32 %v1017, 0.5
    %v1045 = vmul.f32 %v1036, 0.5
    %v1046 = vmul.f32 %v1019, 0.5
    %v1047 = vmul.f32 %v1038, 0.5
    %v1048 = vmul.f32 %v1012, 0.70710677
    %v1049 = vmul.f32 %v1031, 0.70710677
    %v1050 = vmul.f32 %v1014, 0.70710677
    %v1051 = vmul.f32 %v1033, 0.70710677
    %v1052 = vmul.f32 %v1017, 0.70710677
    %v1053 = vmul.f32 %v1036, 0.70710677
    %v1054 = vmul.f32 %v1019, 0.70710677
    %v1055 = vmul.f32 %v1038, 0.70710677
    %vm1056 = vcmp.ge.f32.partialorder %v1048, 0.0
    %vm1057 = vcmp.ge.f32.partialorder %v1049, 0.0
    %vm1058 = vcmp.ge.f32.partialorder %v1050, 0.0
    %vm1059 = vcmp.ge.f32.partialorder %v1051, 0.0
    %vm1060 = vcmp.ge.f32.partialorder %v1052, 0.0
    %vm1061 = vcmp.ge.f32.partialorder %v1053, 0.0
    %vm1062 = vcmp.ge.f32.partialorder %v1054, 0.0
    %vm1063 = vcmp.ge.f32.partialorder %v1055, 0.0
    %v1064 = vsel %vm1056, 1.0, -1.0
    %v1065 = vsel %vm1057, 1.0, -1.0
    %v1066 = vsel %vm1058, 1.0, -1.0
    %v1067 = vsel %vm1059, 1.0, -1.0
    %v1068 = vsel %vm1060, 1.0, -1.0
    %v1069 = vsel %vm1061, 1.0, -1.0
    %v1070 = vsel %vm1062, 1.0, -1.0
    %v1071 = vsel %vm1063, 1.0, -1.0
    %v1072 = vand.u32 2147483647, %v1048
    %v1073 = vand.u32 2147483647, %v1049
    %v1074 = vand.u32 2147483647, %v1050
    %v1075 = vand.u32 2147483647, %v1051
    %v1076 = vand.u32 2147483647, %v1052
    %v1077 = vand.u32 2147483647, %v1053
    %v1078 = vand.u32 2147483647, %v1054
    %v1079 = vand.u32 2147483647, %v1055
    %v1080 = vmul.f32 %v1072, 0.3275911
    %v1081 = vmul.f32 %v1073, 0.3275911
    %v1082 = vmul.f32 %v1074, 0.3275911
    %v1083 = vmul.f32 %v1075, 0.3275911
    %v1084 = vmul.f32 %v1076, 0.3275911
    %v1085 = vmul.f32 %v1077, 0.3275911
    %v1086 = vmul.f32 %v1078, 0.3275911
    %v1087 = vmul.f32 %v1079, 0.3275911
    %v1088 = vadd.f32 %v1080, 1.0
    %v1089 = vadd.f32 %v1081, 1.0
    %v1090 = vadd.f32 %v1082, 1.0
    %v1091 = vadd.f32 %v1083, 1.0
    %v1092 = vadd.f32 %v1084, 1.0
    %v1093 = vadd.f32 %v1085, 1.0
    %v1094 = vadd.f32 %v1086, 1.0
    %v1095 = vadd.f32 %v1087, 1.0
    %v1096 = vrcp.pop %v1088
    %v1097 = vrcp.pop %v1089
    %v1098 = vrcp.pop %v1090
    %v1099 = vrcp.pop %v1091
    %v1100 = vrcp.pop %v1092
    %v1101 = vrcp.pop %v1093
    %v1102 = vrcp.pop %v1094
    %v1103 = vrcp.pop %v1095
    %v1104 = vmul.f32 %v1096, 1.0614054
    %v1105 = vmul.f32 %v1097, 1.0614054
    %v1106 = vmul.f32 %v1098, 1.0614054
    %v1107 = vmul.f32 %v1099, 1.0614054
    %v1108 = vmul.f32 %v1100, 1.0614054
    %v1109 = vmul.f32 %v1101, 1.0614054
    %v1110 = vmul.f32 %v1102, 1.0614054
    %v1111 = vmul.f32 %v1103, 1.0614054
    %v1112 = vadd.f32 %v1104, -1.4531521
    %v1113 = vadd.f32 %v1105, -1.4531521
    %v1114 = vadd.f32 %v1106, -1.4531521
    %v1115 = vadd.f32 %v1107, -1.4531521
    %v1116 = vadd.f32 %v1108, -1.4531521
    %v1117 = vadd.f32 %v1109, -1.4531521
    %v1118 = vadd.f32 %v1110, -1.4531521
    %v1119 = vadd.f32 %v1111, -1.4531521
    %v1120 = vmul.f32 %v1112, %v1096
    %v1121 = vmul.f32 %v1113, %v1097
    %v1122 = vmul.f32 %v1114, %v1098
    %v1123 = vmul.f32 %v1115, %v1099
    %v1124 = vmul.f32 %v1116, %v1100
    %v1125 = vmul.f32 %v1117, %v1101
    %v1126 = vmul.f32 %v1118, %v1102
    %v1127 = vmul.f32 %v1119, %v1103
    %v1128 = vadd.f32 %v1120, 1.4214138
    %v1129 = vadd.f32 %v1121, 1.4214138
    %v1130 = vadd.f32 %v1122, 1.4214138
    %v1131 = vadd.f32 %v1123, 1.4214138
    %v1132 = vadd.f32 %v1124, 1.4214138
    %v1133 = vadd.f32 %v1125, 1.4214138
    %v1134 = vadd.f32 %v1126, 1.4214138
    %v1135 = vadd.f32 %v1127, 1.4214138
    %v1136 = vmul.f32 %v1128, %v1096
    %v1137 = vmul.f32 %v1129, %v1097
    %v1138 = vmul.f32 %v1130, %v1098
    %v1139 = vmul.f32 %v1131, %v1099
    %v1140 = vmul.f32 %v1132, %v1100
    %v1141 = vmul.f32 %v1133, %v1101
    %v1142 = vmul.f32 %v1134, %v1102
    %v1143 = vmul.f32 %v1135, %v1103
    %v1144 = vadd.f32 %v1136, -0.28449672
    %v1145 = vadd.f32 %v1137, -0.28449672
    %v1146 = vadd.f32 %v1138, -0.28449672
    %v1147 = vadd.f32 %v1139, -0.28449672
    %v1148 = vadd.f32 %v1140, -0.28449672
    %v1149 = vadd.f32 %v1141, -0.28449672
    %v1150 = vadd.f32 %v1142, -0.28449672
    %v1151 = vadd.f32 %v1143, -0.28449672
    %v1152 = vmul.f32 %v1144, %v1096
    %v1153 = vmul.f32 %v1145, %v1097
    %v1154 = vmul.f32 %v1146, %v1098
    %v1155 = vmul.f32 %v1147, %v1099
    %v1156 = vmul.f32 %v1148, %v1100
    %v1157 = vmul.f32 %v1149, %v1101
    %v1158 = vmul.f32 %v1150, %v1102
    %v1159 = vmul.f32 %v1151, %v1103
    %v1160 = vadd.f32 %v1152, 0.2548296
    %v1161 = vadd.f32 %v1153, 0.2548296
    %v1162 = vadd.f32 %v1154, 0.2548296
    %v1163 = vadd.f32 %v1155, 0.2548296
    %v1164 = vadd.f32 %v1156, 0.2548296
    %v1165 = vadd.f32 %v1157, 0.2548296
    %v1166 = vadd.f32 %v1158, 0.2548296
    %v1167 = vadd.f32 %v1159, 0.2548296
    %v1168 = vmul.f32 %v1160, %v1096
    %v1169 = vmul.f32 %v1161, %v1097
    %v1170 = vmul.f32 %v1162, %v1098
    %v1171 = vmul.f32 %v1163, %v1099
    %v1172 = vmul.f32 %v1164, %v1100
    %v1173 = vmul.f32 %v1165, %v1101
    %v1174 = vmul.f32 %v1166, %v1102
    %v1175 = vmul.f32 %v1167, %v1103
    %v1176 = vsub.f32 0.0, %v1072
    %v1177 = vsub.f32 0.0, %v1073
    %v1178 = vsub.f32 0.0, %v1074
    %v1179 = vsub.f32 0.0, %v1075
    %v1180 = vsub.f32 0.0, %v1076
    %v1181 = vsub.f32 0.0, %v1077
    %v1182 = vsub.f32 0.0, %v1078
    %v1183 = vsub.f32 0.0, %v1079
    %v1184 = vmul.f32 %v1176, %v1072
    %v1185 = vmul.f32 %v1177, %v1073
    %v1186 = vmul.f32 %v1178, %v1074
    %v1187 = vmul.f32 %v1179, %v1075
    %v1188 = vmul.f32 %v1180, %v1076
    %v1189 = vmul.f32 %v1181, %v1077
    %v1190 = vmul.f32 %v1182, %v1078
    %v1191 = vmul.f32 %v1183, %v1079
    %v1192 = vmul.f32 %v1184, 1.442695
    %v1193 = vpow.pop %v1192
    %v1194 = vmul.f32 %v1185, 1.442695
    %v1195 = vpow.pop %v1194
    %v1196 = vmul.f32 %v1186, 1.442695
    %v1197 = vpow.pop %v1196
    %v1198 = vmul.f32 %v1187, 1.442695
    %v1199 = vpow.pop %v1198
    %v1200 = vmul.f32 %v1188, 1.442695
    %v1201 = vpow.pop %v1200
    %v1202 = vmul.f32 %v1189, 1.442695
    %v1203 = vpow.pop %v1202
    %v1204 = vmul.f32 %v1190, 1.442695
    %v1205 = vpow.pop %v1204
    %v1206 = vmul.f32 %v1191, 1.442695
    %v1207 = vpow.pop %v1206
    %v1208 = vmul.f32 %v1168, %v1193
    %v1209 = vmul.f32 %v1169, %v1195
    %v1210 = vmul.f32 %v1170, %v1197
    %v1211 = vmul.f32 %v1171, %v1199
    %v1212 = vmul.f32 %v1172, %v1201
    %v1213 = vmul.f32 %v1173, %v1203
    %v1214 = vmul.f32 %v1174, %v1205
    %v1215 = vmul.f32 %v1175, %v1207
    %v1216 = vsub.f32 1.0, %v1208
    %v1217 = vsub.f32 1.0, %v1209
    %v1218 = vsub.f32 1.0, %v1210
    %v1219 = vsub.f32 1.0, %v1211
    %v1220 = vsub.f32 1.0, %v1212
    %v1221 = vsub.f32 1.0, %v1213
    %v1222 = vsub.f32 1.0, %v1214
    %v1223 = vsub.f32 1.0, %v1215
    %v1224 = vmul.f32 %v1064, %v1216
    %v1225 = vmul.f32 %v1065, %v1217
    %v1226 = vmul.f32 %v1066, %v1218
    %v1227 = vmul.f32 %v1067, %v1219
    %v1228 = vmul.f32 %v1068, %v1220
    %v1229 = vmul.f32 %v1069, %v1221
    %v1230 = vmul.f32 %v1070, %v1222
    %v1231 = vmul.f32 %v1071, %v1223
    %v1232 = vadd.f32 %v1224, 1.0
    %v1233 = vadd.f32 %v1225, 1.0
    %v1234 = vadd.f32 %v1226, 1.0
    %v1235 = vadd.f32 %v1227, 1.0
    %v1236 = vadd.f32 %v1228, 1.0
    %v1237 = vadd.f32 %v1229, 1.0
    %v1238 = vadd.f32 %v1230, 1.0
    %v1239 = vadd.f32 %v1231, 1.0
    %v1240 = vmul.f32 %v1040, %v1232
    %v1241 = vmul.f32 %v1041, %v1233
    %v1242 = vmul.f32 %v1042, %v1234
    %v1243 = vmul.f32 %v1043, %v1235
    %v1244 = vmul.f32 %v1044, %v1236
    %v1245 = vmul.f32 %v1045, %v1237
    %v1246 = vmul.f32 %v1046, %v1238
    %v1247 = vmul.f32 %v1047, %v1239
    %v1248 = vpack.c.bf16 %v1242, %v1240
    %v1249 = vpack.c.bf16 %v1243, %v1241
    %v1250 = vpack.c.bf16 %v1246, %v1244
    %v1251 = vpack.c.bf16 %v1247, %v1245
    %v1252 = vld [vmem:[%s3] sm:$0xf]
    %v1253 = vld [vmem:[%s3 + $0x4] sm:$0xf]
    %v1254 = vld [vmem:[%s3 + $0x8] sm:$0xf]
    %v1255 = vld [vmem:[%s3 + $0xc] sm:$0xf]
    %v1256 = vld [vmem:[%s3 + $0x10] sm:$0xf]
    %v1257 = vld [vmem:[%s3 + $0x14] sm:$0xf]
    %v1258 = vld [vmem:[%s3 + $0x18] sm:$0xf]
    %v1259 = vld [vmem:[%s3 + $0x1c] sm:$0xf]
    %v1260 = vld [vmem:[%s3 + $0x20] sm:$0xf]
    %v1261 = vld [vmem:[%s3 + $0x24] sm:$0xf]
    %v1262 = vld [vmem:[%s3 + $0x28] sm:$0xf]
    %v1263 = vld [vmem:[%s3 + $0x2c] sm:$0xf]
    %v1264 = vld [vmem:[%s3 + $0x30] sm:$0xf]
    %v1265 = vld [vmem:[%s3 + $0x34] sm:$0xf]
    %v1266 = vld [vmem:[%s3 + $0x38] sm:$0xf]
    %v1267 = vld [vmem:[%s3 + $0x3c] sm:$0xf]
    %v1268 = vld [vmem:[%s3 + $0x40] sm:$0xf]
    %v1269 = vld [vmem:[%s3 + $0x44] sm:$0xf]
    %v1270 = vld [vmem:[%s3 + $0x48] sm:$0xf]
    %v1271 = vld [vmem:[%s3 + $0x4c] sm:$0xf]
    %v1272 = vld [vmem:[%s3 + $0x50] sm:$0xf]
    %v1273 = vld [vmem:[%s3 + $0x54] sm:$0xf]
    %v1274 = vld [vmem:[%s3 + $0x58] sm:$0xf]
    %v1275 = vld [vmem:[%s3 + $0x5c] sm:$0xf]
    %v1276 = vld [vmem:[%s3 + $0x60] sm:$0xf]
    %v1277 = vld [vmem:[%s3 + $0x64] sm:$0xf]
    %v1278 = vld [vmem:[%s3 + $0x68] sm:$0xf]
    %v1279 = vld [vmem:[%s3 + $0x6c] sm:$0xf]
    %v1280 = vld [vmem:[%s3 + $0x70] sm:$0xf]
    %v1281 = vld [vmem:[%s3 + $0x74] sm:$0xf]
    %v1282 = vld [vmem:[%s3 + $0x78] sm:$0xf]
    %v1283 = vld [vmem:[%s3 + $0x7c] sm:$0xf]
    %v1284 = vld [vmem:[%s4 + $0x6] sm:$0x1]
    %v1286 = vperm.slane %v1284, 0
    %v1320 = vunpack.c.l.b16 %v1252
    %v1321 = vunpack.c.l.b16 %v1253
    %v1322 = vunpack.c.l.b16 %v1254
    %v1323 = vunpack.c.l.b16 %v1255
    %v1324 = vunpack.c.l.b16 %v1256
    %v1325 = vunpack.c.l.b16 %v1257
    %v1326 = vunpack.c.l.b16 %v1258
    %v1327 = vunpack.c.l.b16 %v1259
    %v1328 = vunpack.c.l.b16 %v1260
    %v1329 = vunpack.c.l.b16 %v1261
    %v1330 = vunpack.c.l.b16 %v1262
    %v1331 = vunpack.c.l.b16 %v1263
    %v1332 = vunpack.c.l.b16 %v1264
    %v1333 = vunpack.c.l.b16 %v1265
    %v1334 = vunpack.c.l.b16 %v1266
    %v1335 = vunpack.c.l.b16 %v1267
    %v1336 = vunpack.c.l.b16 %v1268
    %v1337 = vunpack.c.l.b16 %v1269
    %v1338 = vunpack.c.l.b16 %v1270
    %v1339 = vunpack.c.l.b16 %v1271
    %v1340 = vunpack.c.l.b16 %v1272
    %v1341 = vunpack.c.l.b16 %v1273
    %v1342 = vunpack.c.l.b16 %v1274
    %v1343 = vunpack.c.l.b16 %v1275
    %v1344 = vunpack.c.l.b16 %v1276
    %v1345 = vunpack.c.l.b16 %v1277
    %v1346 = vunpack.c.l.b16 %v1278
    %v1347 = vunpack.c.l.b16 %v1279
    %v1348 = vunpack.c.l.b16 %v1280
    %v1349 = vunpack.c.l.b16 %v1281
    %v1350 = vunpack.c.l.b16 %v1282
    %v1351 = vunpack.c.l.b16 %v1283
    %v1352 = vpack.c.b16 %v1321, %v1320
    %v1353 = vpack.c.b16 %v1323, %v1322
    %v1354 = vpack.c.b16 %v1325, %v1324
    %v1355 = vpack.c.b16 %v1327, %v1326
    %v1356 = vpack.c.b16 %v1329, %v1328
    %v1357 = vpack.c.b16 %v1331, %v1330
    %v1358 = vpack.c.b16 %v1333, %v1332
    %v1359 = vpack.c.b16 %v1335, %v1334
    %v1360 = vpack.c.b16 %v1337, %v1336
    %v1361 = vpack.c.b16 %v1339, %v1338
    %v1362 = vpack.c.b16 %v1341, %v1340
    %v1363 = vpack.c.b16 %v1343, %v1342
    %v1364 = vpack.c.b16 %v1345, %v1344
    %v1365 = vpack.c.b16 %v1347, %v1346
    %v1366 = vpack.c.b16 %v1349, %v1348
    %v1367 = vpack.c.b16 %v1351, %v1350
    %1384 = vmatpush.bf16.msra.mxu0 %v1359
    %1385 = vmatpush.bf16.msra.mxu0 %v1358
    %1386 = vmatpush.bf16.msra.mxu0 %v1357
    %1387 = vmatpush.bf16.msra.mxu0 %v1356
    %1388 = vmatpush.bf16.msra.mxu0 %v1355
    %1389 = vmatpush.bf16.msra.mxu0 %v1354
    %1390 = vmatpush.bf16.msra.mxu0 %v1353
    %1391 = vmatpush.bf16.msra.mxu0 %v1352
    %1392 = vmatmul.bf16.gmra.mxu0 %v1248
    %v1393 = vpop.f32.mrf.mxu0
    %v1394 = vadd.f32 %v1286, %v1393
    %v1395 = vpop.f32.mrf.mxu0
    %v1396 = vadd.f32 %v1286, %v1395
    %1397 = vmatmul.bf16.gmra.mxu0 %v1250
    %v1398 = vpop.f32.mrf.mxu0
    %v1399 = vadd.f32 %v1286, %v1398
    %v1400 = vpop.f32.mrf.mxu0
    %v1401 = vadd.f32 %v1286, %v1400
    %1402 = vdwg.mxu0
    %1403 = vmatpush.bf16.msra.mxu0 %v1367
    %1404 = vmatpush.bf16.msra.mxu0 %v1366
    %1405 = vmatpush.bf16.msra.mxu0 %v1365
    %1406 = vmatpush.bf16.msra.mxu0 %v1364
    %1407 = vmatpush.bf16.msra.mxu0 %v1363
    %1408 = vmatpush.bf16.msra.mxu0 %v1362
    %1409 = vmatpush.bf16.msra.mxu0 %v1361
    %1410 = vmatpush.bf16.msra.mxu0 %v1360
    %1411 = vmatmul.bf16.gmra.mxu0 %v1249
    %v1412 = vpop.f32.mrf.mxu0
    %v1413 = vadd.f32 %v1394, %v1412
    %v1414 = vpop.f32.mrf.mxu0
    %v1415 = vadd.f32 %v1396, %v1414
    %1416 = vmatmul.bf16.gmra.mxu0 %v1251
    %v1417 = vpop.f32.mrf.mxu0
    %v1418 = vadd.f32 %v1399, %v1417
    %v1419 = vpop.f32.mrf.mxu0
    %v1420 = vadd.f32 %v1401, %v1419
    %1421 = vdwg.mxu0
    %v1422 = vadd.f32 %v894, %v1413
    %v1423 = vadd.f32 %v895, %v1415
    %v1424 = vadd.f32 %v896, %v1418
    %v1425 = vadd.f32 %v897, %v1420
    %v1426 = vld [vmem:[%s1 + $0x4] sm:$0x1]
    %v1427 = vld [vmem:[%s1 + $0x5] sm:$0x1]
    %1428 = vadd.xlane.f32.xlu0 %v1422
    %v1429 = vpop.xlane.xlu0 %1428
    %1430 = vadd.xlane.f32.xlu0 %v1423
    %v1431 = vpop.xlane.xlu0 %1430
    %1432 = vadd.xlane.f32.xlu0 %v1424
    %v1433 = vpop.xlane.xlu0 %1432
    %1434 = vadd.xlane.f32.xlu0 %v1425
    %v1435 = vpop.xlane.xlu0 %1434
    %v1436 = vmul.f32 %v1429, %v64
    %v1437 = vmul.f32 %v1431, %v64
    %v1438 = vmul.f32 %v1433, %v64
    %v1439 = vmul.f32 %v1435, %v64
    %v1440 = vsub.f32 %v1422, %v1436
    %v1441 = vsub.f32 %v1423, %v1437
    %v1442 = vsub.f32 %v1424, %v1438
    %v1443 = vsub.f32 %v1425, %v1439
    %v1444 = vmul.f32 %v1440, %v1440
    %v1445 = vmul.f32 %v1441, %v1441
    %v1446 = vmul.f32 %v1442, %v1442
    %v1447 = vmul.f32 %v1443, %v1443
    %1448 = vadd.xlane.f32.xlu0 %v1444
    %v1449 = vpop.xlane.xlu0 %1448
    %1450 = vadd.xlane.f32.xlu0 %v1445
    %v1451 = vpop.xlane.xlu0 %1450
    %1452 = vadd.xlane.f32.xlu0 %v1446
    %v1453 = vpop.xlane.xlu0 %1452
    %1454 = vadd.xlane.f32.xlu0 %v1447
    %v1455 = vpop.xlane.xlu0 %1454
    %v1456 = vmul.f32 %v1449, %v64
    %v1457 = vmul.f32 %v1451, %v64
    %v1458 = vmul.f32 %v1453, %v64
    %v1459 = vmul.f32 %v1455, %v64
    %v1460 = vadd.f32 %v1456, 1e-12
    %v1461 = vadd.f32 %v1457, 1e-12
    %v1462 = vadd.f32 %v1458, 1e-12
    %v1463 = vadd.f32 %v1459, 1e-12
    %v1464 = vrsqrt.pop %v1460
    %v1465 = vmul.f32 %v1464, %v1460
    %v1466 = vmul.f32 %v1465, %v1464
    %v1467 = vmul.f32 0.5, %v1466
    %v1468 = vsub.f32 1.5, %v1467
    %v1469 = vmul.f32 %v1464, %v1468
    %vm1470 = vweird.f32 %v1460
    %vm1471 = vweird.f32 %v1464
    %vm1472 = vmor %vm1470, %vm1471
    %v1473 = vsel %vm1472, %v1464, %v1469
    %v1474 = vrsqrt.pop %v1461
    %v1475 = vmul.f32 %v1474, %v1461
    %v1476 = vmul.f32 %v1475, %v1474
    %v1477 = vmul.f32 0.5, %v1476
    %v1478 = vsub.f32 1.5, %v1477
    %v1479 = vmul.f32 %v1474, %v1478
    %vm1480 = vweird.f32 %v1461
    %vm1481 = vweird.f32 %v1474
    %vm1482 = vmor %vm1480, %vm1481
    %v1483 = vsel %vm1482, %v1474, %v1479
    %v1484 = vrsqrt.pop %v1462
    %v1485 = vmul.f32 %v1484, %v1462
    %v1486 = vmul.f32 %v1485, %v1484
    %v1487 = vmul.f32 0.5, %v1486
    %v1488 = vsub.f32 1.5, %v1487
    %v1489 = vmul.f32 %v1484, %v1488
    %vm1490 = vweird.f32 %v1462
    %vm1491 = vweird.f32 %v1484
    %vm1492 = vmor %vm1490, %vm1491
    %v1493 = vsel %vm1492, %v1484, %v1489
    %v1494 = vrsqrt.pop %v1463
    %v1495 = vmul.f32 %v1494, %v1463
    %v1496 = vmul.f32 %v1495, %v1494
    %v1497 = vmul.f32 0.5, %v1496
    %v1498 = vsub.f32 1.5, %v1497
    %v1499 = vmul.f32 %v1494, %v1498
    %vm1500 = vweird.f32 %v1463
    %vm1501 = vweird.f32 %v1494
    %vm1502 = vmor %vm1500, %vm1501
    %v1503 = vsel %vm1502, %v1494, %v1499
    %v1504 = vmul.f32 %v1440, %v1473
    %v1505 = vmul.f32 %v1441, %v1483
    %v1506 = vmul.f32 %v1442, %v1493
    %v1507 = vmul.f32 %v1443, %v1503
    %v1508 = vperm.slane %v1426, 0
    %v1509 = vmul.f32 %v1504, %v1508
    %v1510 = vmul.f32 %v1505, %v1508
    %v1511 = vmul.f32 %v1506, %v1508
    %v1512 = vmul.f32 %v1507, %v1508
    %v1513 = vperm.slane %v1427, 0
    %v1514 = vadd.f32 %v1509, %v1513
    %v1515 = vadd.f32 %v1510, %v1513
    %v1516 = vadd.f32 %v1511, %v1513
    %v1517 = vadd.f32 %v1512, %v1513
    %v1518 = vpack.c.bf16 %v1515, %v1514
    %v1519 = vpack.c.bf16 %v1517, %v1516
    %s1520 = scalar_lea.vmem [#allocation2], 384
    %v1521 = vld [vmem:[%s1520] sm:$0xff]
    %v1522 = vld [vmem:[%s1520 + $0x8] sm:$0xf]
    %v1523 = vld [vmem:[%s1520 + $0x18] sm:$0xff]
    %v1524 = vld [vmem:[%s1520 + $0x20] sm:$0xf]
    %v1525 = vld [vmem:[%s1520 + $0x30] sm:$0xff]
    %v1526 = vld [vmem:[%s1520 + $0x38] sm:$0xf]
    %v1527 = vld [vmem:[%s1520 + $0x48] sm:$0xff]
    %v1528 = vld [vmem:[%s1520 + $0x50] sm:$0xf]
    %v1529 = vld [vmem:[%s1520 + $0x60] sm:$0xff]
    %v1530 = vld [vmem:[%s1520 + $0x68] sm:$0xf]
    %v1531 = vld [vmem:[%s1520 + $0x78] sm:$0xff]
    %v1532 = vld [vmem:[%s1520 + $0x80] sm:$0xf]
    %v1533 = vld [vmem:[%s1520 + $0x90] sm:$0xff]
    %v1534 = vld [vmem:[%s1520 + $0x98] sm:$0xf]
    %v1535 = vld [vmem:[%s1520 + $0xa8] sm:$0xff]
    %v1536 = vld [vmem:[%s1520 + $0xb0] sm:$0xf]
    %v1537 = vld [vmem:[%s1520 + $0xc0] sm:$0xff]
    %v1538 = vld [vmem:[%s1520 + $0xc8] sm:$0xf]
    %v1539 = vld [vmem:[%s1520 + $0xd8] sm:$0xff]
    %v1540 = vld [vmem:[%s1520 + $0xe0] sm:$0xf]
    %v1541 = vld [vmem:[%s1520 + $0xf0] sm:$0xff]
    %v1542 = vld [vmem:[%s1520 + $0xf8] sm:$0xf]
    %v1543 = vld [vmem:[%s1520 + $0x108] sm:$0xff]
    %v1544 = vld [vmem:[%s1520 + $0x110] sm:$0xf]
    %v1545 = vld [vmem:[%s1520 + $0x120] sm:$0xff]
    %v1546 = vld [vmem:[%s1520 + $0x128] sm:$0xf]
    %v1547 = vld [vmem:[%s1520 + $0x138] sm:$0xff]
    %v1548 = vld [vmem:[%s1520 + $0x140] sm:$0xf]
    %v1549 = vld [vmem:[%s1520 + $0x150] sm:$0xff]
    %v1550 = vld [vmem:[%s1520 + $0x158] sm:$0xf]
    %v1551 = vld [vmem:[%s1520 + $0x168] sm:$0xff]
    %v1552 = vld [vmem:[%s1520 + $0x170] sm:$0xf]
    %s1553 = scalar_lea.vmem %s4, 7
    %v1554 = vld [vmem:[%s1553] sm:$0x7]
    %v1556 = vperm.slane %v1554, 0
    %v1557 = vperm.slane %v1554, 1
    %v1558 = vperm.slane %v1554, 2
    %v1594 = vunpack.c.l.b16 %v1521
    %v1595 = vunpack.c.h.b16 %v1521
    %v1596 = vunpack.c.l.b16 %v1522
    %v1597 = vunpack.c.l.b16 %v1523
    %v1598 = vunpack.c.h.b16 %v1523
    %v1599 = vunpack.c.l.b16 %v1524
    %v1600 = vunpack.c.l.b16 %v1525
    %v1601 = vunpack.c.h.b16 %v1525
    %v1602 = vunpack.c.l.b16 %v1526
    %v1603 = vunpack.c.l.b16 %v1527
    %v1604 = vunpack.c.h.b16 %v1527
    %v1605 = vunpack.c.l.b16 %v1528
    %v1606 = vunpack.c.l.b16 %v1529
    %v1607 = vunpack.c.h.b16 %v1529
    %v1608 = vunpack.c.l.b16 %v1530
    %v1609 = vunpack.c.l.b16 %v1531
    %v1610 = vunpack.c.h.b16 %v1531
    %v1611 = vunpack.c.l.b16 %v1532
    %v1612 = vunpack.c.l.b16 %v1533
    %v1613 = vunpack.c.h.b16 %v1533
    %v1614 = vunpack.c.l.b16 %v1534
    %v1615 = vunpack.c.l.b16 %v1535
    %v1616 = vunpack.c.h.b16 %v1535
    %v1617 = vunpack.c.l.b16 %v1536
    %v1618 = vunpack.c.l.b16 %v1537
    %v1619 = vunpack.c.h.b16 %v1537
    %v1620 = vunpack.c.l.b16 %v1538
    %v1621 = vunpack.c.l.b16 %v1539
    %v1622 = vunpack.c.h.b16 %v1539
    %v1623 = vunpack.c.l.b16 %v1540
    %v1624 = vunpack.c.l.b16 %v1541
    %v1625 = vunpack.c.h.b16 %v1541
    %v1626 = vunpack.c.l.b16 %v1542
    %v1627 = vunpack.c.l.b16 %v1543
    %v1628 = vunpack.c.h.b16 %v1543
    %v1629 = vunpack.c.l.b16 %v1544
    %v1630 = vunpack.c.l.b16 %v1545
    %v1631 = vunpack.c.h.b16 %v1545
    %v1632 = vunpack.c.l.b16 %v1546
    %v1633 = vunpack.c.l.b16 %v1547
    %v1634 = vunpack.c.h.b16 %v1547
    %v1635 = vunpack.c.l.b16 %v1548
    %v1636 = vunpack.c.l.b16 %v1549
    %v1637 = vunpack.c.h.b16 %v1549
    %v1638 = vunpack.c.l.b16 %v1550
    %v1639 = vunpack.c.l.b16 %v1551
    %v1640 = vunpack.c.h.b16 %v1551
    %v1641 = vunpack.c.l.b16 %v1552
    %v1642 = vpack.c.b16 %v1597, %v1594
    %v1643 = vpack.c.b16 %v1598, %v1595
    %v1644 = vpack.c.b16 %v1599, %v1596
    %v1645 = vpack.c.b16 %v1603, %v1600
    %v1646 = vpack.c.b16 %v1604, %v1601
    %v1647 = vpack.c.b16 %v1605, %v1602
    %v1648 = vpack.c.b16 %v1609, %v1606
    %v1649 = vpack.c.b16 %v1610, %v1607
    %v1650 = vpack.c.b16 %v1611, %v1608
    %v1651 = vpack.c.b16 %v1615, %v1612
    %v1652 = vpack.c.b16 %v1616, %v1613
    %v1653 = vpack.c.b16 %v1617, %v1614
    %v1654 = vpack.c.b16 %v1621, %v1618
    %v1655 = vpack.c.b16 %v1622, %v1619
    %v1656 = vpack.c.b16 %v1623, %v1620
    %v1657 = vpack.c.b16 %v1627, %v1624
    %v1658 = vpack.c.b16 %v1628, %v1625
    %v1659 = vpack.c.b16 %v1629, %v1626
    %v1660 = vpack.c.b16 %v1633, %v1630
    %v1661 = vpack.c.b16 %v1634, %v1631
    %v1662 = vpack.c.b16 %v1635, %v1632
    %v1663 = vpack.c.b16 %v1639, %v1636
    %v1664 = vpack.c.b16 %v1640, %v1637
    %v1665 = vpack.c.b16 %v1641, %v1638
    %1690 = vmatpush.bf16.msra.mxu0 %v1663
    %1691 = vmatpush.bf16.msra.mxu0 %v1660
    %1692 = vmatpush.bf16.msra.mxu0 %v1657
    %1693 = vmatpush.bf16.msra.mxu0 %v1654
    %1694 = vmatpush.bf16.msra.mxu0 %v1651
    %1695 = vmatpush.bf16.msra.mxu0 %v1648
    %1696 = vmatpush.bf16.msra.mxu0 %v1645
    %1697 = vmatpush.bf16.msra.mxu0 %v1642
    %1698 = vmatmul.bf16.gmra.mxu0 %v1518
    %v1699 = vpop.f32.mrf.mxu0
    %v1700 = vadd.f32 %v1556, %v1699
    %v1701 = vpop.f32.mrf.mxu0
    %v1702 = vadd.f32 %v1556, %v1701
    %1703 = vmatmul.bf16.gmra.mxu0 %v1519
    %v1704 = vpop.f32.mrf.mxu0
    %v1705 = vadd.f32 %v1556, %v1704
    %v1706 = vpop.f32.mrf.mxu0
    %v1707 = vadd.f32 %v1556, %v1706
    %1708 = vdwg.mxu0
    %1709 = vmatpush.bf16.msra.mxu0 %v1664
    %1710 = vmatpush.bf16.msra.mxu0 %v1661
    %1711 = vmatpush.bf16.msra.mxu0 %v1658
    %1712 = vmatpush.bf16.msra.mxu0 %v1655
    %1713 = vmatpush.bf16.msra.mxu0 %v1652
    %1714 = vmatpush.bf16.msra.mxu0 %v1649
    %1715 = vmatpush.bf16.msra.mxu0 %v1646
    %1716 = vmatpush.bf16.msra.mxu0 %v1643
    %1717 = vmatmul.bf16.gmra.mxu0 %v1518
    %v1718 = vpop.f32.mrf.mxu0
    %v1719 = vadd.f32 %v1557, %v1718
    %v1720 = vpop.f32.mrf.mxu0
    %v1721 = vadd.f32 %v1557, %v1720
    %1722 = vmatmul.bf16.gmra.mxu0 %v1519
    %v1723 = vpop.f32.mrf.mxu0
    %v1724 = vadd.f32 %v1557, %v1723
    %v1725 = vpop.f32.mrf.mxu0
    %v1726 = vadd.f32 %v1557, %v1725
    %1727 = vdwg.mxu0
    %1728 = vmatpush.bf16.msra.mxu0 %v1665
    %1729 = vmatpush.bf16.msra.mxu0 %v1662
    %1730 = vmatpush.bf16.msra.mxu0 %v1659
    %1731 = vmatpush.bf16.msra.mxu0 %v1656
    %1732 = vmatpush.bf16.msra.mxu0 %v1653
    %1733 = vmatpush.bf16.msra.mxu0 %v1650
    %1734 = vmatpush.bf16.msra.mxu0 %v1647
    %1735 = vmatpush.bf16.msra.mxu0 %v1644
    %1736 = vmatmul.bf16.gmra.mxu0 %v1518
    %v1737 = vpop.f32.mrf.mxu0
    %v1738 = vadd.f32 %v1558, %v1737
    %v1739 = vpop.f32.mrf.mxu0
    %v1740 = vadd.f32 %v1558, %v1739
    %1741 = vmatmul.bf16.gmra.mxu0 %v1519
    %v1742 = vpop.f32.mrf.mxu0
    %v1743 = vadd.f32 %v1558, %v1742
    %v1744 = vpop.f32.mrf.mxu0
    %v1745 = vadd.f32 %v1558, %v1744
    %1746 = vdwg.mxu0
    %v1747 = vld [vmem:[%s1520 + $0xc] sm:$0xf]
    %v1748 = vld [vmem:[%s1520 + $0x24] sm:$0xf]
    %v1749 = vld [vmem:[%s1520 + $0x3c] sm:$0xf]
    %v1750 = vld [vmem:[%s1520 + $0x54] sm:$0xf]
    %v1751 = vld [vmem:[%s1520 + $0x6c] sm:$0xf]
    %v1752 = vld [vmem:[%s1520 + $0x84] sm:$0xf]
    %v1753 = vld [vmem:[%s1520 + $0x9c] sm:$0xf]
    %v1754 = vld [vmem:[%s1520 + $0xb4] sm:$0xf]
    %v1755 = vld [vmem:[%s1520 + $0xcc] sm:$0xf]
    %v1756 = vld [vmem:[%s1520 + $0xe4] sm:$0xf]
    %v1757 = vld [vmem:[%s1520 + $0xfc] sm:$0xf]
    %v1758 = vld [vmem:[%s1520 + $0x114] sm:$0xf]
    %v1759 = vld [vmem:[%s1520 + $0x12c] sm:$0xf]
    %v1760 = vld [vmem:[%s1520 + $0x144] sm:$0xf]
    %v1761 = vld [vmem:[%s1520 + $0x15c] sm:$0xf]
    %v1762 = vld [vmem:[%s1520 + $0x174] sm:$0xf]
    %v1763 = vpack.c.bf16 %v1702, %v1700
    %v1764 = vpack.c.bf16 %v1721, %v1719
    %v1765 = vpack.c.bf16 %v1740, %v1738
    %v1767 = vsel %vm393, %v1763, 0
    %v1770 = vsel %vm393, %v1764, 0
    %1772 = vmatpush.bf16.xpose.msra.mxu0 0
    %1773 = vmatpush.bf16.xpose.msra.mxu0 0
    %1774 = vmatpush.bf16.xpose.msra.mxu0 0
    %1775 = vmatpush.bf16.xpose.msra.mxu0 0
    %1776 = vmatpush.bf16.xpose.msra.mxu0 0
    %1777 = vmatpush.bf16.xpose.msra.mxu0 0
    %1778 = vmatpush.bf16.xpose.msra.mxu0 0
    %1779 = vmatpush.bf16.xpose.msra.mxu0 %v1770
    %1780 = vmatmul.bf16.gmra.mxu0 %v1767
    %v1781 = vpop.f32.mrf.mxu0
    %v1782 = vadd.f32 0.0, %v1781
    %v1783 = vpop.f32.mrf.mxu0
    %v1784 = vadd.f32 0.0, %v1783
    %1785 = vdwg.mxu0
    %v1786 = vmul.f32 %v1782, 0.125
    %v1787 = vmul.f32 %v1784, 0.125
    %v1788 = vadd.f32 %v1786, %v41
    %v1789 = vadd.f32 %v1787, %v41
    %v1790 = vsel %vm418, %v1788, -inf
    %1791 = vmax.xlane.f32.xlu0 %v1790
    %v1792 = vpop.xlane.xlu0 %1791
    %v1793 = vsel %vm418, %v1789, -inf
    %1794 = vmax.xlane.f32.xlu0 %v1793
    %v1795 = vpop.xlane.xlu0 %1794
    %v1796 = vsub.f32 %v1788, %v1792
    %v1797 = vsub.f32 %v1789, %v1795
    %v1798 = vmul.f32 %v1796, 1.442695
    %v1799 = vpow.pop %v1798
    %v1800 = vmul.f32 %v1797, 1.442695
    %v1801 = vpow.pop %v1800
    %v1802 = vsel %vm418, %v1799, 0.0
    %1803 = vadd.xlane.f32.xlu0 %v1802
    %v1804 = vpop.xlane.xlu0 %1803
    %v1805 = vsel %vm418, %v1801, 0.0
    %1806 = vadd.xlane.f32.xlu0 %v1805
    %v1807 = vpop.xlane.xlu0 %1806
    %v1808 = vrcp.pop %v1804
    %v1809 = vrcp.pop %v1807
    %v1810 = vmul.f32 %v1799, %v1808
    %v1811 = vmul.f32 %v1801, %v1809
    %v1812 = vpack.c.bf16 %v1811, %v1810
    %v1814 = vsel %vm418, %v1812, 0
    %1816 = vmatpush.bf16.msra.mxu0 0
    %1817 = vmatpush.bf16.msra.mxu0 0
    %1818 = vmatpush.bf16.msra.mxu0 0
    %1819 = vmatpush.bf16.msra.mxu0 0
    %1820 = vmatpush.bf16.msra.mxu0 0
    %1821 = vmatpush.bf16.msra.mxu0 0
    %1822 = vmatpush.bf16.msra.mxu0 0
    %1823 = vmatpush.bf16.msra.mxu0 %v1765
    %1824 = vmatmul.bf16.gmra.mxu0 %v1814
    %v1825 = vpop.f32.mrf.mxu0
    %v1826 = vadd.f32 0.0, %v1825
    %v1827 = vpop.f32.mrf.mxu0
    %v1828 = vadd.f32 0.0, %v1827
    %1829 = vdwg.mxu0
    %v1830 = vpack.c.bf16 %v1828, %v1826
    %1832 = vrot.lane.b32.xlu0 %v1763, 64
    %v1833 = vpop.permute.xlu0 %1832
    %1835 = vrot.lane.b32.xlu0 %v1764, 64
    %v1836 = vpop.permute.xlu0 %1835
    %v1838 = vsel %vm393, %v1833, 0
    %v1841 = vsel %vm393, %v1836, 0
    %1843 = vmatpush.bf16.xpose.msra.mxu0 0
    %1844 = vmatpush.bf16.xpose.msra.mxu0 0
    %1845 = vmatpush.bf16.xpose.msra.mxu0 0
    %1846 = vmatpush.bf16.xpose.msra.mxu0 0
    %1847 = vmatpush.bf16.xpose.msra.mxu0 0
    %1848 = vmatpush.bf16.xpose.msra.mxu0 0
    %1849 = vmatpush.bf16.xpose.msra.mxu0 0
    %1850 = vmatpush.bf16.xpose.msra.mxu0 %v1841
    %1851 = vmatmul.bf16.gmra.mxu0 %v1838
    %v1852 = vpop.f32.mrf.mxu0
    %v1853 = vadd.f32 0.0, %v1852
    %v1854 = vpop.f32.mrf.mxu0
    %v1855 = vadd.f32 0.0, %v1854
    %1856 = vdwg.mxu0
    %v1857 = vmul.f32 %v1853, 0.125
    %v1858 = vmul.f32 %v1855, 0.125
    %v1859 = vadd.f32 %v1857, %v41
    %v1860 = vadd.f32 %v1858, %v41
    %v1861 = vsel %vm418, %v1859, -inf
    %1862 = vmax.xlane.f32.xlu0 %v1861
    %v1863 = vpop.xlane.xlu0 %1862
    %v1864 = vsel %vm418, %v1860, -inf
    %1865 = vmax.xlane.f32.xlu0 %v1864
    %v1866 = vpop.xlane.xlu0 %1865
    %v1867 = vsub.f32 %v1859, %v1863
    %v1868 = vsub.f32 %v1860, %v1866
    %v1869 = vmul.f32 %v1867, 1.442695
    %v1870 = vpow.pop %v1869
    %v1871 = vmul.f32 %v1868, 1.442695
    %v1872 = vpow.pop %v1871
    %v1873 = vsel %vm418, %v1870, 0.0
    %1874 = vadd.xlane.f32.xlu0 %v1873
    %v1875 = vpop.xlane.xlu0 %1874
    %v1876 = vsel %vm418, %v1872, 0.0
    %1877 = vadd.xlane.f32.xlu0 %v1876
    %v1878 = vpop.xlane.xlu0 %1877
    %v1879 = vrcp.pop %v1875
    %v1880 = vrcp.pop %v1878
    %v1881 = vmul.f32 %v1870, %v1879
    %v1882 = vmul.f32 %v1872, %v1880
    %v1883 = vpack.c.bf16 %v1882, %v1881
    %1885 = vrot.lane.b32.xlu0 %v1765, 64
    %v1886 = vpop.permute.xlu0 %1885
    %v1889 = vsel %vm418, %v1883, 0
    %1891 = vmatpush.bf16.msra.mxu0 0
    %1892 = vmatpush.bf16.msra.mxu0 0
    %1893 = vmatpush.bf16.msra.mxu0 0
    %1894 = vmatpush.bf16.msra.mxu0 0
    %1895 = vmatpush.bf16.msra.mxu0 0
    %1896 = vmatpush.bf16.msra.mxu0 0
    %1897 = vmatpush.bf16.msra.mxu0 0
    %1898 = vmatpush.bf16.msra.mxu0 %v1886
    %1899 = vmatmul.bf16.gmra.mxu0 %v1889
    %v1900 = vpop.f32.mrf.mxu0
    %v1901 = vadd.f32 0.0, %v1900
    %v1902 = vpop.f32.mrf.mxu0
    %v1903 = vadd.f32 0.0, %v1902
    %1904 = vdwg.mxu0
    %v1905 = vpack.c.bf16 %v1903, %v1901
    %v1914 = vunpack.c.l.b16 %v1755
    %v1915 = vunpack.c.l.b16 %v1756
    %v1916 = vunpack.c.l.b16 %v1757
    %v1917 = vunpack.c.l.b16 %v1758
    %v1918 = vunpack.c.l.b16 %v1759
    %v1919 = vunpack.c.l.b16 %v1760
    %v1920 = vunpack.c.l.b16 %v1761
    %v1921 = vunpack.c.l.b16 %v1762
    %v1922 = vpack.c.b16 %v1915, %v1914
    %v1923 = vpack.c.b16 %v1917, %v1916
    %v1924 = vpack.c.b16 %v1919, %v1918
    %v1925 = vpack.c.b16 %v1921, %v1920
    %v1931 = vsel %vm393, %v1905, 0
    %1933 = vmatpush.bf16.msra.mxu0 0
    %1934 = vmatpush.bf16.msra.mxu0 0
    %1935 = vmatpush.bf16.msra.mxu0 0
    %1936 = vmatpush.bf16.msra.mxu0 0
    %1937 = vmatpush.bf16.msra.mxu0 %v1925
    %1938 = vmatpush.bf16.msra.mxu0 %v1924
    %1939 = vmatpush.bf16.msra.mxu0 %v1923
    %1940 = vmatpush.bf16.msra.mxu0 %v1922
    %1941 = vmatmul.bf16.gmra.mxu0 %v1931
    %v1942 = vpop.f32.mrf.mxu0
    %v1943 = vadd.f32 0.0, %v1942
    %v1944 = vpop.f32.mrf.mxu0
    %v1945 = vadd.f32 0.0, %v1944
    %1946 = vdwg.mxu0
    %v1955 = vunpack.c.l.b16 %v1747
    %v1956 = vunpack.c.l.b16 %v1748
    %v1957 = vunpack.c.l.b16 %v1749
    %v1958 = vunpack.c.l.b16 %v1750
    %v1959 = vunpack.c.l.b16 %v1751
    %v1960 = vunpack.c.l.b16 %v1752
    %v1961 = vunpack.c.l.b16 %v1753
    %v1962 = vunpack.c.l.b16 %v1754
    %v1963 = vpack.c.b16 %v1956, %v1955
    %v1964 = vpack.c.b16 %v1958, %v1957
    %v1965 = vpack.c.b16 %v1960, %v1959
    %v1966 = vpack.c.b16 %v1962, %v1961
    %v1972 = vsel %vm393, %v1830, 0
    %1974 = vmatpush.bf16.msra.mxu0 0
    %1975 = vmatpush.bf16.msra.mxu0 0
    %1976 = vmatpush.bf16.msra.mxu0 0
    %1977 = vmatpush.bf16.msra.mxu0 0
    %1978 = vmatpush.bf16.msra.mxu0 %v1966
    %1979 = vmatpush.bf16.msra.mxu0 %v1965
    %1980 = vmatpush.bf16.msra.mxu0 %v1964
    %1981 = vmatpush.bf16.msra.mxu0 %v1963
    %1982 = vmatmul.bf16.gmra.mxu0 %v1972
    %v1983 = vpop.f32.mrf.mxu0
    %v1984 = vadd.f32 %v1943, %v1983
    %v1985 = vpop.f32.mrf.mxu0
    %v1986 = vadd.f32 %v1945, %v1985
    %1987 = vdwg.mxu0
    %v1988 = vpack.c.bf16 %v1707, %v1705
    %v1989 = vpack.c.bf16 %v1726, %v1724
    %v1990 = vpack.c.bf16 %v1745, %v1743
    %v1992 = vsel %vm393, %v1988, 0
    %v1995 = vsel %vm393, %v1989, 0
    %1997 = vmatpush.bf16.xpose.msra.mxu0 0
    %1998 = vmatpush.bf16.xpose.msra.mxu0 0
    %1999 = vmatpush.bf16.xpose.msra.mxu0 0
    %2000 = vmatpush.bf16.xpose.msra.mxu0 0
    %2001 = vmatpush.bf16.xpose.msra.mxu0 0
    %2002 = vmatpush.bf16.xpose.msra.mxu0 0
    %2003 = vmatpush.bf16.xpose.msra.mxu0 0
    %2004 = vmatpush.bf16.xpose.msra.mxu0 %v1995
    %2005 = vmatmul.bf16.gmra.mxu0 %v1992
    %v2006 = vpop.f32.mrf.mxu0
    %v2007 = vadd.f32 0.0, %v2006
    %v2008 = vpop.f32.mrf.mxu0
    %v2009 = vadd.f32 0.0, %v2008
    %2010 = vdwg.mxu0
    %v2011 = vmul.f32 %v2007, 0.125
    %v2012 = vmul.f32 %v2009, 0.125
    %v2013 = vadd.f32 %v2011, %v43
    %v2014 = vadd.f32 %v2012, %v43
    %v2015 = vsel %vm418, %v2013, -inf
    %2016 = vmax.xlane.f32.xlu0 %v2015
    %v2017 = vpop.xlane.xlu0 %2016
    %v2018 = vsel %vm418, %v2014, -inf
    %2019 = vmax.xlane.f32.xlu0 %v2018
    %v2020 = vpop.xlane.xlu0 %2019
    %v2021 = vsub.f32 %v2013, %v2017
    %v2022 = vsub.f32 %v2014, %v2020
    %v2023 = vmul.f32 %v2021, 1.442695
    %v2024 = vpow.pop %v2023
    %v2025 = vmul.f32 %v2022, 1.442695
    %v2026 = vpow.pop %v2025
    %v2027 = vsel %vm418, %v2024, 0.0
    %2028 = vadd.xlane.f32.xlu0 %v2027
    %v2029 = vpop.xlane.xlu0 %2028
    %v2030 = vsel %vm418, %v2026, 0.0
    %2031 = vadd.xlane.f32.xlu0 %v2030
    %v2032 = vpop.xlane.xlu0 %2031
    %v2033 = vrcp.pop %v2029
    %v2034 = vrcp.pop %v2032
    %v2035 = vmul.f32 %v2024, %v2033
    %v2036 = vmul.f32 %v2026, %v2034
    %v2037 = vpack.c.bf16 %v2036, %v2035
    %v2039 = vsel %vm418, %v2037, 0
    %2041 = vmatpush.bf16.msra.mxu0 0
    %2042 = vmatpush.bf16.msra.mxu0 0
    %2043 = vmatpush.bf16.msra.mxu0 0
    %2044 = vmatpush.bf16.msra.mxu0 0
    %2045 = vmatpush.bf16.msra.mxu0 0
    %2046 = vmatpush.bf16.msra.mxu0 0
    %2047 = vmatpush.bf16.msra.mxu0 0
    %2048 = vmatpush.bf16.msra.mxu0 %v1990
    %2049 = vmatmul.bf16.gmra.mxu0 %v2039
    %v2050 = vpop.f32.mrf.mxu0
    %v2051 = vadd.f32 0.0, %v2050
    %v2052 = vpop.f32.mrf.mxu0
    %v2053 = vadd.f32 0.0, %v2052
    %2054 = vdwg.mxu0
    %v2055 = vpack.c.bf16 %v2053, %v2051
    %2057 = vrot.lane.b32.xlu0 %v1988, 64
    %v2058 = vpop.permute.xlu0 %2057
    %2060 = vrot.lane.b32.xlu0 %v1989, 64
    %v2061 = vpop.permute.xlu0 %2060
    %v2063 = vsel %vm393, %v2058, 0
    %v2066 = vsel %vm393, %v2061, 0
    %2068 = vmatpush.bf16.xpose.msra.mxu0 0
    %2069 = vmatpush.bf16.xpose.msra.mxu0 0
    %2070 = vmatpush.bf16.xpose.msra.mxu0 0
    %2071 = vmatpush.bf16.xpose.msra.mxu0 0
    %2072 = vmatpush.bf16.xpose.msra.mxu0 0
    %2073 = vmatpush.bf16.xpose.msra.mxu0 0
    %2074 = vmatpush.bf16.xpose.msra.mxu0 0
    %2075 = vmatpush.bf16.xpose.msra.mxu0 %v2066
    %2076 = vmatmul.bf16.gmra.mxu0 %v2063
    %v2077 = vpop.f32.mrf.mxu0
    %v2078 = vadd.f32 0.0, %v2077
    %v2079 = vpop.f32.mrf.mxu0
    %v2080 = vadd.f32 0.0, %v2079
    %2081 = vdwg.mxu0
    %v2082 = vmul.f32 %v2078, 0.125
    %v2083 = vmul.f32 %v2080, 0.125
    %v2084 = vadd.f32 %v2082, %v43
    %v2085 = vadd.f32 %v2083, %v43
    %v2086 = vsel %vm418, %v2084, -inf
    %2087 = vmax.xlane.f32.xlu0 %v2086
    %v2088 = vpop.xlane.xlu0 %2087
    %v2089 = vsel %vm418, %v2085, -inf
    %2090 = vmax.xlane.f32.xlu0 %v2089
    %v2091 = vpop.xlane.xlu0 %2090
    %v2092 = vsub.f32 %v2084, %v2088
    %v2093 = vsub.f32 %v2085, %v2091
    %v2094 = vmul.f32 %v2092, 1.442695
    %v2095 = vpow.pop %v2094
    %v2096 = vmul.f32 %v2093, 1.442695
    %v2097 = vpow.pop %v2096
    %v2098 = vsel %vm418, %v2095, 0.0
    %2099 = vadd.xlane.f32.xlu0 %v2098
    %v2100 = vpop.xlane.xlu0 %2099
    %v2101 = vsel %vm418, %v2097, 0.0
    %2102 = vadd.xlane.f32.xlu0 %v2101
    %v2103 = vpop.xlane.xlu0 %2102
    %v2104 = vrcp.pop %v2100
    %v2105 = vrcp.pop %v2103
    %v2106 = vmul.f32 %v2095, %v2104
    %v2107 = vmul.f32 %v2097, %v2105
    %v2108 = vpack.c.bf16 %v2107, %v2106
    %2110 = vrot.lane.b32.xlu0 %v1990, 64
    %v2111 = vpop.permute.xlu0 %2110
    %v2114 = vsel %vm418, %v2108, 0
    %2116 = vmatpush.bf16.msra.mxu0 0
    %2117 = vmatpush.bf16.msra.mxu0 0
    %2118 = vmatpush.bf16.msra.mxu0 0
    %2119 = vmatpush.bf16.msra.mxu0 0
    %2120 = vmatpush.bf16.msra.mxu0 0
    %2121 = vmatpush.bf16.msra.mxu0 0
    %2122 = vmatpush.bf16.msra.mxu0 0
    %2123 = vmatpush.bf16.msra.mxu0 %v2111
    %2124 = vmatmul.bf16.gmra.mxu0 %v2114
    %v2125 = vpop.f32.mrf.mxu0
    %v2126 = vadd.f32 0.0, %v2125
    %v2127 = vpop.f32.mrf.mxu0
    %v2128 = vadd.f32 0.0, %v2127
    %2129 = vdwg.mxu0
    %v2130 = vpack.c.bf16 %v2128, %v2126
    %v2132 = vsel %vm393, %v2130, 0
    %2134 = vmatpush.bf16.msra.mxu0 0
    %2135 = vmatpush.bf16.msra.mxu0 0
    %2136 = vmatpush.bf16.msra.mxu0 0
    %2137 = vmatpush.bf16.msra.mxu0 0
    %2138 = vmatpush.bf16.msra.mxu0 %v1925
    %2139 = vmatpush.bf16.msra.mxu0 %v1924
    %2140 = vmatpush.bf16.msra.mxu0 %v1923
    %2141 = vmatpush.bf16.msra.mxu0 %v1922
    %2142 = vmatmul.bf16.gmra.mxu0 %v2132
    %v2143 = vpop.f32.mrf.mxu0
    %v2144 = vadd.f32 0.0, %v2143
    %v2145 = vpop.f32.mrf.mxu0
    %v2146 = vadd.f32 0.0, %v2145
    %2147 = vdwg.mxu0
    %v2149 = vsel %vm393, %v2055, 0
    %2151 = vmatpush.bf16.msra.mxu0 0
    %2152 = vmatpush.bf16.msra.mxu0 0
    %2153 = vmatpush.bf16.msra.mxu0 0
    %2154 = vmatpush.bf16.msra.mxu0 0
    %2155 = vmatpush.bf16.msra.mxu0 %v1966
    %2156 = vmatpush.bf16.msra.mxu0 %v1965
    %2157 = vmatpush.bf16.msra.mxu0 %v1964
    %2158 = vmatpush.bf16.msra.mxu0 %v1963
    %2159 = vmatmul.bf16.gmra.mxu0 %v2149
    %v2160 = vpop.f32.mrf.mxu0
    %v2161 = vadd.f32 %v2144, %v2160
    %v2162 = vpop.f32.mrf.mxu0
    %v2163 = vadd.f32 %v2146, %v2162
    %2164 = vdwg.mxu0
    %v2165 = vld [vmem:[%s1553 + $0x3] sm:$0x1]
    %v2167 = vperm.slane %v2165, 0
    %v2169 = vadd.f32 %v1984, %v2167
    %v2170 = vadd.f32 %v1986, %v2167
    %v2171 = vadd.f32 %v2161, %v2167
    %v2172 = vadd.f32 %v2163, %v2167
    %v2173 = vadd.f32 %v1514, %v2169
    %v2174 = vadd.f32 %v1515, %v2170
    %v2175 = vadd.f32 %v1516, %v2171
    %v2176 = vadd.f32 %v1517, %v2172
    %v2177 = vld [vmem:[%s1 + $0x6] sm:$0x1]
    %v2178 = vld [vmem:[%s1 + $0x7] sm:$0x1]
    %2179 = vadd.xlane.f32.xlu0 %v2173
    %v2180 = vpop.xlane.xlu0 %2179
    %2181 = vadd.xlane.f32.xlu0 %v2174
    %v2182 = vpop.xlane.xlu0 %2181
    %2183 = vadd.xlane.f32.xlu0 %v2175
    %v2184 = vpop.xlane.xlu0 %2183
    %2185 = vadd.xlane.f32.xlu0 %v2176
    %v2186 = vpop.xlane.xlu0 %2185
    %v2187 = vmul.f32 %v2180, %v64
    %v2188 = vmul.f32 %v2182, %v64
    %v2189 = vmul.f32 %v2184, %v64
    %v2190 = vmul.f32 %v2186, %v64
    %v2191 = vsub.f32 %v2173, %v2187
    %v2192 = vsub.f32 %v2174, %v2188
    %v2193 = vsub.f32 %v2175, %v2189
    %v2194 = vsub.f32 %v2176, %v2190
    %v2195 = vmul.f32 %v2191, %v2191
    %v2196 = vmul.f32 %v2192, %v2192
    %v2197 = vmul.f32 %v2193, %v2193
    %v2198 = vmul.f32 %v2194, %v2194
    %2199 = vadd.xlane.f32.xlu0 %v2195
    %v2200 = vpop.xlane.xlu0 %2199
    %2201 = vadd.xlane.f32.xlu0 %v2196
    %v2202 = vpop.xlane.xlu0 %2201
    %2203 = vadd.xlane.f32.xlu0 %v2197
    %v2204 = vpop.xlane.xlu0 %2203
    %2205 = vadd.xlane.f32.xlu0 %v2198
    %v2206 = vpop.xlane.xlu0 %2205
    %v2207 = vmul.f32 %v2200, %v64
    %v2208 = vmul.f32 %v2202, %v64
    %v2209 = vmul.f32 %v2204, %v64
    %v2210 = vmul.f32 %v2206, %v64
    %v2211 = vadd.f32 %v2207, 1e-12
    %v2212 = vadd.f32 %v2208, 1e-12
    %v2213 = vadd.f32 %v2209, 1e-12
    %v2214 = vadd.f32 %v2210, 1e-12
    %v2215 = vrsqrt.pop %v2211
    %v2216 = vmul.f32 %v2215, %v2211
    %v2217 = vmul.f32 %v2216, %v2215
    %v2218 = vmul.f32 0.5, %v2217
    %v2219 = vsub.f32 1.5, %v2218
    %v2220 = vmul.f32 %v2215, %v2219
    %vm2221 = vweird.f32 %v2211
    %vm2222 = vweird.f32 %v2215
    %vm2223 = vmor %vm2221, %vm2222
    %v2224 = vsel %vm2223, %v2215, %v2220
    %v2225 = vrsqrt.pop %v2212
    %v2226 = vmul.f32 %v2225, %v2212
    %v2227 = vmul.f32 %v2226, %v2225
    %v2228 = vmul.f32 0.5, %v2227
    %v2229 = vsub.f32 1.5, %v2228
    %v2230 = vmul.f32 %v2225, %v2229
    %vm2231 = vweird.f32 %v2212
    %vm2232 = vweird.f32 %v2225
    %vm2233 = vmor %vm2231, %vm2232
    %v2234 = vsel %vm2233, %v2225, %v2230
    %v2235 = vrsqrt.pop %v2213
    %v2236 = vmul.f32 %v2235, %v2213
    %v2237 = vmul.f32 %v2236, %v2235
    %v2238 = vmul.f32 0.5, %v2237
    %v2239 = vsub.f32 1.5, %v2238
    %v2240 = vmul.f32 %v2235, %v2239
    %vm2241 = vweird.f32 %v2213
    %vm2242 = vweird.f32 %v2235
    %vm2243 = vmor %vm2241, %vm2242
    %v2244 = vsel %vm2243, %v2235, %v2240
    %v2245 = vrsqrt.pop %v2214
    %v2246 = vmul.f32 %v2245, %v2214
    %v2247 = vmul.f32 %v2246, %v2245
    %v2248 = vmul.f32 0.5, %v2247
    %v2249 = vsub.f32 1.5, %v2248
    %v2250 = vmul.f32 %v2245, %v2249
    %vm2251 = vweird.f32 %v2214
    %vm2252 = vweird.f32 %v2245
    %vm2253 = vmor %vm2251, %vm2252
    %v2254 = vsel %vm2253, %v2245, %v2250
    %v2255 = vmul.f32 %v2191, %v2224
    %v2256 = vmul.f32 %v2192, %v2234
    %v2257 = vmul.f32 %v2193, %v2244
    %v2258 = vmul.f32 %v2194, %v2254
    %v2259 = vperm.slane %v2177, 0
    %v2260 = vmul.f32 %v2255, %v2259
    %v2261 = vmul.f32 %v2256, %v2259
    %v2262 = vmul.f32 %v2257, %v2259
    %v2263 = vmul.f32 %v2258, %v2259
    %v2264 = vperm.slane %v2178, 0
    %v2265 = vadd.f32 %v2260, %v2264
    %v2266 = vadd.f32 %v2261, %v2264
    %v2267 = vadd.f32 %v2262, %v2264
    %v2268 = vadd.f32 %v2263, %v2264
    %v2269 = vpack.c.bf16 %v2266, %v2265
    %v2270 = vpack.c.bf16 %v2268, %v2267
    %v2271 = vld [vmem:[%s1520 + $0x10] sm:$0xff]
    %v2272 = vld [vmem:[%s1520 + $0x28] sm:$0xff]
    %v2273 = vld [vmem:[%s1520 + $0x40] sm:$0xff]
    %v2274 = vld [vmem:[%s1520 + $0x58] sm:$0xff]
    %v2275 = vld [vmem:[%s1520 + $0x70] sm:$0xff]
    %v2276 = vld [vmem:[%s1520 + $0x88] sm:$0xff]
    %v2277 = vld [vmem:[%s1520 + $0xa0] sm:$0xff]
    %v2278 = vld [vmem:[%s1520 + $0xb8] sm:$0xff]
    %v2279 = vld [vmem:[%s1520 + $0xd0] sm:$0xff]
    %v2280 = vld [vmem:[%s1520 + $0xe8] sm:$0xff]
    %v2281 = vld [vmem:[%s1520 + $0x100] sm:$0xff]
    %v2282 = vld [vmem:[%s1520 + $0x118] sm:$0xff]
    %v2283 = vld [vmem:[%s1520 + $0x130] sm:$0xff]
    %v2284 = vld [vmem:[%s1520 + $0x148] sm:$0xff]
    %v2285 = vld [vmem:[%s1520 + $0x160] sm:$0xff]
    %v2286 = vld [vmem:[%s1520 + $0x178] sm:$0xff]
    %v2287 = vld [vmem:[%s1553 + $0x4] sm:$0x3]
    %v2289 = vperm.slane %v2287, 0
    %v2290 = vperm.slane %v2287, 1
    %v2309 = vunpack.c.l.b16 %v2271
    %v2310 = vunpack.c.h.b16 %v2271
    %v2311 = vunpack.c.l.b16 %v2272
    %v2312 = vunpack.c.h.b16 %v2272
    %v2313 = vunpack.c.l.b16 %v2273
    %v2314 = vunpack.c.h.b16 %v2273
    %v2315 = vunpack.c.l.b16 %v2274
    %v2316 = vunpack.c.h.b16 %v2274
    %v2317 = vunpack.c.l.b16 %v2275
    %v2318 = vunpack.c.h.b16 %v2275
    %v2319 = vunpack.c.l.b16 %v2276
    %v2320 = vunpack.c.h.b16 %v2276
    %v2321 = vunpack.c.l.b16 %v2277
    %v2322 = vunpack.c.h.b16 %v2277
    %v2323 = vunpack.c.l.b16 %v2278
    %v2324 = vunpack.c.h.b16 %v2278
    %v2325 = vunpack.c.l.b16 %v2279
    %v2326 = vunpack.c.h.b16 %v2279
    %v2327 = vunpack.c.l.b16 %v2280
    %v2328 = vunpack.c.h.b16 %v2280
    %v2329 = vunpack.c.l.b16 %v2281
    %v2330 = vunpack.c.h.b16 %v2281
    %v2331 = vunpack.c.l.b16 %v2282
    %v2332 = vunpack.c.h.b16 %v2282
    %v2333 = vunpack.c.l.b16 %v2283
    %v2334 = vunpack.c.h.b16 %v2283
    %v2335 = vunpack.c.l.b16 %v2284
    %v2336 = vunpack.c.h.b16 %v2284
    %v2337 = vunpack.c.l.b16 %v2285
    %v2338 = vunpack.c.h.b16 %v2285
    %v2339 = vunpack.c.l.b16 %v2286
    %v2340 = vunpack.c.h.b16 %v2286
    %v2341 = vpack.c.b16 %v2311, %v2309
    %v2342 = vpack.c.b16 %v2312, %v2310
    %v2343 = vpack.c.b16 %v2315, %v2313
    %v2344 = vpack.c.b16 %v2316, %v2314
    %v2345 = vpack.c.b16 %v2319, %v2317
    %v2346 = vpack.c.b16 %v2320, %v2318
    %v2347 = vpack.c.b16 %v2323, %v2321
    %v2348 = vpack.c.b16 %v2324, %v2322
    %v2349 = vpack.c.b16 %v2327, %v2325
    %v2350 = vpack.c.b16 %v2328, %v2326
    %v2351 = vpack.c.b16 %v2331, %v2329
    %v2352 = vpack.c.b16 %v2332, %v2330
    %v2353 = vpack.c.b16 %v2335, %v2333
    %v2354 = vpack.c.b16 %v2336, %v2334
    %v2355 = vpack.c.b16 %v2339, %v2337
    %v2356 = vpack.c.b16 %v2340, %v2338
    %2373 = vmatpush.bf16.msra.mxu0 %v2355
    %2374 = vmatpush.bf16.msra.mxu0 %v2353
    %2375 = vmatpush.bf16.msra.mxu0 %v2351
    %2376 = vmatpush.bf16.msra.mxu0 %v2349
    %2377 = vmatpush.bf16.msra.mxu0 %v2347
    %2378 = vmatpush.bf16.msra.mxu0 %v2345
    %2379 = vmatpush.bf16.msra.mxu0 %v2343
    %2380 = vmatpush.bf16.msra.mxu0 %v2341
    %2381 = vmatmul.bf16.gmra.mxu0 %v2269
    %v2382 = vpop.f32.mrf.mxu0
    %v2383 = vadd.f32 %v2289, %v2382
    %v2384 = vpop.f32.mrf.mxu0
    %v2385 = vadd.f32 %v2289, %v2384
    %2386 = vmatmul.bf16.gmra.mxu0 %v2270
    %v2387 = vpop.f32.mrf.mxu0
    %v2388 = vadd.f32 %v2289, %v2387
    %v2389 = vpop.f32.mrf.mxu0
    %v2390 = vadd.f32 %v2289, %v2389
    %2391 = vdwg.mxu0
    %2392 = vmatpush.bf16.msra.mxu0 %v2356
    %2393 = vmatpush.bf16.msra.mxu0 %v2354
    %2394 = vmatpush.bf16.msra.mxu0 %v2352
    %2395 = vmatpush.bf16.msra.mxu0 %v2350
    %2396 = vmatpush.bf16.msra.mxu0 %v2348
    %2397 = vmatpush.bf16.msra.mxu0 %v2346
    %2398 = vmatpush.bf16.msra.mxu0 %v2344
    %2399 = vmatpush.bf16.msra.mxu0 %v2342
    %2400 = vmatmul.bf16.gmra.mxu0 %v2269
    %v2401 = vpop.f32.mrf.mxu0
    %v2402 = vadd.f32 %v2290, %v2401
    %v2403 = vpop.f32.mrf.mxu0
    %v2404 = vadd.f32 %v2290, %v2403
    %2405 = vmatmul.bf16.gmra.mxu0 %v2270
    %v2406 = vpop.f32.mrf.mxu0
    %v2407 = vadd.f32 %v2290, %v2406
    %v2408 = vpop.f32.mrf.mxu0
    %v2409 = vadd.f32 %v2290, %v2408
    %2410 = vdwg.mxu0
    %v2411 = vmul.f32 %v2383, 0.5
    %v2412 = vmul.f32 %v2402, 0.5
    %v2413 = vmul.f32 %v2385, 0.5
    %v2414 = vmul.f32 %v2404, 0.5
    %v2415 = vmul.f32 %v2388, 0.5
    %v2416 = vmul.f32 %v2407, 0.5
    %v2417 = vmul.f32 %v2390, 0.5
    %v2418 = vmul.f32 %v2409, 0.5
    %v2419 = vmul.f32 %v2383, 0.70710677
    %v2420 = vmul.f32 %v2402, 0.70710677
    %v2421 = vmul.f32 %v2385, 0.70710677
    %v2422 = vmul.f32 %v2404, 0.70710677
    %v2423 = vmul.f32 %v2388, 0.70710677
    %v2424 = vmul.f32 %v2407, 0.70710677
    %v2425 = vmul.f32 %v2390, 0.70710677
    %v2426 = vmul.f32 %v2409, 0.70710677
    %vm2427 = vcmp.ge.f32.partialorder %v2419, 0.0
    %vm2428 = vcmp.ge.f32.partialorder %v2420, 0.0
    %vm2429 = vcmp.ge.f32.partialorder %v2421, 0.0
    %vm2430 = vcmp.ge.f32.partialorder %v2422, 0.0
    %vm2431 = vcmp.ge.f32.partialorder %v2423, 0.0
    %vm2432 = vcmp.ge.f32.partialorder %v2424, 0.0
    %vm2433 = vcmp.ge.f32.partialorder %v2425, 0.0
    %vm2434 = vcmp.ge.f32.partialorder %v2426, 0.0
    %v2435 = vsel %vm2427, 1.0, -1.0
    %v2436 = vsel %vm2428, 1.0, -1.0
    %v2437 = vsel %vm2429, 1.0, -1.0
    %v2438 = vsel %vm2430, 1.0, -1.0
    %v2439 = vsel %vm2431, 1.0, -1.0
    %v2440 = vsel %vm2432, 1.0, -1.0
    %v2441 = vsel %vm2433, 1.0, -1.0
    %v2442 = vsel %vm2434, 1.0, -1.0
    %v2443 = vand.u32 2147483647, %v2419
    %v2444 = vand.u32 2147483647, %v2420
    %v2445 = vand.u32 2147483647, %v2421
    %v2446 = vand.u32 2147483647, %v2422
    %v2447 = vand.u32 2147483647, %v2423
    %v2448 = vand.u32 2147483647, %v2424
    %v2449 = vand.u32 2147483647, %v2425
    %v2450 = vand.u32 2147483647, %v2426
    %v2451 = vmul.f32 %v2443, 0.3275911
    %v2452 = vmul.f32 %v2444, 0.3275911
    %v2453 = vmul.f32 %v2445, 0.3275911
    %v2454 = vmul.f32 %v2446, 0.3275911
    %v2455 = vmul.f32 %v2447, 0.3275911
    %v2456 = vmul.f32 %v2448, 0.3275911
    %v2457 = vmul.f32 %v2449, 0.3275911
    %v2458 = vmul.f32 %v2450, 0.3275911
    %v2459 = vadd.f32 %v2451, 1.0
    %v2460 = vadd.f32 %v2452, 1.0
    %v2461 = vadd.f32 %v2453, 1.0
    %v2462 = vadd.f32 %v2454, 1.0
    %v2463 = vadd.f32 %v2455, 1.0
    %v2464 = vadd.f32 %v2456, 1.0
    %v2465 = vadd.f32 %v2457, 1.0
    %v2466 = vadd.f32 %v2458, 1.0
    %v2467 = vrcp.pop %v2459
    %v2468 = vrcp.pop %v2460
    %v2469 = vrcp.pop %v2461
    %v2470 = vrcp.pop %v2462
    %v2471 = vrcp.pop %v2463
    %v2472 = vrcp.pop %v2464
    %v2473 = vrcp.pop %v2465
    %v2474 = vrcp.pop %v2466
    %v2475 = vmul.f32 %v2467, 1.0614054
    %v2476 = vmul.f32 %v2468, 1.0614054
    %v2477 = vmul.f32 %v2469, 1.0614054
    %v2478 = vmul.f32 %v2470, 1.0614054
    %v2479 = vmul.f32 %v2471, 1.0614054
    %v2480 = vmul.f32 %v2472, 1.0614054
    %v2481 = vmul.f32 %v2473, 1.0614054
    %v2482 = vmul.f32 %v2474, 1.0614054
    %v2483 = vadd.f32 %v2475, -1.4531521
    %v2484 = vadd.f32 %v2476, -1.4531521
    %v2485 = vadd.f32 %v2477, -1.4531521
    %v2486 = vadd.f32 %v2478, -1.4531521
    %v2487 = vadd.f32 %v2479, -1.4531521
    %v2488 = vadd.f32 %v2480, -1.4531521
    %v2489 = vadd.f32 %v2481, -1.4531521
    %v2490 = vadd.f32 %v2482, -1.4531521
    %v2491 = vmul.f32 %v2483, %v2467
    %v2492 = vmul.f32 %v2484, %v2468
    %v2493 = vmul.f32 %v2485, %v2469
    %v2494 = vmul.f32 %v2486, %v2470
    %v2495 = vmul.f32 %v2487, %v2471
    %v2496 = vmul.f32 %v2488, %v2472
    %v2497 = vmul.f32 %v2489, %v2473
    %v2498 = vmul.f32 %v2490, %v2474
    %v2499 = vadd.f32 %v2491, 1.4214138
    %v2500 = vadd.f32 %v2492, 1.4214138
    %v2501 = vadd.f32 %v2493, 1.4214138
    %v2502 = vadd.f32 %v2494, 1.4214138
    %v2503 = vadd.f32 %v2495, 1.4214138
    %v2504 = vadd.f32 %v2496, 1.4214138
    %v2505 = vadd.f32 %v2497, 1.4214138
    %v2506 = vadd.f32 %v2498, 1.4214138
    %v2507 = vmul.f32 %v2499, %v2467
    %v2508 = vmul.f32 %v2500, %v2468
    %v2509 = vmul.f32 %v2501, %v2469
    %v2510 = vmul.f32 %v2502, %v2470
    %v2511 = vmul.f32 %v2503, %v2471
    %v2512 = vmul.f32 %v2504, %v2472
    %v2513 = vmul.f32 %v2505, %v2473
    %v2514 = vmul.f32 %v2506, %v2474
    %v2515 = vadd.f32 %v2507, -0.28449672
    %v2516 = vadd.f32 %v2508, -0.28449672
    %v2517 = vadd.f32 %v2509, -0.28449672
    %v2518 = vadd.f32 %v2510, -0.28449672
    %v2519 = vadd.f32 %v2511, -0.28449672
    %v2520 = vadd.f32 %v2512, -0.28449672
    %v2521 = vadd.f32 %v2513, -0.28449672
    %v2522 = vadd.f32 %v2514, -0.28449672
    %v2523 = vmul.f32 %v2515, %v2467
    %v2524 = vmul.f32 %v2516, %v2468
    %v2525 = vmul.f32 %v2517, %v2469
    %v2526 = vmul.f32 %v2518, %v2470
    %v2527 = vmul.f32 %v2519, %v2471
    %v2528 = vmul.f32 %v2520, %v2472
    %v2529 = vmul.f32 %v2521, %v2473
    %v2530 = vmul.f32 %v2522, %v2474
    %v2531 = vadd.f32 %v2523, 0.2548296
    %v2532 = vadd.f32 %v2524, 0.2548296
    %v2533 = vadd.f32 %v2525, 0.2548296
    %v2534 = vadd.f32 %v2526, 0.2548296
    %v2535 = vadd.f32 %v2527, 0.2548296
    %v2536 = vadd.f32 %v2528, 0.2548296
    %v2537 = vadd.f32 %v2529, 0.2548296
    %v2538 = vadd.f32 %v2530, 0.2548296
    %v2539 = vmul.f32 %v2531, %v2467
    %v2540 = vmul.f32 %v2532, %v2468
    %v2541 = vmul.f32 %v2533, %v2469
    %v2542 = vmul.f32 %v2534, %v2470
    %v2543 = vmul.f32 %v2535, %v2471
    %v2544 = vmul.f32 %v2536, %v2472
    %v2545 = vmul.f32 %v2537, %v2473
    %v2546 = vmul.f32 %v2538, %v2474
    %v2547 = vsub.f32 0.0, %v2443
    %v2548 = vsub.f32 0.0, %v2444
    %v2549 = vsub.f32 0.0, %v2445
    %v2550 = vsub.f32 0.0, %v2446
    %v2551 = vsub.f32 0.0, %v2447
    %v2552 = vsub.f32 0.0, %v2448
    %v2553 = vsub.f32 0.0, %v2449
    %v2554 = vsub.f32 0.0, %v2450
    %v2555 = vmul.f32 %v2547, %v2443
    %v2556 = vmul.f32 %v2548, %v2444
    %v2557 = vmul.f32 %v2549, %v2445
    %v2558 = vmul.f32 %v2550, %v2446
    %v2559 = vmul.f32 %v2551, %v2447
    %v2560 = vmul.f32 %v2552, %v2448
    %v2561 = vmul.f32 %v2553, %v2449
    %v2562 = vmul.f32 %v2554, %v2450
    %v2563 = vmul.f32 %v2555, 1.442695
    %v2564 = vpow.pop %v2563
    %v2565 = vmul.f32 %v2556, 1.442695
    %v2566 = vpow.pop %v2565
    %v2567 = vmul.f32 %v2557, 1.442695
    %v2568 = vpow.pop %v2567
    %v2569 = vmul.f32 %v2558, 1.442695
    %v2570 = vpow.pop %v2569
    %v2571 = vmul.f32 %v2559, 1.442695
    %v2572 = vpow.pop %v2571
    %v2573 = vmul.f32 %v2560, 1.442695
    %v2574 = vpow.pop %v2573
    %v2575 = vmul.f32 %v2561, 1.442695
    %v2576 = vpow.pop %v2575
    %v2577 = vmul.f32 %v2562, 1.442695
    %v2578 = vpow.pop %v2577
    %v2579 = vmul.f32 %v2539, %v2564
    %v2580 = vmul.f32 %v2540, %v2566
    %v2581 = vmul.f32 %v2541, %v2568
    %v2582 = vmul.f32 %v2542, %v2570
    %v2583 = vmul.f32 %v2543, %v2572
    %v2584 = vmul.f32 %v2544, %v2574
    %v2585 = vmul.f32 %v2545, %v2576
    %v2586 = vmul.f32 %v2546, %v2578
    %v2587 = vsub.f32 1.0, %v2579
    %v2588 = vsub.f32 1.0, %v2580
    %v2589 = vsub.f32 1.0, %v2581
    %v2590 = vsub.f32 1.0, %v2582
    %v2591 = vsub.f32 1.0, %v2583
    %v2592 = vsub.f32 1.0, %v2584
    %v2593 = vsub.f32 1.0, %v2585
    %v2594 = vsub.f32 1.0, %v2586
    %v2595 = vmul.f32 %v2435, %v2587
    %v2596 = vmul.f32 %v2436, %v2588
    %v2597 = vmul.f32 %v2437, %v2589
    %v2598 = vmul.f32 %v2438, %v2590
    %v2599 = vmul.f32 %v2439, %v2591
    %v2600 = vmul.f32 %v2440, %v2592
    %v2601 = vmul.f32 %v2441, %v2593
    %v2602 = vmul.f32 %v2442, %v2594
    %v2603 = vadd.f32 %v2595, 1.0
    %v2604 = vadd.f32 %v2596, 1.0
    %v2605 = vadd.f32 %v2597, 1.0
    %v2606 = vadd.f32 %v2598, 1.0
    %v2607 = vadd.f32 %v2599, 1.0
    %v2608 = vadd.f32 %v2600, 1.0
    %v2609 = vadd.f32 %v2601, 1.0
    %v2610 = vadd.f32 %v2602, 1.0
    %v2611 = vmul.f32 %v2411, %v2603
    %v2612 = vmul.f32 %v2412, %v2604
    %v2613 = vmul.f32 %v2413, %v2605
    %v2614 = vmul.f32 %v2414, %v2606
    %v2615 = vmul.f32 %v2415, %v2607
    %v2616 = vmul.f32 %v2416, %v2608
    %v2617 = vmul.f32 %v2417, %v2609
    %v2618 = vmul.f32 %v2418, %v2610
    %v2619 = vpack.c.bf16 %v2613, %v2611
    %v2620 = vpack.c.bf16 %v2614, %v2612
    %v2621 = vpack.c.bf16 %v2617, %v2615
    %v2622 = vpack.c.bf16 %v2618, %v2616
    %s2623 = scalar_lea.vmem %s3, 128
    %v2624 = vld [vmem:[%s2623] sm:$0xf]
    %v2625 = vld [vmem:[%s2623 + $0x4] sm:$0xf]
    %v2626 = vld [vmem:[%s2623 + $0x8] sm:$0xf]
    %v2627 = vld [vmem:[%s2623 + $0xc] sm:$0xf]
    %v2628 = vld [vmem:[%s2623 + $0x10] sm:$0xf]
    %v2629 = vld [vmem:[%s2623 + $0x14] sm:$0xf]
    %v2630 = vld [vmem:[%s2623 + $0x18] sm:$0xf]
    %v2631 = vld [vmem:[%s2623 + $0x1c] sm:$0xf]
    %v2632 = vld [vmem:[%s2623 + $0x20] sm:$0xf]
    %v2633 = vld [vmem:[%s2623 + $0x24] sm:$0xf]
    %v2634 = vld [vmem:[%s2623 + $0x28] sm:$0xf]
    %v2635 = vld [vmem:[%s2623 + $0x2c] sm:$0xf]
    %v2636 = vld [vmem:[%s2623 + $0x30] sm:$0xf]
    %v2637 = vld [vmem:[%s2623 + $0x34] sm:$0xf]
    %v2638 = vld [vmem:[%s2623 + $0x38] sm:$0xf]
    %v2639 = vld [vmem:[%s2623 + $0x3c] sm:$0xf]
    %v2640 = vld [vmem:[%s2623 + $0x40] sm:$0xf]
    %v2641 = vld [vmem:[%s2623 + $0x44] sm:$0xf]
    %v2642 = vld [vmem:[%s2623 + $0x48] sm:$0xf]
    %v2643 = vld [vmem:[%s2623 + $0x4c] sm:$0xf]
    %v2644 = vld [vmem:[%s2623 + $0x50] sm:$0xf]
    %v2645 = vld [vmem:[%s2623 + $0x54] sm:$0xf]
    %v2646 = vld [vmem:[%s2623 + $0x58] sm:$0xf]
    %v2647 = vld [vmem:[%s2623 + $0x5c] sm:$0xf]
    %v2648 = vld [vmem:[%s2623 + $0x60] sm:$0xf]
    %v2649 = vld [vmem:[%s2623 + $0x64] sm:$0xf]
    %v2650 = vld [vmem:[%s2623 + $0x68] sm:$0xf]
    %v2651 = vld [vmem:[%s2623 + $0x6c] sm:$0xf]
    %v2652 = vld [vmem:[%s2623 + $0x70] sm:$0xf]
    %v2653 = vld [vmem:[%s2623 + $0x74] sm:$0xf]
    %v2654 = vld [vmem:[%s2623 + $0x78] sm:$0xf]
    %v2655 = vld [vmem:[%s2623 + $0x7c] sm:$0xf]
    %v2656 = vld [vmem:[%s1553 + $0x6] sm:$0x1]
    %v2658 = vperm.slane %v2656, 0
    %v2692 = vunpack.c.l.b16 %v2624
    %v2693 = vunpack.c.l.b16 %v2625
    %v2694 = vunpack.c.l.b16 %v2626
    %v2695 = vunpack.c.l.b16 %v2627
    %v2696 = vunpack.c.l.b16 %v2628
    %v2697 = vunpack.c.l.b16 %v2629
    %v2698 = vunpack.c.l.b16 %v2630
    %v2699 = vunpack.c.l.b16 %v2631
    %v2700 = vunpack.c.l.b16 %v2632
    %v2701 = vunpack.c.l.b16 %v2633
    %v2702 = vunpack.c.l.b16 %v2634
    %v2703 = vunpack.c.l.b16 %v2635
    %v2704 = vunpack.c.l.b16 %v2636
    %v2705 = vunpack.c.l.b16 %v2637
    %v2706 = vunpack.c.l.b16 %v2638
    %v2707 = vunpack.c.l.b16 %v2639
    %v2708 = vunpack.c.l.b16 %v2640
    %v2709 = vunpack.c.l.b16 %v2641
    %v2710 = vunpack.c.l.b16 %v2642
    %v2711 = vunpack.c.l.b16 %v2643
    %v2712 = vunpack.c.l.b16 %v2644
    %v2713 = vunpack.c.l.b16 %v2645
    %v2714 = vunpack.c.l.b16 %v2646
    %v2715 = vunpack.c.l.b16 %v2647
    %v2716 = vunpack.c.l.b16 %v2648
    %v2717 = vunpack.c.l.b16 %v2649
    %v2718 = vunpack.c.l.b16 %v2650
    %v2719 = vunpack.c.l.b16 %v2651
    %v2720 = vunpack.c.l.b16 %v2652
    %v2721 = vunpack.c.l.b16 %v2653
    %v2722 = vunpack.c.l.b16 %v2654
    %v2723 = vunpack.c.l.b16 %v2655
    %v2724 = vpack.c.b16 %v2693, %v2692
    %v2725 = vpack.c.b16 %v2695, %v2694
    %v2726 = vpack.c.b16 %v2697, %v2696
    %v2727 = vpack.c.b16 %v2699, %v2698
    %v2728 = vpack.c.b16 %v2701, %v2700
    %v2729 = vpack.c.b16 %v2703, %v2702
    %v2730 = vpack.c.b16 %v2705, %v2704
    %v2731 = vpack.c.b16 %v2707, %v2706
    %v2732 = vpack.c.b16 %v2709, %v2708
    %v2733 = vpack.c.b16 %v2711, %v2710
    %v2734 = vpack.c.b16 %v2713, %v2712
    %v2735 = vpack.c.b16 %v2715, %v2714
    %v2736 = vpack.c.b16 %v2717, %v2716
    %v2737 = vpack.c.b16 %v2719, %v2718
    %v2738 = vpack.c.b16 %v2721, %v2720
    %v2739 = vpack.c.b16 %v2723, %v2722
    %2756 = vmatpush.bf16.msra.mxu0 %v2731
    %2757 = vmatpush.bf16.msra.mxu0 %v2730
    %2758 = vmatpush.bf16.msra.mxu0 %v2729
    %2759 = vmatpush.bf16.msra.mxu0 %v2728
    %2760 = vmatpush.bf16.msra.mxu0 %v2727
    %2761 = vmatpush.bf16.msra.mxu0 %v2726
    %2762 = vmatpush.bf16.msra.mxu0 %v2725
    %2763 = vmatpush.bf16.msra.mxu0 %v2724
    %2764 = vmatmul.bf16.gmra.mxu0 %v2619
    %v2765 = vpop.f32.mrf.mxu0
    %v2766 = vadd.f32 %v2658, %v2765
    %v2767 = vpop.f32.mrf.mxu0
    %v2768 = vadd.f32 %v2658, %v2767
    %2769 = vmatmul.bf16.gmra.mxu0 %v2621
    %v2770 = vpop.f32.mrf.mxu0
    %v2771 = vadd.f32 %v2658, %v2770
    %v2772 = vpop.f32.mrf.mxu0
    %v2773 = vadd.f32 %v2658, %v2772
    %2774 = vdwg.mxu0
    %2775 = vmatpush.bf16.msra.mxu0 %v2739
    %2776 = vmatpush.bf16.msra.mxu0 %v2738
    %2777 = vmatpush.bf16.msra.mxu0 %v2737
    %2778 = vmatpush.bf16.msra.mxu0 %v2736
    %2779 = vmatpush.bf16.msra.mxu0 %v2735
    %2780 = vmatpush.bf16.msra.mxu0 %v2734
    %2781 = vmatpush.bf16.msra.mxu0 %v2733
    %2782 = vmatpush.bf16.msra.mxu0 %v2732
    %2783 = vmatmul.bf16.gmra.mxu0 %v2620
    %v2784 = vpop.f32.mrf.mxu0
    %v2785 = vadd.f32 %v2766, %v2784
    %v2786 = vpop.f32.mrf.mxu0
    %v2787 = vadd.f32 %v2768, %v2786
    %2788 = vmatmul.bf16.gmra.mxu0 %v2622
    %v2789 = vpop.f32.mrf.mxu0
    %v2790 = vadd.f32 %v2771, %v2789
    %v2791 = vpop.f32.mrf.mxu0
    %v2792 = vadd.f32 %v2773, %v2791
    %2793 = vdwg.mxu0
    %v2794 = vadd.f32 %v2265, %v2785
    %v2795 = vadd.f32 %v2266, %v2787
    %v2796 = vadd.f32 %v2267, %v2790
    %v2797 = vadd.f32 %v2268, %v2792
    %v2798 = vld [vmem:[%s1 + $0x8] sm:$0x1]
    %v2799 = vld [vmem:[%s1 + $0x9] sm:$0x1]
    %2800 = vadd.xlane.f32.xlu0 %v2794
    %v2801 = vpop.xlane.xlu0 %2800
    %2802 = vadd.xlane.f32.xlu0 %v2795
    %v2803 = vpop.xlane.xlu0 %2802
    %2804 = vadd.xlane.f32.xlu0 %v2796
    %v2805 = vpop.xlane.xlu0 %2804
    %2806 = vadd.xlane.f32.xlu0 %v2797
    %v2807 = vpop.xlane.xlu0 %2806
    %v2808 = vmul.f32 %v2801, %v64
    %v2809 = vmul.f32 %v2803, %v64
    %v2810 = vmul.f32 %v2805, %v64
    %v2811 = vmul.f32 %v2807, %v64
    %v2812 = vsub.f32 %v2794, %v2808
    %v2813 = vsub.f32 %v2795, %v2809
    %v2814 = vsub.f32 %v2796, %v2810
    %v2815 = vsub.f32 %v2797, %v2811
    %v2816 = vmul.f32 %v2812, %v2812
    %v2817 = vmul.f32 %v2813, %v2813
    %v2818 = vmul.f32 %v2814, %v2814
    %v2819 = vmul.f32 %v2815, %v2815
    %2820 = vadd.xlane.f32.xlu0 %v2816
    %v2821 = vpop.xlane.xlu0 %2820
    %2822 = vadd.xlane.f32.xlu0 %v2817
    %v2823 = vpop.xlane.xlu0 %2822
    %2824 = vadd.xlane.f32.xlu0 %v2818
    %v2825 = vpop.xlane.xlu0 %2824
    %2826 = vadd.xlane.f32.xlu0 %v2819
    %v2827 = vpop.xlane.xlu0 %2826
    %v2828 = vmul.f32 %v2821, %v64
    %v2829 = vmul.f32 %v2823, %v64
    %v2830 = vmul.f32 %v2825, %v64
    %v2831 = vmul.f32 %v2827, %v64
    %v2832 = vadd.f32 %v2828, 1e-12
    %v2833 = vadd.f32 %v2829, 1e-12
    %v2834 = vadd.f32 %v2830, 1e-12
    %v2835 = vadd.f32 %v2831, 1e-12
    %v2836 = vrsqrt.pop %v2832
    %v2837 = vmul.f32 %v2836, %v2832
    %v2838 = vmul.f32 %v2837, %v2836
    %v2839 = vmul.f32 0.5, %v2838
    %v2840 = vsub.f32 1.5, %v2839
    %v2841 = vmul.f32 %v2836, %v2840
    %vm2842 = vweird.f32 %v2832
    %vm2843 = vweird.f32 %v2836
    %vm2844 = vmor %vm2842, %vm2843
    %v2845 = vsel %vm2844, %v2836, %v2841
    %v2846 = vrsqrt.pop %v2833
    %v2847 = vmul.f32 %v2846, %v2833
    %v2848 = vmul.f32 %v2847, %v2846
    %v2849 = vmul.f32 0.5, %v2848
    %v2850 = vsub.f32 1.5, %v2849
    %v2851 = vmul.f32 %v2846, %v2850
    %vm2852 = vweird.f32 %v2833
    %vm2853 = vweird.f32 %v2846
    %vm2854 = vmor %vm2852, %vm2853
    %v2855 = vsel %vm2854, %v2846, %v2851
    %v2856 = vrsqrt.pop %v2834
    %v2857 = vmul.f32 %v2856, %v2834
    %v2858 = vmul.f32 %v2857, %v2856
    %v2859 = vmul.f32 0.5, %v2858
    %v2860 = vsub.f32 1.5, %v2859
    %v2861 = vmul.f32 %v2856, %v2860
    %vm2862 = vweird.f32 %v2834
    %vm2863 = vweird.f32 %v2856
    %vm2864 = vmor %vm2862, %vm2863
    %v2865 = vsel %vm2864, %v2856, %v2861
    %v2866 = vrsqrt.pop %v2835
    %v2867 = vmul.f32 %v2866, %v2835
    %v2868 = vmul.f32 %v2867, %v2866
    %v2869 = vmul.f32 0.5, %v2868
    %v2870 = vsub.f32 1.5, %v2869
    %v2871 = vmul.f32 %v2866, %v2870
    %vm2872 = vweird.f32 %v2835
    %vm2873 = vweird.f32 %v2866
    %vm2874 = vmor %vm2872, %vm2873
    %v2875 = vsel %vm2874, %v2866, %v2871
    %v2876 = vmul.f32 %v2812, %v2845
    %v2877 = vmul.f32 %v2813, %v2855
    %v2878 = vmul.f32 %v2814, %v2865
    %v2879 = vmul.f32 %v2815, %v2875
    %v2880 = vperm.slane %v2798, 0
    %v2881 = vmul.f32 %v2876, %v2880
    %v2882 = vmul.f32 %v2877, %v2880
    %v2883 = vmul.f32 %v2878, %v2880
    %v2884 = vmul.f32 %v2879, %v2880
    %v2885 = vperm.slane %v2799, 0
    %v2886 = vadd.f32 %v2881, %v2885
    %v2887 = vadd.f32 %v2882, %v2885
    %v2888 = vadd.f32 %v2883, %v2885
    %v2889 = vadd.f32 %v2884, %v2885
    %v2890 = vpack.c.bf16 %v2887, %v2886
    %v2891 = vpack.c.bf16 %v2889, %v2888
    %v2892 = vld [vmem:[%s5] sm:$0xf]
    %v2893 = vld [vmem:[%s5 + $0x8] sm:$0xf]
    %v2894 = vld [vmem:[%s5 + $0x10] sm:$0xf]
    %v2895 = vld [vmem:[%s5 + $0x18] sm:$0xf]
    %v2896 = vld [vmem:[%s5 + $0x20] sm:$0xf]
    %v2897 = vld [vmem:[%s5 + $0x28] sm:$0xf]
    %v2898 = vld [vmem:[%s5 + $0x30] sm:$0xf]
    %v2899 = vld [vmem:[%s5 + $0x38] sm:$0xf]
    %v2900 = vld [vmem:[%s5 + $0x40] sm:$0xf]
    %v2901 = vld [vmem:[%s5 + $0x48] sm:$0xf]
    %v2902 = vld [vmem:[%s5 + $0x50] sm:$0xf]
    %v2903 = vld [vmem:[%s5 + $0x58] sm:$0xf]
    %v2904 = vld [vmem:[%s5 + $0x60] sm:$0xf]
    %v2905 = vld [vmem:[%s5 + $0x68] sm:$0xf]
    %v2906 = vld [vmem:[%s5 + $0x70] sm:$0xf]
    %v2907 = vld [vmem:[%s5 + $0x78] sm:$0xf]
    %v2908 = vld [vmem:[%s1 + $0xa] sm:$0x1]
    %v2909 = vperm.slane %v2908, 0
    %v2926 = vunpack.c.l.b16 %v2892
    %v2927 = vunpack.c.l.b16 %v2893
    %v2928 = vunpack.c.l.b16 %v2894
    %v2929 = vunpack.c.l.b16 %v2895
    %v2930 = vunpack.c.l.b16 %v2896
    %v2931 = vunpack.c.l.b16 %v2897
    %v2932 = vunpack.c.l.b16 %v2898
    %v2933 = vunpack.c.l.b16 %v2899
    %v2934 = vunpack.c.l.b16 %v2900
    %v2935 = vunpack.c.l.b16 %v2901
    %v2936 = vunpack.c.l.b16 %v2902
    %v2937 = vunpack.c.l.b16 %v2903
    %v2938 = vunpack.c.l.b16 %v2904
    %v2939 = vunpack.c.l.b16 %v2905
    %v2940 = vunpack.c.l.b16 %v2906
    %v2941 = vunpack.c.l.b16 %v2907
    %v2942 = vpack.c.b16 %v2927, %v2926
    %v2943 = vpack.c.b16 %v2929, %v2928
    %v2944 = vpack.c.b16 %v2931, %v2930
    %v2945 = vpack.c.b16 %v2933, %v2932
    %v2946 = vpack.c.b16 %v2935, %v2934
    %v2947 = vpack.c.b16 %v2937, %v2936
    %v2948 = vpack.c.b16 %v2939, %v2938
    %v2949 = vpack.c.b16 %v2941, %v2940
    %2958 = vmatpush.bf16.msra.mxu0 %v2949
    %2959 = vmatpush.bf16.msra.mxu0 %v2948
    %2960 = vmatpush.bf16.msra.mxu0 %v2947
    %2961 = vmatpush.bf16.msra.mxu0 %v2946
    %2962 = vmatpush.bf16.msra.mxu0 %v2945
    %2963 = vmatpush.bf16.msra.mxu0 %v2944
    %2964 = vmatpush.bf16.msra.mxu0 %v2943
    %2965 = vmatpush.bf16.msra.mxu0 %v2942
    %2966 = vmatmul.bf16.gmra.mxu0 %v2890
    %v2967 = vpop.f32.mrf.mxu0
    %v2968 = vadd.f32 %v2909, %v2967
    %v2969 = vpop.f32.mrf.mxu0
    %v2970 = vadd.f32 %v2909, %v2969
    %2971 = vmatmul.bf16.gmra.mxu0 %v2891
    %v2972 = vpop.f32.mrf.mxu0
    %v2973 = vadd.f32 %v2909, %v2972
    %v2974 = vpop.f32.mrf.mxu0
    %v2975 = vadd.f32 %v2909, %v2974
    %2976 = vdwg.mxu0
    %v2977 = vtanh.pop %v2968
    %v2978 = vtanh.pop %v2970
    %v2979 = vtanh.pop %v2973
    %v2980 = vtanh.pop %v2975
    %v2981 = vpack.c.bf16 %v2978, %v2977
    %v2982 = vpack.c.bf16 %v2980, %v2979
    %v2983 = vld [vmem:[%s5 + $0x4] sm:$0xf]
    %v2984 = vld [vmem:[%s5 + $0xc] sm:$0xf]
    %v2985 = vld [vmem:[%s5 + $0x14] sm:$0xf]
    %v2986 = vld [vmem:[%s5 + $0x1c] sm:$0xf]
    %v2987 = vld [vmem:[%s5 + $0x24] sm:$0xf]
    %v2988 = vld [vmem:[%s5 + $0x2c] sm:$0xf]
    %v2989 = vld [vmem:[%s5 + $0x34] sm:$0xf]
    %v2990 = vld [vmem:[%s5 + $0x3c] sm:$0xf]
    %v2991 = vld [vmem:[%s5 + $0x44] sm:$0xf]
    %v2992 = vld [vmem:[%s5 + $0x4c] sm:$0xf]
    %v2993 = vld [vmem:[%s5 + $0x54] sm:$0xf]
    %v2994 = vld [vmem:[%s5 + $0x5c] sm:$0xf]
    %v2995 = vld [vmem:[%s5 + $0x64] sm:$0xf]
    %v2996 = vld [vmem:[%s5 + $0x6c] sm:$0xf]
    %v2997 = vld [vmem:[%s5 + $0x74] sm:$0xf]
    %v2998 = vld [vmem:[%s5 + $0x7c] sm:$0xf]
    %v2999 = vld [vmem:[%s1 + $0xb] sm:$0x1]
    %v3000 = vperm.slane %v2999, 0
    %v3017 = vunpack.c.l.b16 %v2983
    %v3018 = vunpack.c.l.b16 %v2984
    %v3019 = vunpack.c.l.b16 %v2985
    %v3020 = vunpack.c.l.b16 %v2986
    %v3021 = vunpack.c.l.b16 %v2987
    %v3022 = vunpack.c.l.b16 %v2988
    %v3023 = vunpack.c.l.b16 %v2989
    %v3024 = vunpack.c.l.b16 %v2990
    %v3025 = vunpack.c.l.b16 %v2991
    %v3026 = vunpack.c.l.b16 %v2992
    %v3027 = vunpack.c.l.b16 %v2993
    %v3028 = vunpack.c.l.b16 %v2994
    %v3029 = vunpack.c.l.b16 %v2995
    %v3030 = vunpack.c.l.b16 %v2996
    %v3031 = vunpack.c.l.b16 %v2997
    %v3032 = vunpack.c.l.b16 %v2998
    %v3033 = vpack.c.b16 %v3018, %v3017
    %v3034 = vpack.c.b16 %v3020, %v3019
    %v3035 = vpack.c.b16 %v3022, %v3021
    %v3036 = vpack.c.b16 %v3024, %v3023
    %v3037 = vpack.c.b16 %v3026, %v3025
    %v3038 = vpack.c.b16 %v3028, %v3027
    %v3039 = vpack.c.b16 %v3030, %v3029
    %v3040 = vpack.c.b16 %v3032, %v3031
    %3049 = vmatpush.bf16.msra.mxu0 %v3040
    %3050 = vmatpush.bf16.msra.mxu0 %v3039
    %3051 = vmatpush.bf16.msra.mxu0 %v3038
    %3052 = vmatpush.bf16.msra.mxu0 %v3037
    %3053 = vmatpush.bf16.msra.mxu0 %v3036
    %3054 = vmatpush.bf16.msra.mxu0 %v3035
    %3055 = vmatpush.bf16.msra.mxu0 %v3034
    %3056 = vmatpush.bf16.msra.mxu0 %v3033
    %3057 = vmatmul.bf16.gmra.mxu0 %v2981
    %v3058 = vpop.f32.mrf.mxu0
    %v3059 = vadd.f32 %v3000, %v3058
    %v3060 = vpop.f32.mrf.mxu0
    %v3061 = vadd.f32 %v3000, %v3060
    %3062 = vmatmul.bf16.gmra.mxu0 %v2982
    %v3063 = vpop.f32.mrf.mxu0
    %v3064 = vadd.f32 %v3000, %v3063
    %v3065 = vpop.f32.mrf.mxu0
    %v3066 = vadd.f32 %v3000, %v3065
    %3067 = vdwg.mxu0
    %3068 = vst [vmem:[%s6] sm:$0xff] %v3059
    %3069 = vst [vmem:[%s6 + $0x8] sm:$0xff] %v3061
    %3070 = vst [vmem:[%s6 + $0x10] sm:$0xff] %v3064
    %3071 = vst [vmem:[%s6 + $0x18] sm:$0xff] %v3066
    // Predicated region
    $region30: #{bert_cnn_forward.1} parent=1 // pred_check
      _
    $region31: #{bert_cnn_forward.1} parent=1 // pred_check_branch
      %3073 = sbr.rel (0) target = $region33
    $region32: #{bert_cnn_forward.1} parent=1 // pred_region
      _
    $region33: #{bert_cnn_forward.1} parent=1 // pred_fallthru
      _
    // Predicated region
    $region34: #{bert_cnn_forward.1} parent=1 // pred_check
      _
    $region35: #{bert_cnn_forward.1} parent=1 // pred_check_branch
      %3075 = sbr.rel (0) target = $region37
    $region36: #{bert_cnn_forward.1} parent=1 // pred_region
      _
    $region37: #{bert_cnn_forward.1} parent=1 // pred_fallthru
      _
    %3076 = vsyncpa [#allocation3], 1

</llo_original>
